<compile_context>
chip_gen: v7x
topology: tpu7x:2x2x1
jax: 0.10.0
libtpu: 0.0.40
codegen_flags: <defaults>
</compile_context>

<pallas_src>
import functools

import jax
import jax.numpy as jnp
from jax.experimental import pallas as pl
from jax.experimental.pallas import tpu as pltpu


def _conv_bn_prelu_kernel(x_ref, w_ref, shift_ref, alpha_ref, o_ref, *scratch,
                          kh, kw, ho, wo):
    # x_ref:     (1, Hp, Wp, IC)       padded NHWC image for one batch element
    # w_ref:     (kh*kw*IC, OCp)       BN-scale-folded weight, K ordered (i, j, ch)
    # shift_ref: (1, OCp) f32          beta - running_mean * scale
    # alpha_ref: (1, OCp) f32          PReLU per-channel slope
    # o_ref:     (1, OC, Ho*Wo)        unpadded NCHW-layout output block
    # scratch:   ((Ho*Wo, kh*kw*IC),)  VMEM staging buffer for the packed LHS
    ic = x_ref.shape[-1]
    oc = o_ref.shape[1]
    m = ho * wo

    if kh == 1 and kw == 1:
        # 1x1 conv: the whole image is already the packed LHS.
        lhs = x_ref[0].reshape(m, ic)
    else:
        lhs_ref = scratch[0]
        # Pack the kh*kw shifted taps into the contraction dim (K = kh*kw*IC)
        # so the MXU sees one deep matmul instead of kh*kw shallow ones.
        for i in range(kh):
            for j in range(kw):
                t = i * kw + j
                lhs_ref[:, t * ic:(t + 1) * ic] = (
                    x_ref[0, i:i + ho, j:j + wo, :].reshape(m, ic))
        lhs = lhs_ref[...]

    acc = jnp.dot(lhs, w_ref[...], preferred_element_type=jnp.float32)  # (M, OCp)
    y = acc + shift_ref[...]                           # BN shift (scale pre-folded)
    y = jnp.where(y >= 0.0, y, alpha_ref[...] * y)     # PReLU, f32 on the VPU
    # One tile-aligned transpose -> (OCp, M); store only the real OC rows, so the
    # HBM output is lane-dense, unpadded and already in NCHW layout.
    o_ref[0] = y.T[:oc, :].astype(o_ref.dtype)


@functools.lru_cache(maxsize=1)
def _vmem_limit_bytes():
    try:
        cap = int(pltpu.get_tpu_info().vmem_capacity_bytes)
    except Exception:
        cap = 64 * 1024 * 1024                 # conservative fallback (v7x-sized)
    # ~5/8 of physical VMEM: ~40 MiB on v7x (64 MiB), ~80 MiB on v5e/v6e (128 MiB),
    # leaving headroom for Mosaic internal scratch and semaphores.
    return int(min(cap * 5 // 8, 96 * 1024 * 1024))


def _space_to_depth(x_p, w_oihw, kh, kw, stride):
    """Rewrite a strided conv as a stride-1 conv on phase-packed (s^2*IC) channels."""
    s = stride
    n, hp, wp, ic = x_p.shape
    oc = w_oihw.shape[0]
    ho = (hp - kh) // s + 1
    wo = (wp - kw) // s + 1
    khs = -(-kh // s)
    kws = -(-kw // s)
    hpad = s * (ho + khs - 1)
    wpad = s * (wo + kws - 1)
    # Crop-or-pad the spatial dims to exactly (hpad, wpad); extra zeros are only
    # ever multiplied by the zero-padded weight taps.
    xc = x_p[:, :min(hp, hpad), :min(wp, wpad), :]
    xc = jnp.pad(xc, ((0, 0), (0, hpad - xc.shape[1]),
                      (0, wpad - xc.shape[2]), (0, 0)))
    xc = xc.reshape(n, hpad // s, s, wpad // s, s, ic)
    xc = jnp.transpose(xc, (0, 1, 3, 2, 4, 5)).reshape(
        n, hpad // s, wpad // s, s * s * ic)
    # Weight: (OC, IC, kh, kw) -> phase OIHW (OC, s*s*IC, khs, kws), zero-padded taps.
    wz = jnp.pad(w_oihw, ((0, 0), (0, 0), (0, khs * s - kh), (0, kws * s - kw)))
    wz = wz.reshape(oc, ic, khs, s, kws, s)
    wz = jnp.transpose(wz, (0, 3, 5, 1, 2, 4)).reshape(oc, s * s * ic, khs, kws)
    return xc, wz, khs, kws


@functools.partial(jax.jit, static_argnames=("stride", "padding", "groups",
                                             "compute_dtype", "out_dtype"))
def conv_bn_prelu(x_nchw, conv_w, gamma, beta, running_mean, running_var,
                  prelu_a, *, stride=1, padding=0, groups=1, eps=1e-5,
                  compute_dtype=jnp.bfloat16, out_dtype=jnp.float32):
    """ConvBnPrelu_Block forward (eval-mode BN).  x: (N, IC, H, W) -> (N, OC, Ho, Wo)."""
    if groups != 1:
        raise NotImplementedError("TODO(synk): grouped conv not implemented")
    oc, ic, kh, kw = conv_w.shape
    n, ic_x, h, w = x_nchw.shape
    assert ic_x == ic

    # ---- parameter folding (tiny, one-time, plain JAX) ----
    scale = gamma / jnp.sqrt(running_var + eps)                     # (OC,)
    shift = beta - running_mean * scale                             # (OC,)
    w_f = conv_w.astype(jnp.float32) * scale[:, None, None, None]   # BN scale folded

    # ---- layout glue: NCHW -> padded NHWC ----
    x_nhwc = jnp.transpose(x_nchw, (0, 2, 3, 1))
    x_p = jnp.pad(x_nhwc, ((0, 0), (padding, padding), (padding, padding), (0, 0)))
    hp, wp = h + 2 * padding, w + 2 * padding
    ho = (hp - kh) // stride + 1
    wo = (wp - kw) // stride + 1

    # ---- stride > 1: space-to-depth phase split -> stride-1 kernel path ----
    if stride > 1:
        x_p, w_f, kh_e, kw_e = _space_to_depth(x_p, w_f, kh, kw, stride)
    else:
        kh_e, kw_e = kh, kw
    hp_e, wp_e, ic_e = x_p.shape[1], x_p.shape[2], x_p.shape[3]

    # ---- weight matrix (K, OCp), K ordered (i, j, ch); OC padded only in VMEM ----
    k_dim = kh_e * kw_e * ic_e
    w_mat = jnp.transpose(w_f, (2, 3, 1, 0)).reshape(k_dim, oc)
    ocp = ((oc + 127) // 128) * 128
    shift_v = shift.astype(jnp.float32)
    alpha_v = prelu_a.astype(jnp.float32)
    if ocp != oc:
        w_mat = jnp.pad(w_mat, ((0, 0), (0, ocp - oc)))
        shift_v = jnp.pad(shift_v, (0, ocp - oc))
        alpha_v = jnp.pad(alpha_v, (0, ocp - oc))
    w_mat = w_mat.astype(compute_dtype)
    shift_v = shift_v.reshape(1, ocp)
    alpha_v = alpha_v.reshape(1, ocp)
    x_p = x_p.astype(compute_dtype)

    m = ho * wo
    kernel = functools.partial(_conv_bn_prelu_kernel,
                               kh=kh_e, kw=kw_e, ho=ho, wo=wo)
    scratch = [] if (kh_e == 1 and kw_e == 1) else [
        pltpu.VMEM((m, k_dim), compute_dtype)]

    out = pl.pallas_call(
        kernel,
        out_shape=jax.ShapeDtypeStruct((n, oc, m), out_dtype),
        grid_spec=pltpu.PrefetchScalarGridSpec(
            num_scalar_prefetch=0,
            grid=(n,),
            in_specs=[
                pl.BlockSpec((1, hp_e, wp_e, ic_e), lambda b: (b, 0, 0, 0)),
                pl.BlockSpec((k_dim, ocp), lambda b: (0, 0)),
                pl.BlockSpec((1, ocp), lambda b: (0, 0)),
                pl.BlockSpec((1, ocp), lambda b: (0, 0)),
            ],
            out_specs=pl.BlockSpec((1, oc, m), lambda b: (b, 0, 0)),
            scratch_shapes=scratch),
        compiler_params=pltpu.CompilerParams(
            dimension_semantics=("parallel",),          # megacore over batch
            vmem_limit_bytes=_vmem_limit_bytes()),
    )(x_p, w_mat, shift_v, alpha_v)

    # Kernel already emits NCHW-flat; this reshape is metadata-only.
    return out.reshape(n, oc, ho, wo)


if __name__ == "__main__":
    N, IC, H, W = 2, 4, 16, 16
    OC, KH, KW = 8, 3, 3

    key = jax.random.PRNGKey(0)
    kx, kw_, kg, kb, km, kv = jax.random.split(key, 6)
    x = jax.random.normal(kx, (N, IC, H, W), dtype=jnp.float32)
    conv_w = jax.random.normal(kw_, (OC, IC, KH, KW), dtype=jnp.float32) * 0.1
    gamma = 1.0 + 0.1 * jax.random.normal(kg, (OC,), dtype=jnp.float32)
    beta = 0.1 * jax.random.normal(kb, (OC,), dtype=jnp.float32)
    running_mean = 0.1 * jax.random.normal(km, (OC,), dtype=jnp.float32)
    running_var = jnp.abs(1.0 + 0.1 * jax.random.normal(kv, (OC,), dtype=jnp.float32))
    prelu_a = jnp.full((OC,), 0.25, dtype=jnp.float32)   # PyTorch PReLU default

    scale = gamma / jnp.sqrt(running_var + 1e-5)
    shift = beta - running_mean * scale

    def ref_fwd(x_in, w_folded, s, p):
        y = jax.lax.conv_general_dilated(
            x_in, w_folded, (s, s), ((p, p), (p, p)),
            dimension_numbers=("NCHW", "OIHW", "NCHW"),
            precision=jax.lax.Precision.HIGHEST)
        y = y + shift[None, :, None, None]
        return jnp.where(y >= 0, y, prelu_a[None, :, None, None] * y)

    xb = x.astype(jnp.bfloat16).astype(jnp.float32)
    wf = conv_w * scale[:, None, None, None]
    wb = wf.astype(jnp.bfloat16).astype(jnp.float32)

    # --- ConvBnPrelu_Block(4, 8, (3,3), stride=1, padding=1) ---
    out = conv_bn_prelu(x, conv_w, gamma, beta, running_mean, running_var,
                        prelu_a, stride=1, padding=1)
    out = jax.block_until_ready(out)
    assert out.shape == (N, OC, H, W), out.shape
    # Check 1: exact f32 reference (loose tol: kernel uses bf16 MXU operands).
    y32 = ref_fwd(x, wf, 1, 1)
    assert jnp.allclose(out, y32, atol=5e-2, rtol=5e-2), (
        float(jnp.max(jnp.abs(out - y32))))
    # Check 2: reference with the same bf16-rounded operands (tight tol).
    yb = ref_fwd(xb, wb, 1, 1)
    assert jnp.allclose(out, yb, atol=2e-3, rtol=2e-3), (
        float(jnp.max(jnp.abs(out - yb))))

    # --- stride=2, padding=1: exercises the space-to-depth phase path ---
    out2 = conv_bn_prelu(x, conv_w, gamma, beta, running_mean, running_var,
                         prelu_a, stride=2, padding=1)
    out2 = jax.block_until_ready(out2)
    assert out2.shape == (N, OC, H // 2, W // 2), out2.shape
    yb2 = ref_fwd(xb, wb, 2, 1)
    assert jnp.allclose(out2, yb2, atol=2e-3, rtol=2e-3), (
        float(jnp.max(jnp.abs(out2 - yb2))))

    # --- kernel=(1,1), stride=1, padding=0 (module defaults, no-scratch path) ---
    conv_w1 = jax.random.normal(kw_, (OC, IC, 1, 1), dtype=jnp.float32) * 0.1
    out3 = conv_bn_prelu(x, conv_w1, gamma, beta, running_mean, running_var,
                         prelu_a, stride=1, padding=0)
    out3 = jax.block_until_ready(out3)
    assert out3.shape == (N, OC, H, W), out3.shape
    wb1 = (conv_w1 * scale[:, None, None, None]).astype(jnp.bfloat16).astype(jnp.float32)
    yb1 = ref_fwd(xb, wb1, 1, 0)
    assert jnp.allclose(out3, yb1, atol=2e-3, rtol=2e-3), (
        float(jnp.max(jnp.abs(out3 - yb1))))

    print("KERNEL_OK")
</pallas_src>

<mosaic_0001>
module attributes {stable_mosaic.version = 11 : i64} {
  func.func @_conv_bn_prelu_kernel(%arg0: i32, %arg1: memref<1x18x18x4xbf16, #tpu.memory_space<vmem>>, %arg2: memref<36x128xbf16, #tpu.memory_space<vmem>>, %arg3: memref<1x128xf32, #tpu.memory_space<vmem>>, %arg4: memref<1x128xf32, #tpu.memory_space<vmem>>, %arg5: memref<1x8x256xf32, #tpu.memory_space<vmem>>, %arg6: memref<256x36xbf16, #tpu.memory_space<vmem>>) attributes {dimension_semantics = [#tpu.dimension_semantics<parallel>], iteration_bounds = array<i64: 2>, scalar_prefetch = 0 : i64, scratch_operands = 1 : i64, tpu.core_type = #tpu.core_type<tc>, window_params = [{transform_indices = @transform_0, window_bounds = array<i64: 1, 18, 18, 4>}, {pipeline_mode = #tpu.pipeline_mode<synchronous>, transform_indices = @transform_1, window_bounds = array<i64: 36, 128>}, {pipeline_mode = #tpu.pipeline_mode<synchronous>, transform_indices = @transform_2, window_bounds = array<i64: 1, 128>}, {pipeline_mode = #tpu.pipeline_mode<synchronous>, transform_indices = @transform_3, window_bounds = array<i64: 1, 128>}, {transform_indices = @transform_4, window_bounds = array<i64: 1, 8, 256>}]} {
    %c0 = arith.constant 0 : index
    %c0_0 = arith.constant 0 : index
    %c0_1 = arith.constant 0 : index
    %c0_2 = arith.constant 0 : index
    %0 = vector.load %arg1[%c0, %c0_0, %c0_1, %c0_2] : memref<1x18x18x4xbf16, #tpu.memory_space<vmem>>, vector<1x16x16x4xbf16>
    %1 = vector.shape_cast %0 : vector<1x16x16x4xbf16> to vector<16x16x4xbf16>
    %2 = vector.shape_cast %1 : vector<16x16x4xbf16> to vector<256x4xbf16>
    %c0_3 = arith.constant 0 : index
    %c0_4 = arith.constant 0 : index
    %3 = vector.load %arg6[%c0_3, %c0_4] : memref<256x36xbf16, #tpu.memory_space<vmem>>, vector<256x4xbf16>
    tpu.vector_store %arg6[%c0_3, %c0_4], %2 {strides = array<i32>} : memref<256x36xbf16, #tpu.memory_space<vmem>>, vector<256x4xbf16>,
    %c0_5 = arith.constant 0 : index
    %c0_6 = arith.constant 0 : index
    %c1 = arith.constant 1 : index
    %c0_7 = arith.constant 0 : index
    %4 = vector.load %arg1[%c0_5, %c0_6, %c1, %c0_7] : memref<1x18x18x4xbf16, #tpu.memory_space<vmem>>, vector<1x16x16x4xbf16>
    %5 = vector.shape_cast %4 : vector<1x16x16x4xbf16> to vector<16x16x4xbf16>
    %6 = vector.shape_cast %5 : vector<16x16x4xbf16> to vector<256x4xbf16>
    %c0_8 = arith.constant 0 : index
    %c4 = arith.constant 4 : index
    %7 = vector.load %arg6[%c0_8, %c4] : memref<256x36xbf16, #tpu.memory_space<vmem>>, vector<256x4xbf16>
    tpu.vector_store %arg6[%c0_8, %c4], %6 {strides = array<i32>} : memref<256x36xbf16, #tpu.memory_space<vmem>>, vector<256x4xbf16>,
    %c0_9 = arith.constant 0 : index
    %c0_10 = arith.constant 0 : index
    %c2 = arith.constant 2 : index
    %c0_11 = arith.constant 0 : index
    %8 = vector.load %arg1[%c0_9, %c0_10, %c2, %c0_11] : memref<1x18x18x4xbf16, #tpu.memory_space<vmem>>, vector<1x16x16x4xbf16>
    %9 = vector.shape_cast %8 : vector<1x16x16x4xbf16> to vector<16x16x4xbf16>
    %10 = vector.shape_cast %9 : vector<16x16x4xbf16> to vector<256x4xbf16>
    %c0_12 = arith.constant 0 : index
    %c8 = arith.constant 8 : index
    %11 = vector.load %arg6[%c0_12, %c8] : memref<256x36xbf16, #tpu.memory_space<vmem>>, vector<256x4xbf16>
    tpu.vector_store %arg6[%c0_12, %c8], %10 {strides = array<i32>} : memref<256x36xbf16, #tpu.memory_space<vmem>>, vector<256x4xbf16>,
    %c0_13 = arith.constant 0 : index
    %c1_14 = arith.constant 1 : index
    %c0_15 = arith.constant 0 : index
    %c0_16 = arith.constant 0 : index
    %12 = vector.load %arg1[%c0_13, %c1_14, %c0_15, %c0_16] : memref<1x18x18x4xbf16, #tpu.memory_space<vmem>>, vector<1x16x16x4xbf16>
    %13 = vector.shape_cast %12 : vector<1x16x16x4xbf16> to vector<16x16x4xbf16>
    %14 = vector.shape_cast %13 : vector<16x16x4xbf16> to vector<256x4xbf16>
    %c0_17 = arith.constant 0 : index
    %c12 = arith.constant 12 : index
    %15 = vector.load %arg6[%c0_17, %c12] : memref<256x36xbf16, #tpu.memory_space<vmem>>, vector<256x4xbf16>
    tpu.vector_store %arg6[%c0_17, %c12], %14 {strides = array<i32>} : memref<256x36xbf16, #tpu.memory_space<vmem>>, vector<256x4xbf16>,
    %c0_18 = arith.constant 0 : index
    %c1_19 = arith.constant 1 : index
    %c1_20 = arith.constant 1 : index
    %c0_21 = arith.constant 0 : index
    %16 = vector.load %arg1[%c0_18, %c1_19, %c1_20, %c0_21] : memref<1x18x18x4xbf16, #tpu.memory_space<vmem>>, vector<1x16x16x4xbf16>
    %17 = vector.shape_cast %16 : vector<1x16x16x4xbf16> to vector<16x16x4xbf16>
    %18 = vector.shape_cast %17 : vector<16x16x4xbf16> to vector<256x4xbf16>
    %c0_22 = arith.constant 0 : index
    %c16 = arith.constant 16 : index
    %19 = vector.load %arg6[%c0_22, %c16] : memref<256x36xbf16, #tpu.memory_space<vmem>>, vector<256x4xbf16>
    tpu.vector_store %arg6[%c0_22, %c16], %18 {strides = array<i32>} : memref<256x36xbf16, #tpu.memory_space<vmem>>, vector<256x4xbf16>,
    %c0_23 = arith.constant 0 : index
    %c1_24 = arith.constant 1 : index
    %c2_25 = arith.constant 2 : index
    %c0_26 = arith.constant 0 : index
    %20 = vector.load %arg1[%c0_23, %c1_24, %c2_25, %c0_26] : memref<1x18x18x4xbf16, #tpu.memory_space<vmem>>, vector<1x16x16x4xbf16>
    %21 = vector.shape_cast %20 : vector<1x16x16x4xbf16> to vector<16x16x4xbf16>
    %22 = vector.shape_cast %21 : vector<16x16x4xbf16> to vector<256x4xbf16>
    %c0_27 = arith.constant 0 : index
    %c20 = arith.constant 20 : index
    %23 = vector.load %arg6[%c0_27, %c20] : memref<256x36xbf16, #tpu.memory_space<vmem>>, vector<256x4xbf16>
    tpu.vector_store %arg6[%c0_27, %c20], %22 {strides = array<i32>} : memref<256x36xbf16, #tpu.memory_space<vmem>>, vector<256x4xbf16>,
    %c0_28 = arith.constant 0 : index
    %c2_29 = arith.constant 2 : index
    %c0_30 = arith.constant 0 : index
    %c0_31 = arith.constant 0 : index
    %24 = vector.load %arg1[%c0_28, %c2_29, %c0_30, %c0_31] : memref<1x18x18x4xbf16, #tpu.memory_space<vmem>>, vector<1x16x16x4xbf16>
    %25 = vector.shape_cast %24 : vector<1x16x16x4xbf16> to vector<16x16x4xbf16>
    %26 = vector.shape_cast %25 : vector<16x16x4xbf16> to vector<256x4xbf16>
    %c0_32 = arith.constant 0 : index
    %c24 = arith.constant 24 : index
    %27 = vector.load %arg6[%c0_32, %c24] : memref<256x36xbf16, #tpu.memory_space<vmem>>, vector<256x4xbf16>
    tpu.vector_store %arg6[%c0_32, %c24], %26 {strides = array<i32>} : memref<256x36xbf16, #tpu.memory_space<vmem>>, vector<256x4xbf16>,
    %c0_33 = arith.constant 0 : index
    %c2_34 = arith.constant 2 : index
    %c1_35 = arith.constant 1 : index
    %c0_36 = arith.constant 0 : index
    %28 = vector.load %arg1[%c0_33, %c2_34, %c1_35, %c0_36] : memref<1x18x18x4xbf16, #tpu.memory_space<vmem>>, vector<1x16x16x4xbf16>
    %29 = vector.shape_cast %28 : vector<1x16x16x4xbf16> to vector<16x16x4xbf16>
    %30 = vector.shape_cast %29 : vector<16x16x4xbf16> to vector<256x4xbf16>
    %c0_37 = arith.constant 0 : index
    %c28 = arith.constant 28 : index
    %31 = vector.load %arg6[%c0_37, %c28] : memref<256x36xbf16, #tpu.memory_space<vmem>>, vector<256x4xbf16>
    tpu.vector_store %arg6[%c0_37, %c28], %30 {strides = array<i32>} : memref<256x36xbf16, #tpu.memory_space<vmem>>, vector<256x4xbf16>,
    %c0_38 = arith.constant 0 : index
    %c2_39 = arith.constant 2 : index
    %c2_40 = arith.constant 2 : index
    %c0_41 = arith.constant 0 : index
    %32 = vector.load %arg1[%c0_38, %c2_39, %c2_40, %c0_41] : memref<1x18x18x4xbf16, #tpu.memory_space<vmem>>, vector<1x16x16x4xbf16>
    %33 = vector.shape_cast %32 : vector<1x16x16x4xbf16> to vector<16x16x4xbf16>
    %34 = vector.shape_cast %33 : vector<16x16x4xbf16> to vector<256x4xbf16>
    %c0_42 = arith.constant 0 : index
    %c32 = arith.constant 32 : index
    %35 = vector.load %arg6[%c0_42, %c32] : memref<256x36xbf16, #tpu.memory_space<vmem>>, vector<256x4xbf16>
    tpu.vector_store %arg6[%c0_42, %c32], %34 {strides = array<i32>} : memref<256x36xbf16, #tpu.memory_space<vmem>>, vector<256x4xbf16>,
    %c0_43 = arith.constant 0 : index
    %c0_44 = arith.constant 0 : index
    %36 = vector.load %arg6[%c0_43, %c0_44] : memref<256x36xbf16, #tpu.memory_space<vmem>>, vector<256x36xbf16>
    %c0_45 = arith.constant 0 : index
    %c0_46 = arith.constant 0 : index
    %37 = vector.load %arg2[%c0_45, %c0_46] : memref<36x128xbf16, #tpu.memory_space<vmem>>, vector<36x128xbf16>
    %cst = arith.constant dense<0.000000e+00> : vector<256x128xf32>
    %38 = tpu.matmul %36, %37, %cst {dimension_numbers = #tpu.dot_dimension_numbers<[1], [0], [0], [1], [0, 0, 1, 1], [], []>} : vector<256x36xbf16>, vector<36x128xbf16>, vector<256x128xf32> -> vector<256x128xf32>
    %c0_47 = arith.constant 0 : index
    %c0_48 = arith.constant 0 : index
    %39 = vector.load %arg3[%c0_47, %c0_48] : memref<1x128xf32, #tpu.memory_space<vmem>>, vector<1x128xf32>
    %40 = vector.broadcast %39 : vector<1x128xf32> to vector<256x128xf32>
    %41 = arith.addf %38, %40 : vector<256x128xf32>
    %cst_49 = arith.constant 0.000000e+00 : f32
    %42 = vector.broadcast %cst_49 : f32 to vector<256x128xf32>
    %43 = arith.cmpf oge, %41, %42 : vector<256x128xf32>
    %c0_50 = arith.constant 0 : index
    %c0_51 = arith.constant 0 : index
    %44 = vector.load %arg4[%c0_50, %c0_51] : memref<1x128xf32, #tpu.memory_space<vmem>>, vector<1x128xf32>
    %45 = vector.broadcast %44 : vector<1x128xf32> to vector<256x128xf32>
    %46 = arith.mulf %45, %41 : vector<256x128xf32>
    %47 = arith.select %43, %41, %46 : vector<256x128xi1>, vector<256x128xf32>
    %48 = tpu.transpose %47, [1, 0] : vector<256x128xf32> -> vector<128x256xf32>
    %49 = vector.extract_strided_slice %48 {offsets = [0, 0], sizes = [8, 256], strides = [1, 1]} : vector<128x256xf32> to vector<8x256xf32>
    %c0_52 = arith.constant 0 : index
    %c0_53 = arith.constant 0 : index
    %c0_54 = arith.constant 0 : index
    %50 = vector.load %arg5[%c0_52, %c0_53, %c0_54] : memref<1x8x256xf32, #tpu.memory_space<vmem>>, vector<1x8x256xf32>
    %51 = vector.shape_cast %50 : vector<1x8x256xf32> to vector<8x256xf32>
    %52 = vector.shape_cast %49 : vector<8x256xf32> to vector<1x8x256xf32>
    tpu.vector_store %arg5[%c0_52, %c0_53, %c0_54], %52 {strides = array<i32>} : memref<1x8x256xf32, #tpu.memory_space<vmem>>, vector<1x8x256xf32>,
    return
  }
  func.func @transform_0(%arg0: i32) -> (i32, i32, i32, i32) {
    %c0_i32 = arith.constant 0 : i32
    %c0_i32_0 = arith.constant 0 : i32
    %c0_i32_1 = arith.constant 0 : i32
    %c0_i32_2 = arith.constant 0 : i32
    return %arg0, %c0_i32, %c0_i32_0, %c0_i32_1 : i32, i32, i32, i32
  }
  func.func @transform_1(%arg0: i32) -> (i32, i32) {
    %c0_i32 = arith.constant 0 : i32
    %c0_i32_0 = arith.constant 0 : i32
    %c0_i32_1 = arith.constant 0 : i32
    return %c0_i32, %c0_i32_0 : i32, i32
  }
  func.func @transform_2(%arg0: i32) -> (i32, i32) {
    %c0_i32 = arith.constant 0 : i32
    %c0_i32_0 = arith.constant 0 : i32
    %c0_i32_1 = arith.constant 0 : i32
    return %c0_i32, %c0_i32_0 : i32, i32
  }
  func.func @transform_3(%arg0: i32) -> (i32, i32) {
    %c0_i32 = arith.constant 0 : i32
    %c0_i32_0 = arith.constant 0 : i32
    %c0_i32_1 = arith.constant 0 : i32
    return %c0_i32, %c0_i32_0 : i32, i32
  }
  func.func @transform_4(%arg0: i32) -> (i32, i32, i32) {
    %c0_i32 = arith.constant 0 : i32
    %c0_i32_0 = arith.constant 0 : i32
    %c0_i32_1 = arith.constant 0 : i32
    return %arg0, %c0_i32, %c0_i32_0 : i32, i32, i32
  }
}

</mosaic_0001>

<llo_original>
// kernel: conv_bn_prelu.1
$region0: #{conv_bn_prelu.1}
  #allocation0 [shape = 'u32[]', space=smem, size = 0x4, offset = 0x4, fixed_abs, tag = 'smem constant byte address 0x4 - core index']
  #allocation1 [shape = 'u32[144,128]{1,0:T(1,128)}', space=vmem, size = 0x12000, scoped, tag = 'internal scratch']
  #allocation2 [shape = 'bf16[256,36]{1,0:T(16,128)(2,1)}', space=vmem, size = 0x10000, scoped, tag = 'scratch operand']
  %s0 = inlined_call_operand.vmem [shape: bf16[2,18,18,4], index: 0, kind: input, shape index: {}]
  %s1 = inlined_call_operand.vmem [shape: bf16[36,128], index: 1, kind: input, shape index: {}]
  %s2 = inlined_call_operand.vmem [shape: f32[1,128], index: 2, kind: input, shape index: {}]
  %s3 = inlined_call_operand.vmem [shape: f32[1,128], index: 3, kind: input, shape index: {}]
  %s4 = inlined_call_operand.vmem [shape: f32[2,8,256], index: 4, kind: output, shape index: {}]
  %s5 = sld [smem:[#allocation0]]
  $region49: #{conv_bn_prelu.1} parent=0
    _
  %s7 = ssub.s32 1, %s5
  %s8 = scalar_select 0, %s7, %s5
  loop: start=0, step=1, limit=4
  $region2: #{conv_bn_prelu.1} parent=0 // loop_pre_header
    _
  $region3: #{conv_bn_prelu.1} parent=0 // loop_header
    %s10 = sphi 0, %s14
    %p11 = scmp.ge.s32.totalorder %s10, 4
    %s20 = sphi 0, %s22
    %s23 = sphi 0, %s20
    %s24 = sphi 0, %s23
    %s40 = sphi 0, %s24
    %s44 = sphi 0, %s44
    %s46 = sphi 0, %s44
    %s47 = sphi 0, %s46
    %s61 = sphi 0, %s47
    %s65 = sphi 0, %s65
    %s67 = sphi 0, %s65
    %s68 = sphi 0, %s67
    %s82 = sphi 0, %s68
    %s86 = sphi 0, %s86
    %s88 = sphi 0, %s86
    %s89 = sphi 0, %s88
    %s103 = sphi 0, %s89
    %s109 = sphi 0, %s111
    %s112 = sphi 0, %s109
    %s113 = sphi 0, %s112
    %s129 = sphi 0, %s113
  $region4: #{conv_bn_prelu.1} parent=0 // loop_header_branch
    %13 = sbr.rel (%p11) target = $region8
  $region5: #{conv_bn_prelu.1} parent=0 // loop_body
    %s15 = ssub.s32 %s10, 1
    %s16 = ssub.s32 %s10, 2
    %s17 = sadd.s32 %s10, 1
    %s18 = ssub.s32 %s10, %s17
    %p19 = scmp.eq.s32.totalorder %s18, 0
    %s21 = sadd.s32 %s20, 1
    %s22 = scalar_select %p19, %s20, %s21
    %p25 = pneg %p19
    %p26 = scmp.eq.s32.totalorder %s10, 1
    %p27 = por %p25, %p26
    %p28 = scmp.ne.s32.totalorder %s20, %s23
    %p29 = scmp.eq.s32.totalorder %s10, 0
    %p30 = por %p28, %p29
    %p31 = scmp.ne.s32.totalorder %s20, %s23
    %p32 = scmp.eq.s32.totalorder %s15, 1
    %p33 = por %p31, %p32
    %p34 = scmp.ne.s32.totalorder %s23, %s24
    %p35 = scmp.eq.s32.totalorder %s15, 0
    %p36 = por %p34, %p35
    %p37 = scmp.ne.s32.totalorder %s23, %s24
    %p38 = scmp.eq.s32.totalorder %s16, 1
    %p39 = por %p37, %p38
    %p41 = scmp.ne.s32.totalorder %s24, %s40
    %p42 = scmp.eq.s32.totalorder %s16, 0
    %p43 = por %p41, %p42
    %s45 = sadd.s32 %s44, 1
    %p48 = scmp.eq.s32.totalorder %s10, 1
    %p49 = scmp.ne.s32.totalorder %s44, %s46
    %p50 = scmp.eq.s32.totalorder %s10, 0
    %p51 = por %p49, %p50
    %p52 = scmp.ne.s32.totalorder %s44, %s46
    %p53 = scmp.eq.s32.totalorder %s15, 1
    %p54 = por %p52, %p53
    %p55 = scmp.ne.s32.totalorder %s46, %s47
    %p56 = scmp.eq.s32.totalorder %s15, 0
    %p57 = por %p55, %p56
    %p58 = scmp.ne.s32.totalorder %s46, %s47
    %p59 = scmp.eq.s32.totalorder %s16, 1
    %p60 = por %p58, %p59
    %p62 = scmp.ne.s32.totalorder %s47, %s61
    %p63 = scmp.eq.s32.totalorder %s16, 0
    %p64 = por %p62, %p63
    %s66 = sadd.s32 %s65, 1
    %p69 = scmp.eq.s32.totalorder %s10, 1
    %p70 = scmp.ne.s32.totalorder %s65, %s67
    %p71 = scmp.eq.s32.totalorder %s10, 0
    %p72 = por %p70, %p71
    %p73 = scmp.ne.s32.totalorder %s65, %s67
    %p74 = scmp.eq.s32.totalorder %s15, 1
    %p75 = por %p73, %p74
    %p76 = scmp.ne.s32.totalorder %s67, %s68
    %p77 = scmp.eq.s32.totalorder %s15, 0
    %p78 = por %p76, %p77
    %p79 = scmp.ne.s32.totalorder %s67, %s68
    %p80 = scmp.eq.s32.totalorder %s16, 1
    %p81 = por %p79, %p80
    %p83 = scmp.ne.s32.totalorder %s68, %s82
    %p84 = scmp.eq.s32.totalorder %s16, 0
    %p85 = por %p83, %p84
    %s87 = sadd.s32 %s86, 1
    %p90 = scmp.eq.s32.totalorder %s10, 1
    %p91 = scmp.ne.s32.totalorder %s86, %s88
    %p92 = scmp.eq.s32.totalorder %s10, 0
    %p93 = por %p91, %p92
    %p94 = scmp.ne.s32.totalorder %s86, %s88
    %p95 = scmp.eq.s32.totalorder %s15, 1
    %p96 = por %p94, %p95
    %p97 = scmp.ne.s32.totalorder %s88, %s89
    %p98 = scmp.eq.s32.totalorder %s15, 0
    %p99 = por %p97, %p98
    %p100 = scmp.ne.s32.totalorder %s88, %s89
    %p101 = scmp.eq.s32.totalorder %s16, 1
    %p102 = por %p100, %p101
    %p104 = scmp.ne.s32.totalorder %s89, %s103
    %p105 = scmp.eq.s32.totalorder %s16, 0
    %p106 = por %p104, %p105
    %s107 = ssub.s32 %s10, %s17
    %p108 = scmp.eq.s32.totalorder %s107, 0
    %s110 = sadd.s32 %s109, 1
    %s111 = scalar_select %p108, %s109, %s110
    %p114 = pneg %p108
    %p115 = scmp.eq.s32.totalorder %s10, 1
    %p116 = por %p114, %p115
    %p117 = scmp.ne.s32.totalorder %s109, %s112
    %p118 = scmp.eq.s32.totalorder %s10, 0
    %p119 = por %p117, %p118
    %p120 = scmp.ne.s32.totalorder %s109, %s112
    %p121 = scmp.eq.s32.totalorder %s15, 1
    %p122 = por %p120, %p121
    %p123 = scmp.ne.s32.totalorder %s112, %s113
    %p124 = scmp.eq.s32.totalorder %s15, 0
    %p125 = por %p123, %p124
    %p126 = scmp.ne.s32.totalorder %s112, %s113
    %p127 = scmp.eq.s32.totalorder %s16, 1
    %p128 = por %p126, %p127
    %p130 = scmp.ne.s32.totalorder %s113, %s129
    %p131 = scmp.eq.s32.totalorder %s16, 0
    %p132 = por %p130, %p131
    %p133 = scmp.le.s32.totalorder 1, %s10
    %p134 = scmp.lt.s32.totalorder %s10, 3
    %p135 = pnand %p133, %p134
    %p136 = pneg %p135
    // Predicated region
    $region9: #{conv_bn_prelu.1} parent=5 // pred_check
      _
    $region10: #{conv_bn_prelu.1} parent=5 // pred_check_branch
      %138 = sbr.rel (%p135) target = $region12
    $region11: #{conv_bn_prelu.1} parent=5 // pred_region
      %s139 = ssub.s32 %s10, 1
      // Predicated region
      $region13: #{conv_bn_prelu.1} parent=11 // pred_check
        %p140 = pneg %p57
      $region14: #{conv_bn_prelu.1} parent=11 // pred_check_branch
        %142 = sbr.rel (%p140) target = $region16
      $region15: #{conv_bn_prelu.1} parent=11 // pred_region
        _
      $region16: #{conv_bn_prelu.1} parent=11 // pred_fallthru
        _
      // Predicated region
      $region17: #{conv_bn_prelu.1} parent=11 // pred_check
        %p143 = pneg %p78
      $region18: #{conv_bn_prelu.1} parent=11 // pred_check_branch
        %145 = sbr.rel (%p143) target = $region20
      $region19: #{conv_bn_prelu.1} parent=11 // pred_region
        _
      $region20: #{conv_bn_prelu.1} parent=11 // pred_fallthru
        _
      // Predicated region
      $region21: #{conv_bn_prelu.1} parent=11 // pred_check
        %p146 = pneg %p99
      $region22: #{conv_bn_prelu.1} parent=11 // pred_check_branch
        %148 = sbr.rel (%p146) target = $region24
      $region23: #{conv_bn_prelu.1} parent=11 // pred_region
        _
      $region24: #{conv_bn_prelu.1} parent=11 // pred_fallthru
        _
    $region12: #{conv_bn_prelu.1} parent=5 // pred_fallthru
      _
    %p149 = scmp.lt.s32.totalorder %s10, 2
    // Predicated region
    $region25: #{conv_bn_prelu.1} parent=5 // pred_check
      %p150 = pneg %p149
    $region26: #{conv_bn_prelu.1} parent=5 // pred_check_branch
      %152 = sbr.rel (%p150) target = $region28
    $region27: #{conv_bn_prelu.1} parent=5 // pred_region
      // Predicated region
      $region29: #{conv_bn_prelu.1} parent=27 // pred_check
        %p153 = pneg %p30
      $region30: #{conv_bn_prelu.1} parent=27 // pred_check_branch
        %155 = sbr.rel (%p153) target = $region32
      $region31: #{conv_bn_prelu.1} parent=27 // pred_region
        %p156 = scmp.lt.s32.totalorder %s10, 1
        %s157 = scalar_select %p156, %s10, 1
        %s158 = smul.addr %s157, 54
        %s159 = smul.addr %s158, 4
        %s160 = scalar_lea.vmem %s0, %s159
      $region32: #{conv_bn_prelu.1} parent=27 // pred_fallthru
        _
    $region28: #{conv_bn_prelu.1} parent=5 // pred_fallthru
      _
    %p161 = scmp.le.s32.totalorder 1, %s10
    %p162 = scmp.lt.s32.totalorder %s10, 3
    %p163 = pnand %p161, %p162
    %p164 = pneg %p163
    // Predicated region
    $region33: #{conv_bn_prelu.1} parent=5 // pred_check
      _
    $region34: #{conv_bn_prelu.1} parent=5 // pred_check_branch
      %166 = sbr.rel (%p163) target = $region36
    $region35: #{conv_bn_prelu.1} parent=5 // pred_region
      %s167 = ssub.s32 %s10, 1
      %p168 = scmp.lt.s32.totalorder %s15, 1
      %s169 = scalar_select %p168, %s15, 1
      %s170 = smul.addr %s169, 54
      %s171 = smul.addr %s170, 4
      %s172 = scalar_lea.vmem %s0, %s171
      %p173 = pneg %p36
      %p174 = pneg %p33
      %p175 = pneg %p57
      %p176 = pneg %p54
      %p177 = pneg %p78
      %p178 = pneg %p75
      %p179 = pneg %p99
      %p180 = pneg %p96
      %p181 = pneg %p125
      %p182 = pneg %p122
      %p183 = scmp.lt.s32.totalorder %s15, 1
      %s184 = scalar_select %p183, %s15, 1
      %s185 = smul.addr %s184, 2
      %s186 = smul.addr %s185, 8
      %s187 = scalar_lea.vmem %s4, %s186
      %p188 = scmp.lt.s32.totalorder %s15, 1
      %s189 = scalar_select %p188, %s15, 1
      %s190 = smul.addr %s189, 54
      %s191 = smul.addr %s190, 4
      %s192 = scalar_lea.vmem %s0, %s191
      %p193 = scmp.lt.s32.totalorder %s15, 1
      %s194 = scalar_select %p193, %s15, 1
      %s195 = smul.addr %s194, 2
      %s196 = smul.addr %s195, 8
      %s197 = scalar_lea.vmem %s4, %s196
      %v199 = vld [vmem:[%s192] sm:$0xf]
      %v200 = vld [vmem:[%s192 + $0x4] sm:$0xf]
      %v201 = vld [vmem:[%s192 + $0xc] sm:$0xf]
      %v202 = vld [vmem:[%s192 + $0x10] sm:$0xf]
      %v203 = vld [vmem:[%s192 + $0x18] sm:$0xf]
      %v204 = vld [vmem:[%s192 + $0x1c] sm:$0xf]
      %v205 = vld [vmem:[%s192 + $0x24] sm:$0xf]
      %v206 = vld [vmem:[%s192 + $0x28] sm:$0xf]
      %v207 = vld [vmem:[%s192 + $0x30] sm:$0xf]
      %v208 = vld [vmem:[%s192 + $0x34] sm:$0xf]
      %v209 = vld [vmem:[%s192 + $0x3c] sm:$0xf]
      %v210 = vld [vmem:[%s192 + $0x40] sm:$0xf]
      %v211 = vld [vmem:[%s192 + $0x48] sm:$0xf]
      %v212 = vld [vmem:[%s192 + $0x4c] sm:$0xf]
      %v213 = vld [vmem:[%s192 + $0x54] sm:$0xf]
      %v214 = vld [vmem:[%s192 + $0x58] sm:$0xf]
      %v215 = vld [vmem:[%s192 + $0x60] sm:$0xf]
      %v216 = vld [vmem:[%s192 + $0x64] sm:$0xf]
      %v217 = vld [vmem:[%s192 + $0x6c] sm:$0xf]
      %v218 = vld [vmem:[%s192 + $0x70] sm:$0xf]
      %v219 = vld [vmem:[%s192 + $0x78] sm:$0xf]
      %v220 = vld [vmem:[%s192 + $0x7c] sm:$0xf]
      %v221 = vld [vmem:[%s192 + $0x84] sm:$0xf]
      %v222 = vld [vmem:[%s192 + $0x88] sm:$0xf]
      %v223 = vld [vmem:[%s192 + $0x90] sm:$0xf]
      %v224 = vld [vmem:[%s192 + $0x94] sm:$0xf]
      %v225 = vld [vmem:[%s192 + $0x9c] sm:$0xf]
      %v226 = vld [vmem:[%s192 + $0xa0] sm:$0xf]
      %v227 = vld [vmem:[%s192 + $0xa8] sm:$0xf]
      %v228 = vld [vmem:[%s192 + $0xac] sm:$0xf]
      %v229 = vld [vmem:[%s192 + $0xb4] sm:$0xf]
      %v230 = vld [vmem:[%s192 + $0xb8] sm:$0xf]
      %v263 = vunpack.c.l.b16 %v199
      %v264 = vunpack.c.l.b16 %v200
      %v265 = vunpack.c.l.b16 %v201
      %v266 = vunpack.c.l.b16 %v202
      %v267 = vunpack.c.l.b16 %v203
      %v268 = vunpack.c.l.b16 %v204
      %v269 = vunpack.c.l.b16 %v205
      %v270 = vunpack.c.l.b16 %v206
      %v271 = vunpack.c.l.b16 %v207
      %v272 = vunpack.c.l.b16 %v208
      %v273 = vunpack.c.l.b16 %v209
      %v274 = vunpack.c.l.b16 %v210
      %v275 = vunpack.c.l.b16 %v211
      %v276 = vunpack.c.l.b16 %v212
      %v277 = vunpack.c.l.b16 %v213
      %v278 = vunpack.c.l.b16 %v214
      %v279 = vunpack.c.l.b16 %v215
      %v280 = vunpack.c.l.b16 %v216
      %v281 = vunpack.c.l.b16 %v217
      %v282 = vunpack.c.l.b16 %v218
      %v283 = vunpack.c.l.b16 %v219
      %v284 = vunpack.c.l.b16 %v220
      %v285 = vunpack.c.l.b16 %v221
      %v286 = vunpack.c.l.b16 %v222
      %v287 = vunpack.c.l.b16 %v223
      %v288 = vunpack.c.l.b16 %v224
      %v289 = vunpack.c.l.b16 %v225
      %v290 = vunpack.c.l.b16 %v226
      %v291 = vunpack.c.l.b16 %v227
      %v292 = vunpack.c.l.b16 %v228
      %v293 = vunpack.c.l.b16 %v229
      %v294 = vunpack.c.l.b16 %v230
      %v295 = vpack.c.b16 %v264, %v263
      %v296 = vpack.c.b16 %v266, %v265
      %v297 = vpack.c.b16 %v268, %v267
      %v298 = vpack.c.b16 %v270, %v269
      %v299 = vpack.c.b16 %v272, %v271
      %v300 = vpack.c.b16 %v274, %v273
      %v301 = vpack.c.b16 %v276, %v275
      %v302 = vpack.c.b16 %v278, %v277
      %v303 = vpack.c.b16 %v280, %v279
      %v304 = vpack.c.b16 %v282, %v281
      %v305 = vpack.c.b16 %v284, %v283
      %v306 = vpack.c.b16 %v286, %v285
      %v307 = vpack.c.b16 %v288, %v287
      %v308 = vpack.c.b16 %v290, %v289
      %v309 = vpack.c.b16 %v292, %v291
      %v310 = vpack.c.b16 %v294, %v293
      %vm327 = vcmask 31744
      %328 = vst.msk [vmem:[#allocation2] sm:$0xff] %vm327, %v295
      %329 = vst.msk [vmem:[#allocation2 + $0x8] sm:$0xff] %vm327, %v296
      %330 = vst.msk [vmem:[#allocation2 + $0x10] sm:$0xff] %vm327, %v297
      %331 = vst.msk [vmem:[#allocation2 + $0x18] sm:$0xff] %vm327, %v298
      %332 = vst.msk [vmem:[#allocation2 + $0x20] sm:$0xff] %vm327, %v299
      %333 = vst.msk [vmem:[#allocation2 + $0x28] sm:$0xff] %vm327, %v300
      %334 = vst.msk [vmem:[#allocation2 + $0x30] sm:$0xff] %vm327, %v301
      %335 = vst.msk [vmem:[#allocation2 + $0x38] sm:$0xff] %vm327, %v302
      %336 = vst.msk [vmem:[#allocation2 + $0x40] sm:$0xff] %vm327, %v303
      %337 = vst.msk [vmem:[#allocation2 + $0x48] sm:$0xff] %vm327, %v304
      %338 = vst.msk [vmem:[#allocation2 + $0x50] sm:$0xff] %vm327, %v305
      %339 = vst.msk [vmem:[#allocation2 + $0x58] sm:$0xff] %vm327, %v306
      %340 = vst.msk [vmem:[#allocation2 + $0x60] sm:$0xff] %vm327, %v307
      %341 = vst.msk [vmem:[#allocation2 + $0x68] sm:$0xff] %vm327, %v308
      %342 = vst.msk [vmem:[#allocation2 + $0x70] sm:$0xff] %vm327, %v309
      %343 = vst.msk [vmem:[#allocation2 + $0x78] sm:$0xff] %vm327, %v310
      %v344 = vld [vmem:[%s192] sm:$0xf]
      %v345 = vld [vmem:[%s192 + $0x4] sm:$0xf]
      %v346 = vld [vmem:[%s192 + $0x8] sm:$0x1]
      %v347 = vld [vmem:[%s192 + $0xc] sm:$0xf]
      %v348 = vld [vmem:[%s192 + $0x10] sm:$0xf]
      %v349 = vld [vmem:[%s192 + $0x14] sm:$0x1]
      %v350 = vld [vmem:[%s192 + $0x18] sm:$0xf]
      %v351 = vld [vmem:[%s192 + $0x1c] sm:$0xf]
      %v352 = vld [vmem:[%s192 + $0x20] sm:$0x1]
      %v353 = vld [vmem:[%s192 + $0x24] sm:$0xf]
      %v354 = vld [vmem:[%s192 + $0x28] sm:$0xf]
      %v355 = vld [vmem:[%s192 + $0x2c] sm:$0x1]
      %v356 = vld [vmem:[%s192 + $0x30] sm:$0xf]
      %v357 = vld [vmem:[%s192 + $0x34] sm:$0xf]
      %v358 = vld [vmem:[%s192 + $0x38] sm:$0x1]
      %v359 = vld [vmem:[%s192 + $0x3c] sm:$0xf]
      %v360 = vld [vmem:[%s192 + $0x40] sm:$0xf]
      %v361 = vld [vmem:[%s192 + $0x44] sm:$0x1]
      %v362 = vld [vmem:[%s192 + $0x48] sm:$0xf]
      %v363 = vld [vmem:[%s192 + $0x4c] sm:$0xf]
      %v364 = vld [vmem:[%s192 + $0x50] sm:$0x1]
      %v365 = vld [vmem:[%s192 + $0x54] sm:$0xf]
      %v366 = vld [vmem:[%s192 + $0x58] sm:$0xf]
      %v367 = vld [vmem:[%s192 + $0x5c] sm:$0x1]
      %v368 = vld [vmem:[%s192 + $0x60] sm:$0xf]
      %v369 = vld [vmem:[%s192 + $0x64] sm:$0xf]
      %v370 = vld [vmem:[%s192 + $0x68] sm:$0x1]
      %v371 = vld [vmem:[%s192 + $0x6c] sm:$0xf]
      %v372 = vld [vmem:[%s192 + $0x70] sm:$0xf]
      %v373 = vld [vmem:[%s192 + $0x74] sm:$0x1]
      %v374 = vld [vmem:[%s192 + $0x78] sm:$0xf]
      %v375 = vld [vmem:[%s192 + $0x7c] sm:$0xf]
      %v376 = vld [vmem:[%s192 + $0x80] sm:$0x1]
      %v377 = vld [vmem:[%s192 + $0x84] sm:$0xf]
      %v378 = vld [vmem:[%s192 + $0x88] sm:$0xf]
      %v379 = vld [vmem:[%s192 + $0x8c] sm:$0x1]
      %v380 = vld [vmem:[%s192 + $0x90] sm:$0xf]
      %v381 = vld [vmem:[%s192 + $0x94] sm:$0xf]
      %v382 = vld [vmem:[%s192 + $0x98] sm:$0x1]
      %v383 = vld [vmem:[%s192 + $0x9c] sm:$0xf]
      %v384 = vld [vmem:[%s192 + $0xa0] sm:$0xf]
      %v385 = vld [vmem:[%s192 + $0xa4] sm:$0x1]
      %v386 = vld [vmem:[%s192 + $0xa8] sm:$0xf]
      %v387 = vld [vmem:[%s192 + $0xac] sm:$0xf]
      %v388 = vld [vmem:[%s192 + $0xb0] sm:$0x1]
      %v389 = vld [vmem:[%s192 + $0xb4] sm:$0xf]
      %v390 = vld [vmem:[%s192 + $0xb8] sm:$0xf]
      %v391 = vld [vmem:[%s192 + $0xbc] sm:$0x1]
      %vm392 = vsmask.f32 3328
      %vm393 = vsmask.f32 7440
      %vm394 = vmor %vm392, %vm393
      %v396 = vshrl.u32 %v344, 16
      %v398 = vrot.slane %v396, 4
      %v399 = vshll.u32 %v344, 16
      %v401 = vrot.slane %v399, 5
      %v402 = vor.u32 %v398, %v401
      %v403 = vrot.slane %v402, 4
      %v405 = vshll.u32 %v345, 16
      %v407 = vrot.slane %v405, 5
      %v408 = vsel %vm394, %v403, %v407
      %v409 = vshrl.u32 %v345, 16
      %v411 = vrot.slane %v409, 4
      %v412 = vor.u32 %v411, %v407
      %v413 = vrot.slane %v412, 4
      %v415 = vshll.u32 %v346, 16
      %v417 = vrot.slane %v415, 5
      %v418 = vsel %vm394, %v413, %v417
      %v420 = vshrl.u32 %v347, 16
      %v422 = vrot.slane %v420, 4
      %v423 = vshll.u32 %v347, 16
      %v425 = vrot.slane %v423, 5
      %v426 = vor.u32 %v422, %v425
      %v427 = vrot.slane %v426, 4
      %v429 = vshll.u32 %v348, 16
      %v431 = vrot.slane %v429, 5
      %v432 = vsel %vm394, %v427, %v431
      %v433 = vshrl.u32 %v348, 16
      %v435 = vrot.slane %v433, 4
      %v436 = vor.u32 %v435, %v431
      %v437 = vrot.slane %v436, 4
      %v439 = vshll.u32 %v349, 16
      %v441 = vrot.slane %v439, 5
      %v442 = vsel %vm394, %v437, %v441
      %v444 = vshrl.u32 %v350, 16
      %v446 = vrot.slane %v444, 4
      %v447 = vshll.u32 %v350, 16
      %v449 = vrot.slane %v447, 5
      %v450 = vor.u32 %v446, %v449
      %v451 = vrot.slane %v450, 4
      %v453 = vshll.u32 %v351, 16
      %v455 = vrot.slane %v453, 5
      %v456 = vsel %vm394, %v451, %v455
      %v457 = vshrl.u32 %v351, 16
      %v459 = vrot.slane %v457, 4
      %v460 = vor.u32 %v459, %v455
      %v461 = vrot.slane %v460, 4
      %v463 = vshll.u32 %v352, 16
      %v465 = vrot.slane %v463, 5
      %v466 = vsel %vm394, %v461, %v465
      %v468 = vshrl.u32 %v353, 16
      %v470 = vrot.slane %v468, 4
      %v471 = vshll.u32 %v353, 16
      %v473 = vrot.slane %v471, 5
      %v474 = vor.u32 %v470, %v473
      %v475 = vrot.slane %v474, 4
      %v477 = vshll.u32 %v354, 16
      %v479 = vrot.slane %v477, 5
      %v480 = vsel %vm394, %v475, %v479
      %v481 = vshrl.u32 %v354, 16
      %v483 = vrot.slane %v481, 4
      %v484 = vor.u32 %v483, %v479
      %v485 = vrot.slane %v484, 4
      %v487 = vshll.u32 %v355, 16
      %v489 = vrot.slane %v487, 5
      %v490 = vsel %vm394, %v485, %v489
      %v492 = vshrl.u32 %v356, 16
      %v494 = vrot.slane %v492, 4
      %v495 = vshll.u32 %v356, 16
      %v497 = vrot.slane %v495, 5
      %v498 = vor.u32 %v494, %v497
      %v499 = vrot.slane %v498, 4
      %v501 = vshll.u32 %v357, 16
      %v503 = vrot.slane %v501, 5
      %v504 = vsel %vm394, %v499, %v503
      %v505 = vshrl.u32 %v357, 16
      %v507 = vrot.slane %v505, 4
      %v508 = vor.u32 %v507, %v503
      %v509 = vrot.slane %v508, 4
      %v511 = vshll.u32 %v358, 16
      %v513 = vrot.slane %v511, 5
      %v514 = vsel %vm394, %v509, %v513
      %v516 = vshrl.u32 %v359, 16
      %v518 = vrot.slane %v516, 4
      %v519 = vshll.u32 %v359, 16
      %v521 = vrot.slane %v519, 5
      %v522 = vor.u32 %v518, %v521
      %v523 = vrot.slane %v522, 4
      %v525 = vshll.u32 %v360, 16
      %v527 = vrot.slane %v525, 5
      %v528 = vsel %vm394, %v523, %v527
      %v529 = vshrl.u32 %v360, 16
      %v531 = vrot.slane %v529, 4
      %v532 = vor.u32 %v531, %v527
      %v533 = vrot.slane %v532, 4
      %v535 = vshll.u32 %v361, 16
      %v537 = vrot.slane %v535, 5
      %v538 = vsel %vm394, %v533, %v537
      %v540 = vshrl.u32 %v362, 16
      %v542 = vrot.slane %v540, 4
      %v543 = vshll.u32 %v362, 16
      %v545 = vrot.slane %v543, 5
      %v546 = vor.u32 %v542, %v545
      %v547 = vrot.slane %v546, 4
      %v549 = vshll.u32 %v363, 16
      %v551 = vrot.slane %v549, 5
      %v552 = vsel %vm394, %v547, %v551
      %v553 = vshrl.u32 %v363, 16
      %v555 = vrot.slane %v553, 4
      %v556 = vor.u32 %v555, %v551
      %v557 = vrot.slane %v556, 4
      %v559 = vshll.u32 %v364, 16
      %v561 = vrot.slane %v559, 5
      %v562 = vsel %vm394, %v557, %v561
      %v564 = vshrl.u32 %v365, 16
      %v566 = vrot.slane %v564, 4
      %v567 = vshll.u32 %v365, 16
      %v569 = vrot.slane %v567, 5
      %v570 = vor.u32 %v566, %v569
      %v571 = vrot.slane %v570, 4
      %v573 = vshll.u32 %v366, 16
      %v575 = vrot.slane %v573, 5
      %v576 = vsel %vm394, %v571, %v575
      %v577 = vshrl.u32 %v366, 16
      %v579 = vrot.slane %v577, 4
      %v580 = vor.u32 %v579, %v575
      %v581 = vrot.slane %v580, 4
      %v583 = vshll.u32 %v367, 16
      %v585 = vrot.slane %v583, 5
      %v586 = vsel %vm394, %v581, %v585
      %v588 = vshrl.u32 %v368, 16
      %v590 = vrot.slane %v588, 4
      %v591 = vshll.u32 %v368, 16
      %v593 = vrot.slane %v591, 5
      %v594 = vor.u32 %v590, %v593
      %v595 = vrot.slane %v594, 4
      %v597 = vshll.u32 %v369, 16
      %v599 = vrot.slane %v597, 5
      %v600 = vsel %vm394, %v595, %v599
      %v601 = vshrl.u32 %v369, 16
      %v603 = vrot.slane %v601, 4
      %v604 = vor.u32 %v603, %v599
      %v605 = vrot.slane %v604, 4
      %v607 = vshll.u32 %v370, 16
      %v609 = vrot.slane %v607, 5
      %v610 = vsel %vm394, %v605, %v609
      %v612 = vshrl.u32 %v371, 16
      %v614 = vrot.slane %v612, 4
      %v615 = vshll.u32 %v371, 16
      %v617 = vrot.slane %v615, 5
      %v618 = vor.u32 %v614, %v617
      %v619 = vrot.slane %v618, 4
      %v621 = vshll.u32 %v372, 16
      %v623 = vrot.slane %v621, 5
      %v624 = vsel %vm394, %v619, %v623
      %v625 = vshrl.u32 %v372, 16
      %v627 = vrot.slane %v625, 4
      %v628 = vor.u32 %v627, %v623
      %v629 = vrot.slane %v628, 4
      %v631 = vshll.u32 %v373, 16
      %v633 = vrot.slane %v631, 5
      %v634 = vsel %vm394, %v629, %v633
      %v636 = vshrl.u32 %v374, 16
      %v638 = vrot.slane %v636, 4
      %v639 = vshll.u32 %v374, 16
      %v641 = vrot.slane %v639, 5
      %v642 = vor.u32 %v638, %v641
      %v643 = vrot.slane %v642, 4
      %v645 = vshll.u32 %v375, 16
      %v647 = vrot.slane %v645, 5
      %v648 = vsel %vm394, %v643, %v647
      %v649 = vshrl.u32 %v375, 16
      %v651 = vrot.slane %v649, 4
      %v652 = vor.u32 %v651, %v647
      %v653 = vrot.slane %v652, 4
      %v655 = vshll.u32 %v376, 16
      %v657 = vrot.slane %v655, 5
      %v658 = vsel %vm394, %v653, %v657
      %v660 = vshrl.u32 %v377, 16
      %v662 = vrot.slane %v660, 4
      %v663 = vshll.u32 %v377, 16
      %v665 = vrot.slane %v663, 5
      %v666 = vor.u32 %v662, %v665
      %v667 = vrot.slane %v666, 4
      %v669 = vshll.u32 %v378, 16
      %v671 = vrot.slane %v669, 5
      %v672 = vsel %vm394, %v667, %v671
      %v673 = vshrl.u32 %v378, 16
      %v675 = vrot.slane %v673, 4
      %v676 = vor.u32 %v675, %v671
      %v677 = vrot.slane %v676, 4
      %v679 = vshll.u32 %v379, 16
      %v681 = vrot.slane %v679, 5
      %v682 = vsel %vm394, %v677, %v681
      %v684 = vshrl.u32 %v380, 16
      %v686 = vrot.slane %v684, 4
      %v687 = vshll.u32 %v380, 16
      %v689 = vrot.slane %v687, 5
      %v690 = vor.u32 %v686, %v689
      %v691 = vrot.slane %v690, 4
      %v693 = vshll.u32 %v381, 16
      %v695 = vrot.slane %v693, 5
      %v696 = vsel %vm394, %v691, %v695
      %v697 = vshrl.u32 %v381, 16
      %v699 = vrot.slane %v697, 4
      %v700 = vor.u32 %v699, %v695
      %v701 = vrot.slane %v700, 4
      %v703 = vshll.u32 %v382, 16
      %v705 = vrot.slane %v703, 5
      %v706 = vsel %vm394, %v701, %v705
      %v708 = vshrl.u32 %v383, 16
      %v710 = vrot.slane %v708, 4
      %v711 = vshll.u32 %v383, 16
      %v713 = vrot.slane %v711, 5
      %v714 = vor.u32 %v710, %v713
      %v715 = vrot.slane %v714, 4
      %v717 = vshll.u32 %v384, 16
      %v719 = vrot.slane %v717, 5
      %v720 = vsel %vm394, %v715, %v719
      %v721 = vshrl.u32 %v384, 16
      %v723 = vrot.slane %v721, 4
      %v724 = vor.u32 %v723, %v719
      %v725 = vrot.slane %v724, 4
      %v727 = vshll.u32 %v385, 16
      %v729 = vrot.slane %v727, 5
      %v730 = vsel %vm394, %v725, %v729
      %v732 = vshrl.u32 %v386, 16
      %v734 = vrot.slane %v732, 4
      %v735 = vshll.u32 %v386, 16
      %v737 = vrot.slane %v735, 5
      %v738 = vor.u32 %v734, %v737
      %v739 = vrot.slane %v738, 4
      %v741 = vshll.u32 %v387, 16
      %v743 = vrot.slane %v741, 5
      %v744 = vsel %vm394, %v739, %v743
      %v745 = vshrl.u32 %v387, 16
      %v747 = vrot.slane %v745, 4
      %v748 = vor.u32 %v747, %v743
      %v749 = vrot.slane %v748, 4
      %v751 = vshll.u32 %v388, 16
      %v753 = vrot.slane %v751, 5
      %v754 = vsel %vm394, %v749, %v753
      %v756 = vshrl.u32 %v389, 16
      %v758 = vrot.slane %v756, 4
      %v759 = vshll.u32 %v389, 16
      %v761 = vrot.slane %v759, 5
      %v762 = vor.u32 %v758, %v761
      %v763 = vrot.slane %v762, 4
      %v765 = vshll.u32 %v390, 16
      %v767 = vrot.slane %v765, 5
      %v768 = vsel %vm394, %v763, %v767
      %v769 = vshrl.u32 %v390, 16
      %v771 = vrot.slane %v769, 4
      %v772 = vor.u32 %v771, %v767
      %v773 = vrot.slane %v772, 4
      %v775 = vshll.u32 %v391, 16
      %v777 = vrot.slane %v775, 5
      %v778 = vsel %vm394, %v773, %v777
      %v779 = vunpack.c.l.b16 %v408
      %v780 = vunpack.c.l.b16 %v418
      %v781 = vunpack.c.l.b16 %v432
      %v782 = vunpack.c.l.b16 %v442
      %v783 = vunpack.c.l.b16 %v456
      %v784 = vunpack.c.l.b16 %v466
      %v785 = vunpack.c.l.b16 %v480
      %v786 = vunpack.c.l.b16 %v490
      %v787 = vunpack.c.l.b16 %v504
      %v788 = vunpack.c.l.b16 %v514
      %v789 = vunpack.c.l.b16 %v528
      %v790 = vunpack.c.l.b16 %v538
      %v791 = vunpack.c.l.b16 %v552
      %v792 = vunpack.c.l.b16 %v562
      %v793 = vunpack.c.l.b16 %v576
      %v794 = vunpack.c.l.b16 %v586
      %v795 = vunpack.c.l.b16 %v600
      %v796 = vunpack.c.l.b16 %v610
      %v797 = vunpack.c.l.b16 %v624
      %v798 = vunpack.c.l.b16 %v634
      %v799 = vunpack.c.l.b16 %v648
      %v800 = vunpack.c.l.b16 %v658
      %v801 = vunpack.c.l.b16 %v672
      %v802 = vunpack.c.l.b16 %v682
      %v803 = vunpack.c.l.b16 %v696
      %v804 = vunpack.c.l.b16 %v706
      %v805 = vunpack.c.l.b16 %v720
      %v806 = vunpack.c.l.b16 %v730
      %v807 = vunpack.c.l.b16 %v744
      %v808 = vunpack.c.l.b16 %v754
      %v809 = vunpack.c.l.b16 %v768
      %v810 = vunpack.c.l.b16 %v778
      %v811 = vpack.c.b16 %v780, %v779
      %v812 = vpack.c.b16 %v782, %v781
      %v813 = vpack.c.b16 %v784, %v783
      %v814 = vpack.c.b16 %v786, %v785
      %v815 = vpack.c.b16 %v788, %v787
      %v816 = vpack.c.b16 %v790, %v789
      %v817 = vpack.c.b16 %v792, %v791
      %v818 = vpack.c.b16 %v794, %v793
      %v819 = vpack.c.b16 %v796, %v795
      %v820 = vpack.c.b16 %v798, %v797
      %v821 = vpack.c.b16 %v800, %v799
      %v822 = vpack.c.b16 %v802, %v801
      %v823 = vpack.c.b16 %v804, %v803
      %v824 = vpack.c.b16 %v806, %v805
      %v825 = vpack.c.b16 %v808, %v807
      %v826 = vpack.c.b16 %v810, %v809
      %827 = vrot.lane.b32.xlu0 %v811, 4
      %v828 = vpop.permute.xlu0 %827
      %829 = vrot.lane.b32.xlu0 %v812, 4
      %v830 = vpop.permute.xlu0 %829
      %831 = vrot.lane.b32.xlu0 %v813, 4
      %v832 = vpop.permute.xlu0 %831
      %833 = vrot.lane.b32.xlu0 %v814, 4
      %v834 = vpop.permute.xlu0 %833
      %835 = vrot.lane.b32.xlu0 %v815, 4
      %v836 = vpop.permute.xlu0 %835
      %837 = vrot.lane.b32.xlu0 %v816, 4
      %v838 = vpop.permute.xlu0 %837
      %839 = vrot.lane.b32.xlu0 %v817, 4
      %v840 = vpop.permute.xlu0 %839
      %841 = vrot.lane.b32.xlu0 %v818, 4
      %v842 = vpop.permute.xlu0 %841
      %843 = vrot.lane.b32.xlu0 %v819, 4
      %v844 = vpop.permute.xlu0 %843
      %845 = vrot.lane.b32.xlu0 %v820, 4
      %v846 = vpop.permute.xlu0 %845
      %847 = vrot.lane.b32.xlu0 %v821, 4
      %v848 = vpop.permute.xlu0 %847
      %849 = vrot.lane.b32.xlu0 %v822, 4
      %v850 = vpop.permute.xlu0 %849
      %851 = vrot.lane.b32.xlu0 %v823, 4
      %v852 = vpop.permute.xlu0 %851
      %853 = vrot.lane.b32.xlu0 %v824, 4
      %v854 = vpop.permute.xlu0 %853
      %855 = vrot.lane.b32.xlu0 %v825, 4
      %v856 = vpop.permute.xlu0 %855
      %857 = vrot.lane.b32.xlu0 %v826, 4
      %v858 = vpop.permute.xlu0 %857
      %vm875 = vcmask 64544
      %876 = vst.msk [vmem:[#allocation2] sm:$0xff] %vm875, %v828
      %877 = vst.msk [vmem:[#allocation2 + $0x8] sm:$0xff] %vm875, %v830
      %878 = vst.msk [vmem:[#allocation2 + $0x10] sm:$0xff] %vm875, %v832
      %879 = vst.msk [vmem:[#allocation2 + $0x18] sm:$0xff] %vm875, %v834
      %880 = vst.msk [vmem:[#allocation2 + $0x20] sm:$0xff] %vm875, %v836
      %881 = vst.msk [vmem:[#allocation2 + $0x28] sm:$0xff] %vm875, %v838
      %882 = vst.msk [vmem:[#allocation2 + $0x30] sm:$0xff] %vm875, %v840
      %883 = vst.msk [vmem:[#allocation2 + $0x38] sm:$0xff] %vm875, %v842
      %884 = vst.msk [vmem:[#allocation2 + $0x40] sm:$0xff] %vm875, %v844
      %885 = vst.msk [vmem:[#allocation2 + $0x48] sm:$0xff] %vm875, %v846
      %886 = vst.msk [vmem:[#allocation2 + $0x50] sm:$0xff] %vm875, %v848
      %887 = vst.msk [vmem:[#allocation2 + $0x58] sm:$0xff] %vm875, %v850
      %888 = vst.msk [vmem:[#allocation2 + $0x60] sm:$0xff] %vm875, %v852
      %889 = vst.msk [vmem:[#allocation2 + $0x68] sm:$0xff] %vm875, %v854
      %890 = vst.msk [vmem:[#allocation2 + $0x70] sm:$0xff] %vm875, %v856
      %891 = vst.msk [vmem:[#allocation2 + $0x78] sm:$0xff] %vm875, %v858
      %v892 = vld [vmem:[%s192] sm:$0xe]
      %v893 = vld [vmem:[%s192 + $0x4] sm:$0xf]
      %v894 = vld [vmem:[%s192 + $0x8] sm:$0x1]
      %v895 = vld [vmem:[%s192 + $0xc] sm:$0xe]
      %v896 = vld [vmem:[%s192 + $0x10] sm:$0xf]
      %v897 = vld [vmem:[%s192 + $0x14] sm:$0x1]
      %v898 = vld [vmem:[%s192 + $0x18] sm:$0xe]
      %v899 = vld [vmem:[%s192 + $0x1c] sm:$0xf]
      %v900 = vld [vmem:[%s192 + $0x20] sm:$0x1]
      %v901 = vld [vmem:[%s192 + $0x24] sm:$0xe]
      %v902 = vld [vmem:[%s192 + $0x28] sm:$0xf]
      %v903 = vld [vmem:[%s192 + $0x2c] sm:$0x1]
      %v904 = vld [vmem:[%s192 + $0x30] sm:$0xe]
      %v905 = vld [vmem:[%s192 + $0x34] sm:$0xf]
      %v906 = vld [vmem:[%s192 + $0x38] sm:$0x1]
      %v907 = vld [vmem:[%s192 + $0x3c] sm:$0xe]
      %v908 = vld [vmem:[%s192 + $0x40] sm:$0xf]
      %v909 = vld [vmem:[%s192 + $0x44] sm:$0x1]
      %v910 = vld [vmem:[%s192 + $0x48] sm:$0xe]
      %v911 = vld [vmem:[%s192 + $0x4c] sm:$0xf]
      %v912 = vld [vmem:[%s192 + $0x50] sm:$0x1]
      %v913 = vld [vmem:[%s192 + $0x54] sm:$0xe]
      %v914 = vld [vmem:[%s192 + $0x58] sm:$0xf]
      %v915 = vld [vmem:[%s192 + $0x5c] sm:$0x1]
      %v916 = vld [vmem:[%s192 + $0x60] sm:$0xe]
      %v917 = vld [vmem:[%s192 + $0x64] sm:$0xf]
      %v918 = vld [vmem:[%s192 + $0x68] sm:$0x1]
      %v919 = vld [vmem:[%s192 + $0x6c] sm:$0xe]
      %v920 = vld [vmem:[%s192 + $0x70] sm:$0xf]
      %v921 = vld [vmem:[%s192 + $0x74] sm:$0x1]
      %v922 = vld [vmem:[%s192 + $0x78] sm:$0xe]
      %v923 = vld [vmem:[%s192 + $0x7c] sm:$0xf]
      %v924 = vld [vmem:[%s192 + $0x80] sm:$0x1]
      %v925 = vld [vmem:[%s192 + $0x84] sm:$0xe]
      %v926 = vld [vmem:[%s192 + $0x88] sm:$0xf]
      %v927 = vld [vmem:[%s192 + $0x8c] sm:$0x1]
      %v928 = vld [vmem:[%s192 + $0x90] sm:$0xe]
      %v929 = vld [vmem:[%s192 + $0x94] sm:$0xf]
      %v930 = vld [vmem:[%s192 + $0x98] sm:$0x1]
      %v931 = vld [vmem:[%s192 + $0x9c] sm:$0xe]
      %v932 = vld [vmem:[%s192 + $0xa0] sm:$0xf]
      %v933 = vld [vmem:[%s192 + $0xa4] sm:$0x1]
      %v934 = vld [vmem:[%s192 + $0xa8] sm:$0xe]
      %v935 = vld [vmem:[%s192 + $0xac] sm:$0xf]
      %v936 = vld [vmem:[%s192 + $0xb0] sm:$0x1]
      %v937 = vld [vmem:[%s192 + $0xb4] sm:$0xe]
      %v938 = vld [vmem:[%s192 + $0xb8] sm:$0xf]
      %v939 = vld [vmem:[%s192 + $0xbc] sm:$0x1]
      %vm988 = vcmask 1042432
      %vm989 = vcmask 1046532
      %vm990 = vmor %vm988, %vm989
      %v991 = vrot.slane %v892, 5
      %v992 = vrot.slane %v991, 4
      %v993 = vrot.slane %v893, 5
      %v994 = vsel %vm990, %v992, %v993
      %v995 = vrot.slane %v993, 4
      %v996 = vrot.slane %v894, 5
      %v997 = vsel %vm990, %v995, %v996
      %v998 = vrot.slane %v895, 5
      %v999 = vrot.slane %v998, 4
      %v1000 = vrot.slane %v896, 5
      %v1001 = vsel %vm990, %v999, %v1000
      %v1002 = vrot.slane %v1000, 4
      %v1003 = vrot.slane %v897, 5
      %v1004 = vsel %vm990, %v1002, %v1003
      %v1005 = vrot.slane %v898, 5
      %v1006 = vrot.slane %v1005, 4
      %v1007 = vrot.slane %v899, 5
      %v1008 = vsel %vm990, %v1006, %v1007
      %v1009 = vrot.slane %v1007, 4
      %v1010 = vrot.slane %v900, 5
      %v1011 = vsel %vm990, %v1009, %v1010
      %v1012 = vrot.slane %v901, 5
      %v1013 = vrot.slane %v1012, 4
      %v1014 = vrot.slane %v902, 5
      %v1015 = vsel %vm990, %v1013, %v1014
      %v1016 = vrot.slane %v1014, 4
      %v1017 = vrot.slane %v903, 5
      %v1018 = vsel %vm990, %v1016, %v1017
      %v1019 = vrot.slane %v904, 5
      %v1020 = vrot.slane %v1019, 4
      %v1021 = vrot.slane %v905, 5
      %v1022 = vsel %vm990, %v1020, %v1021
      %v1023 = vrot.slane %v1021, 4
      %v1024 = vrot.slane %v906, 5
      %v1025 = vsel %vm990, %v1023, %v1024
      %v1026 = vrot.slane %v907, 5
      %v1027 = vrot.slane %v1026, 4
      %v1028 = vrot.slane %v908, 5
      %v1029 = vsel %vm990, %v1027, %v1028
      %v1030 = vrot.slane %v1028, 4
      %v1031 = vrot.slane %v909, 5
      %v1032 = vsel %vm990, %v1030, %v1031
      %v1033 = vrot.slane %v910, 5
      %v1034 = vrot.slane %v1033, 4
      %v1035 = vrot.slane %v911, 5
      %v1036 = vsel %vm990, %v1034, %v1035
      %v1037 = vrot.slane %v1035, 4
      %v1038 = vrot.slane %v912, 5
      %v1039 = vsel %vm990, %v1037, %v1038
      %v1040 = vrot.slane %v913, 5
      %v1041 = vrot.slane %v1040, 4
      %v1042 = vrot.slane %v914, 5
      %v1043 = vsel %vm990, %v1041, %v1042
      %v1044 = vrot.slane %v1042, 4
      %v1045 = vrot.slane %v915, 5
      %v1046 = vsel %vm990, %v1044, %v1045
      %v1047 = vrot.slane %v916, 5
      %v1048 = vrot.slane %v1047, 4
      %v1049 = vrot.slane %v917, 5
      %v1050 = vsel %vm990, %v1048, %v1049
      %v1051 = vrot.slane %v1049, 4
      %v1052 = vrot.slane %v918, 5
      %v1053 = vsel %vm990, %v1051, %v1052
      %v1054 = vrot.slane %v919, 5
      %v1055 = vrot.slane %v1054, 4
      %v1056 = vrot.slane %v920, 5
      %v1057 = vsel %vm990, %v1055, %v1056
      %v1058 = vrot.slane %v1056, 4
      %v1059 = vrot.slane %v921, 5
      %v1060 = vsel %vm990, %v1058, %v1059
      %v1061 = vrot.slane %v922, 5
      %v1062 = vrot.slane %v1061, 4
      %v1063 = vrot.slane %v923, 5
      %v1064 = vsel %vm990, %v1062, %v1063
      %v1065 = vrot.slane %v1063, 4
      %v1066 = vrot.slane %v924, 5
      %v1067 = vsel %vm990, %v1065, %v1066
      %v1068 = vrot.slane %v925, 5
      %v1069 = vrot.slane %v1068, 4
      %v1070 = vrot.slane %v926, 5
      %v1071 = vsel %vm990, %v1069, %v1070
      %v1072 = vrot.slane %v1070, 4
      %v1073 = vrot.slane %v927, 5
      %v1074 = vsel %vm990, %v1072, %v1073
      %v1075 = vrot.slane %v928, 5
      %v1076 = vrot.slane %v1075, 4
      %v1077 = vrot.slane %v929, 5
      %v1078 = vsel %vm990, %v1076, %v1077
      %v1079 = vrot.slane %v1077, 4
      %v1080 = vrot.slane %v930, 5
      %v1081 = vsel %vm990, %v1079, %v1080
      %v1082 = vrot.slane %v931, 5
      %v1083 = vrot.slane %v1082, 4
      %v1084 = vrot.slane %v932, 5
      %v1085 = vsel %vm990, %v1083, %v1084
      %v1086 = vrot.slane %v1084, 4
      %v1087 = vrot.slane %v933, 5
      %v1088 = vsel %vm990, %v1086, %v1087
      %v1089 = vrot.slane %v934, 5
      %v1090 = vrot.slane %v1089, 4
      %v1091 = vrot.slane %v935, 5
      %v1092 = vsel %vm990, %v1090, %v1091
      %v1093 = vrot.slane %v1091, 4
      %v1094 = vrot.slane %v936, 5
      %v1095 = vsel %vm990, %v1093, %v1094
      %v1096 = vrot.slane %v937, 5
      %v1097 = vrot.slane %v1096, 4
      %v1098 = vrot.slane %v938, 5
      %v1099 = vsel %vm990, %v1097, %v1098
      %v1100 = vrot.slane %v1098, 4
      %v1101 = vrot.slane %v939, 5
      %v1102 = vsel %vm990, %v1100, %v1101
      %v1103 = vunpack.c.l.b16 %v994
      %v1104 = vunpack.c.l.b16 %v997
      %v1105 = vunpack.c.l.b16 %v1001
      %v1106 = vunpack.c.l.b16 %v1004
      %v1107 = vunpack.c.l.b16 %v1008
      %v1108 = vunpack.c.l.b16 %v1011
      %v1109 = vunpack.c.l.b16 %v1015
      %v1110 = vunpack.c.l.b16 %v1018
      %v1111 = vunpack.c.l.b16 %v1022
      %v1112 = vunpack.c.l.b16 %v1025
      %v1113 = vunpack.c.l.b16 %v1029
      %v1114 = vunpack.c.l.b16 %v1032
      %v1115 = vunpack.c.l.b16 %v1036
      %v1116 = vunpack.c.l.b16 %v1039
      %v1117 = vunpack.c.l.b16 %v1043
      %v1118 = vunpack.c.l.b16 %v1046
      %v1119 = vunpack.c.l.b16 %v1050
      %v1120 = vunpack.c.l.b16 %v1053
      %v1121 = vunpack.c.l.b16 %v1057
      %v1122 = vunpack.c.l.b16 %v1060
      %v1123 = vunpack.c.l.b16 %v1064
      %v1124 = vunpack.c.l.b16 %v1067
      %v1125 = vunpack.c.l.b16 %v1071
      %v1126 = vunpack.c.l.b16 %v1074
      %v1127 = vunpack.c.l.b16 %v1078
      %v1128 = vunpack.c.l.b16 %v1081
      %v1129 = vunpack.c.l.b16 %v1085
      %v1130 = vunpack.c.l.b16 %v1088
      %v1131 = vunpack.c.l.b16 %v1092
      %v1132 = vunpack.c.l.b16 %v1095
      %v1133 = vunpack.c.l.b16 %v1099
      %v1134 = vunpack.c.l.b16 %v1102
      %v1135 = vpack.c.b16 %v1104, %v1103
      %v1136 = vpack.c.b16 %v1106, %v1105
      %v1137 = vpack.c.b16 %v1108, %v1107
      %v1138 = vpack.c.b16 %v1110, %v1109
      %v1139 = vpack.c.b16 %v1112, %v1111
      %v1140 = vpack.c.b16 %v1114, %v1113
      %v1141 = vpack.c.b16 %v1116, %v1115
      %v1142 = vpack.c.b16 %v1118, %v1117
      %v1143 = vpack.c.b16 %v1120, %v1119
      %v1144 = vpack.c.b16 %v1122, %v1121
      %v1145 = vpack.c.b16 %v1124, %v1123
      %v1146 = vpack.c.b16 %v1126, %v1125
      %v1147 = vpack.c.b16 %v1128, %v1127
      %v1148 = vpack.c.b16 %v1130, %v1129
      %v1149 = vpack.c.b16 %v1132, %v1131
      %v1150 = vpack.c.b16 %v1134, %v1133
      %1151 = vrot.lane.b32.xlu0 %v1135, 8
      %v1152 = vpop.permute.xlu0 %1151
      %1153 = vrot.lane.b32.xlu0 %v1136, 8
      %v1154 = vpop.permute.xlu0 %1153
      %1155 = vrot.lane.b32.xlu0 %v1137, 8
      %v1156 = vpop.permute.xlu0 %1155
      %1157 = vrot.lane.b32.xlu0 %v1138, 8
      %v1158 = vpop.permute.xlu0 %1157
      %1159 = vrot.lane.b32.xlu0 %v1139, 8
      %v1160 = vpop.permute.xlu0 %1159
      %1161 = vrot.lane.b32.xlu0 %v1140, 8
      %v1162 = vpop.permute.xlu0 %1161
      %1163 = vrot.lane.b32.xlu0 %v1141, 8
      %v1164 = vpop.permute.xlu0 %1163
      %1165 = vrot.lane.b32.xlu0 %v1142, 8
      %v1166 = vpop.permute.xlu0 %1165
      %1167 = vrot.lane.b32.xlu0 %v1143, 8
      %v1168 = vpop.permute.xlu0 %1167
      %1169 = vrot.lane.b32.xlu0 %v1144, 8
      %v1170 = vpop.permute.xlu0 %1169
      %1171 = vrot.lane.b32.xlu0 %v1145, 8
      %v1172 = vpop.permute.xlu0 %1171
      %1173 = vrot.lane.b32.xlu0 %v1146, 8
      %v1174 = vpop.permute.xlu0 %1173
      %1175 = vrot.lane.b32.xlu0 %v1147, 8
      %v1176 = vpop.permute.xlu0 %1175
      %1177 = vrot.lane.b32.xlu0 %v1148, 8
      %v1178 = vpop.permute.xlu0 %1177
      %1179 = vrot.lane.b32.xlu0 %v1149, 8
      %v1180 = vpop.permute.xlu0 %1179
      %1181 = vrot.lane.b32.xlu0 %v1150, 8
      %v1182 = vpop.permute.xlu0 %1181
      %vm1199 = vcmask 97344
      %1200 = vst.msk [vmem:[#allocation2] sm:$0xff] %vm1199, %v1152
      %1201 = vst.msk [vmem:[#allocation2 + $0x8] sm:$0xff] %vm1199, %v1154
      %1202 = vst.msk [vmem:[#allocation2 + $0x10] sm:$0xff] %vm1199, %v1156
      %1203 = vst.msk [vmem:[#allocation2 + $0x18] sm:$0xff] %vm1199, %v1158
      %1204 = vst.msk [vmem:[#allocation2 + $0x20] sm:$0xff] %vm1199, %v1160
      %1205 = vst.msk [vmem:[#allocation2 + $0x28] sm:$0xff] %vm1199, %v1162
      %1206 = vst.msk [vmem:[#allocation2 + $0x30] sm:$0xff] %vm1199, %v1164
      %1207 = vst.msk [vmem:[#allocation2 + $0x38] sm:$0xff] %vm1199, %v1166
      %1208 = vst.msk [vmem:[#allocation2 + $0x40] sm:$0xff] %vm1199, %v1168
      %1209 = vst.msk [vmem:[#allocation2 + $0x48] sm:$0xff] %vm1199, %v1170
      %1210 = vst.msk [vmem:[#allocation2 + $0x50] sm:$0xff] %vm1199, %v1172
      %1211 = vst.msk [vmem:[#allocation2 + $0x58] sm:$0xff] %vm1199, %v1174
      %1212 = vst.msk [vmem:[#allocation2 + $0x60] sm:$0xff] %vm1199, %v1176
      %1213 = vst.msk [vmem:[#allocation2 + $0x68] sm:$0xff] %vm1199, %v1178
      %1214 = vst.msk [vmem:[#allocation2 + $0x70] sm:$0xff] %vm1199, %v1180
      %1215 = vst.msk [vmem:[#allocation2 + $0x78] sm:$0xff] %vm1199, %v1182
      %s1216 = scalar_lea.vmem %s192, 12
      %v1217 = vld [vmem:[%s1216] sm:$0xf]
      %v1218 = vld [vmem:[%s1216 + $0x4] sm:$0xf]
      %v1219 = vld [vmem:[%s1216 + $0xc] sm:$0xf]
      %v1220 = vld [vmem:[%s1216 + $0x10] sm:$0xf]
      %v1221 = vld [vmem:[%s1216 + $0x18] sm:$0xf]
      %v1222 = vld [vmem:[%s1216 + $0x1c] sm:$0xf]
      %v1223 = vld [vmem:[%s1216 + $0x24] sm:$0xf]
      %v1224 = vld [vmem:[%s1216 + $0x28] sm:$0xf]
      %v1225 = vld [vmem:[%s1216 + $0x30] sm:$0xf]
      %v1226 = vld [vmem:[%s1216 + $0x34] sm:$0xf]
      %v1227 = vld [vmem:[%s1216 + $0x3c] sm:$0xf]
      %v1228 = vld [vmem:[%s1216 + $0x40] sm:$0xf]
      %v1229 = vld [vmem:[%s1216 + $0x48] sm:$0xf]
      %v1230 = vld [vmem:[%s1216 + $0x4c] sm:$0xf]
      %v1231 = vld [vmem:[%s1216 + $0x54] sm:$0xf]
      %v1232 = vld [vmem:[%s1216 + $0x58] sm:$0xf]
      %v1233 = vld [vmem:[%s1216 + $0x60] sm:$0xf]
      %v1234 = vld [vmem:[%s1216 + $0x64] sm:$0xf]
      %v1235 = vld [vmem:[%s1216 + $0x6c] sm:$0xf]
      %v1236 = vld [vmem:[%s1216 + $0x70] sm:$0xf]
      %v1237 = vld [vmem:[%s1216 + $0x78] sm:$0xf]
      %v1238 = vld [vmem:[%s1216 + $0x7c] sm:$0xf]
      %v1239 = vld [vmem:[%s1216 + $0x84] sm:$0xf]
      %v1240 = vld [vmem:[%s1216 + $0x88] sm:$0xf]
      %v1241 = vld [vmem:[%s1216 + $0x90] sm:$0xf]
      %v1242 = vld [vmem:[%s1216 + $0x94] sm:$0xf]
      %v1243 = vld [vmem:[%s1216 + $0x9c] sm:$0xf]
      %v1244 = vld [vmem:[%s1216 + $0xa0] sm:$0xf]
      %v1245 = vld [vmem:[%s1216 + $0xa8] sm:$0xf]
      %v1246 = vld [vmem:[%s1216 + $0xac] sm:$0xf]
      %v1247 = vld [vmem:[%s1216 + $0xb4] sm:$0xf]
      %v1248 = vld [vmem:[%s1216 + $0xb8] sm:$0xf]
      %v1281 = vunpack.c.l.b16 %v1217
      %v1282 = vunpack.c.l.b16 %v1218
      %v1283 = vunpack.c.l.b16 %v1219
      %v1284 = vunpack.c.l.b16 %v1220
      %v1285 = vunpack.c.l.b16 %v1221
      %v1286 = vunpack.c.l.b16 %v1222
      %v1287 = vunpack.c.l.b16 %v1223
      %v1288 = vunpack.c.l.b16 %v1224
      %v1289 = vunpack.c.l.b16 %v1225
      %v1290 = vunpack.c.l.b16 %v1226
      %v1291 = vunpack.c.l.b16 %v1227
      %v1292 = vunpack.c.l.b16 %v1228
      %v1293 = vunpack.c.l.b16 %v1229
      %v1294 = vunpack.c.l.b16 %v1230
      %v1295 = vunpack.c.l.b16 %v1231
      %v1296 = vunpack.c.l.b16 %v1232
      %v1297 = vunpack.c.l.b16 %v1233
      %v1298 = vunpack.c.l.b16 %v1234
      %v1299 = vunpack.c.l.b16 %v1235
      %v1300 = vunpack.c.l.b16 %v1236
      %v1301 = vunpack.c.l.b16 %v1237
      %v1302 = vunpack.c.l.b16 %v1238
      %v1303 = vunpack.c.l.b16 %v1239
      %v1304 = vunpack.c.l.b16 %v1240
      %v1305 = vunpack.c.l.b16 %v1241
      %v1306 = vunpack.c.l.b16 %v1242
      %v1307 = vunpack.c.l.b16 %v1243
      %v1308 = vunpack.c.l.b16 %v1244
      %v1309 = vunpack.c.l.b16 %v1245
      %v1310 = vunpack.c.l.b16 %v1246
      %v1311 = vunpack.c.l.b16 %v1247
      %v1312 = vunpack.c.l.b16 %v1248
      %v1313 = vpack.c.b16 %v1282, %v1281
      %v1314 = vpack.c.b16 %v1284, %v1283
      %v1315 = vpack.c.b16 %v1286, %v1285
      %v1316 = vpack.c.b16 %v1288, %v1287
      %v1317 = vpack.c.b16 %v1290, %v1289
      %v1318 = vpack.c.b16 %v1292, %v1291
      %v1319 = vpack.c.b16 %v1294, %v1293
      %v1320 = vpack.c.b16 %v1296, %v1295
      %v1321 = vpack.c.b16 %v1298, %v1297
      %v1322 = vpack.c.b16 %v1300, %v1299
      %v1323 = vpack.c.b16 %v1302, %v1301
      %v1324 = vpack.c.b16 %v1304, %v1303
      %v1325 = vpack.c.b16 %v1306, %v1305
      %v1326 = vpack.c.b16 %v1308, %v1307
      %v1327 = vpack.c.b16 %v1310, %v1309
      %v1328 = vpack.c.b16 %v1312, %v1311
      %1329 = vrot.lane.b32.xlu0 %v1313, 12
      %v1330 = vpop.permute.xlu0 %1329
      %1331 = vrot.lane.b32.xlu0 %v1314, 12
      %v1332 = vpop.permute.xlu0 %1331
      %1333 = vrot.lane.b32.xlu0 %v1315, 12
      %v1334 = vpop.permute.xlu0 %1333
      %1335 = vrot.lane.b32.xlu0 %v1316, 12
      %v1336 = vpop.permute.xlu0 %1335
      %1337 = vrot.lane.b32.xlu0 %v1317, 12
      %v1338 = vpop.permute.xlu0 %1337
      %1339 = vrot.lane.b32.xlu0 %v1318, 12
      %v1340 = vpop.permute.xlu0 %1339
      %1341 = vrot.lane.b32.xlu0 %v1319, 12
      %v1342 = vpop.permute.xlu0 %1341
      %1343 = vrot.lane.b32.xlu0 %v1320, 12
      %v1344 = vpop.permute.xlu0 %1343
      %1345 = vrot.lane.b32.xlu0 %v1321, 12
      %v1346 = vpop.permute.xlu0 %1345
      %1347 = vrot.lane.b32.xlu0 %v1322, 12
      %v1348 = vpop.permute.xlu0 %1347
      %1349 = vrot.lane.b32.xlu0 %v1323, 12
      %v1350 = vpop.permute.xlu0 %1349
      %1351 = vrot.lane.b32.xlu0 %v1324, 12
      %v1352 = vpop.permute.xlu0 %1351
      %1353 = vrot.lane.b32.xlu0 %v1325, 12
      %v1354 = vpop.permute.xlu0 %1353
      %1355 = vrot.lane.b32.xlu0 %v1326, 12
      %v1356 = vpop.permute.xlu0 %1355
      %1357 = vrot.lane.b32.xlu0 %v1327, 12
      %v1358 = vpop.permute.xlu0 %1357
      %1359 = vrot.lane.b32.xlu0 %v1328, 12
      %v1360 = vpop.permute.xlu0 %1359
      %vm1377 = vcmask 130144
      %1378 = vst.msk [vmem:[#allocation2] sm:$0xff] %vm1377, %v1330
      %1379 = vst.msk [vmem:[#allocation2 + $0x8] sm:$0xff] %vm1377, %v1332
      %1380 = vst.msk [vmem:[#allocation2 + $0x10] sm:$0xff] %vm1377, %v1334
      %1381 = vst.msk [vmem:[#allocation2 + $0x18] sm:$0xff] %vm1377, %v1336
      %1382 = vst.msk [vmem:[#allocation2 + $0x20] sm:$0xff] %vm1377, %v1338
      %1383 = vst.msk [vmem:[#allocation2 + $0x28] sm:$0xff] %vm1377, %v1340
      %1384 = vst.msk [vmem:[#allocation2 + $0x30] sm:$0xff] %vm1377, %v1342
      %1385 = vst.msk [vmem:[#allocation2 + $0x38] sm:$0xff] %vm1377, %v1344
      %1386 = vst.msk [vmem:[#allocation2 + $0x40] sm:$0xff] %vm1377, %v1346
      %1387 = vst.msk [vmem:[#allocation2 + $0x48] sm:$0xff] %vm1377, %v1348
      %1388 = vst.msk [vmem:[#allocation2 + $0x50] sm:$0xff] %vm1377, %v1350
      %1389 = vst.msk [vmem:[#allocation2 + $0x58] sm:$0xff] %vm1377, %v1352
      %1390 = vst.msk [vmem:[#allocation2 + $0x60] sm:$0xff] %vm1377, %v1354
      %1391 = vst.msk [vmem:[#allocation2 + $0x68] sm:$0xff] %vm1377, %v1356
      %1392 = vst.msk [vmem:[#allocation2 + $0x70] sm:$0xff] %vm1377, %v1358
      %1393 = vst.msk [vmem:[#allocation2 + $0x78] sm:$0xff] %vm1377, %v1360
      %v1394 = vld [vmem:[%s1216] sm:$0xf]
      %v1395 = vld [vmem:[%s1216 + $0x4] sm:$0xf]
      %v1396 = vld [vmem:[%s1216 + $0x8] sm:$0x1]
      %v1397 = vld [vmem:[%s1216 + $0xc] sm:$0xf]
      %v1398 = vld [vmem:[%s1216 + $0x10] sm:$0xf]
      %v1399 = vld [vmem:[%s1216 + $0x14] sm:$0x1]
      %v1400 = vld [vmem:[%s1216 + $0x18] sm:$0xf]
      %v1401 = vld [vmem:[%s1216 + $0x1c] sm:$0xf]
      %v1402 = vld [vmem:[%s1216 + $0x20] sm:$0x1]
      %v1403 = vld [vmem:[%s1216 + $0x24] sm:$0xf]
      %v1404 = vld [vmem:[%s1216 + $0x28] sm:$0xf]
      %v1405 = vld [vmem:[%s1216 + $0x2c] sm:$0x1]
      %v1406 = vld [vmem:[%s1216 + $0x30] sm:$0xf]
      %v1407 = vld [vmem:[%s1216 + $0x34] sm:$0xf]
      %v1408 = vld [vmem:[%s1216 + $0x38] sm:$0x1]
      %v1409 = vld [vmem:[%s1216 + $0x3c] sm:$0xf]
      %v1410 = vld [vmem:[%s1216 + $0x40] sm:$0xf]
      %v1411 = vld [vmem:[%s1216 + $0x44] sm:$0x1]
      %v1412 = vld [vmem:[%s1216 + $0x48] sm:$0xf]
      %v1413 = vld [vmem:[%s1216 + $0x4c] sm:$0xf]
      %v1414 = vld [vmem:[%s1216 + $0x50] sm:$0x1]
      %v1415 = vld [vmem:[%s1216 + $0x54] sm:$0xf]
      %v1416 = vld [vmem:[%s1216 + $0x58] sm:$0xf]
      %v1417 = vld [vmem:[%s1216 + $0x5c] sm:$0x1]
      %v1418 = vld [vmem:[%s1216 + $0x60] sm:$0xf]
      %v1419 = vld [vmem:[%s1216 + $0x64] sm:$0xf]
      %v1420 = vld [vmem:[%s1216 + $0x68] sm:$0x1]
      %v1421 = vld [vmem:[%s1216 + $0x6c] sm:$0xf]
      %v1422 = vld [vmem:[%s1216 + $0x70] sm:$0xf]
      %v1423 = vld [vmem:[%s1216 + $0x74] sm:$0x1]
      %v1424 = vld [vmem:[%s1216 + $0x78] sm:$0xf]
      %v1425 = vld [vmem:[%s1216 + $0x7c] sm:$0xf]
      %v1426 = vld [vmem:[%s1216 + $0x80] sm:$0x1]
      %v1427 = vld [vmem:[%s1216 + $0x84] sm:$0xf]
      %v1428 = vld [vmem:[%s1216 + $0x88] sm:$0xf]
      %v1429 = vld [vmem:[%s1216 + $0x8c] sm:$0x1]
      %v1430 = vld [vmem:[%s1216 + $0x90] sm:$0xf]
      %v1431 = vld [vmem:[%s1216 + $0x94] sm:$0xf]
      %v1432 = vld [vmem:[%s1216 + $0x98] sm:$0x1]
      %v1433 = vld [vmem:[%s1216 + $0x9c] sm:$0xf]
      %v1434 = vld [vmem:[%s1216 + $0xa0] sm:$0xf]
      %v1435 = vld [vmem:[%s1216 + $0xa4] sm:$0x1]
      %v1436 = vld [vmem:[%s1216 + $0xa8] sm:$0xf]
      %v1437 = vld [vmem:[%s1216 + $0xac] sm:$0xf]
      %v1438 = vld [vmem:[%s1216 + $0xb0] sm:$0x1]
      %v1439 = vld [vmem:[%s1216 + $0xb4] sm:$0xf]
      %v1440 = vld [vmem:[%s1216 + $0xb8] sm:$0xf]
      %v1441 = vld [vmem:[%s1216 + $0xbc] sm:$0x1]
      %v1443 = vshrl.u32 %v1394, 16
      %v1445 = vrot.slane %v1443, 4
      %v1446 = vshll.u32 %v1394, 16
      %v1448 = vrot.slane %v1446, 5
      %v1449 = vor.u32 %v1445, %v1448
      %v1450 = vrot.slane %v1449, 4
      %v1452 = vshll.u32 %v1395, 16
      %v1454 = vrot.slane %v1452, 5
      %v1455 = vsel %vm394, %v1450, %v1454
      %v1456 = vshrl.u32 %v1395, 16
      %v1458 = vrot.slane %v1456, 4
      %v1459 = vor.u32 %v1458, %v1454
      %v1460 = vrot.slane %v1459, 4
      %v1462 = vshll.u32 %v1396, 16
      %v1464 = vrot.slane %v1462, 5
      %v1465 = vsel %vm394, %v1460, %v1464
      %v1467 = vshrl.u32 %v1397, 16
      %v1469 = vrot.slane %v1467, 4
      %v1470 = vshll.u32 %v1397, 16
      %v1472 = vrot.slane %v1470, 5
      %v1473 = vor.u32 %v1469, %v1472
      %v1474 = vrot.slane %v1473, 4
      %v1476 = vshll.u32 %v1398, 16
      %v1478 = vrot.slane %v1476, 5
      %v1479 = vsel %vm394, %v1474, %v1478
      %v1480 = vshrl.u32 %v1398, 16
      %v1482 = vrot.slane %v1480, 4
      %v1483 = vor.u32 %v1482, %v1478
      %v1484 = vrot.slane %v1483, 4
      %v1486 = vshll.u32 %v1399, 16
      %v1488 = vrot.slane %v1486, 5
      %v1489 = vsel %vm394, %v1484, %v1488
      %v1491 = vshrl.u32 %v1400, 16
      %v1493 = vrot.slane %v1491, 4
      %v1494 = vshll.u32 %v1400, 16
      %v1496 = vrot.slane %v1494, 5
      %v1497 = vor.u32 %v1493, %v1496
      %v1498 = vrot.slane %v1497, 4
      %v1500 = vshll.u32 %v1401, 16
      %v1502 = vrot.slane %v1500, 5
      %v1503 = vsel %vm394, %v1498, %v1502
      %v1504 = vshrl.u32 %v1401, 16
      %v1506 = vrot.slane %v1504, 4
      %v1507 = vor.u32 %v1506, %v1502
      %v1508 = vrot.slane %v1507, 4
      %v1510 = vshll.u32 %v1402, 16
      %v1512 = vrot.slane %v1510, 5
      %v1513 = vsel %vm394, %v1508, %v1512
      %v1515 = vshrl.u32 %v1403, 16
      %v1517 = vrot.slane %v1515, 4
      %v1518 = vshll.u32 %v1403, 16
      %v1520 = vrot.slane %v1518, 5
      %v1521 = vor.u32 %v1517, %v1520
      %v1522 = vrot.slane %v1521, 4
      %v1524 = vshll.u32 %v1404, 16
      %v1526 = vrot.slane %v1524, 5
      %v1527 = vsel %vm394, %v1522, %v1526
      %v1528 = vshrl.u32 %v1404, 16
      %v1530 = vrot.slane %v1528, 4
      %v1531 = vor.u32 %v1530, %v1526
      %v1532 = vrot.slane %v1531, 4
      %v1534 = vshll.u32 %v1405, 16
      %v1536 = vrot.slane %v1534, 5
      %v1537 = vsel %vm394, %v1532, %v1536
      %v1539 = vshrl.u32 %v1406, 16
      %v1541 = vrot.slane %v1539, 4
      %v1542 = vshll.u32 %v1406, 16
      %v1544 = vrot.slane %v1542, 5
      %v1545 = vor.u32 %v1541, %v1544
      %v1546 = vrot.slane %v1545, 4
      %v1548 = vshll.u32 %v1407, 16
      %v1550 = vrot.slane %v1548, 5
      %v1551 = vsel %vm394, %v1546, %v1550
      %v1552 = vshrl.u32 %v1407, 16
      %v1554 = vrot.slane %v1552, 4
      %v1555 = vor.u32 %v1554, %v1550
      %v1556 = vrot.slane %v1555, 4
      %v1558 = vshll.u32 %v1408, 16
      %v1560 = vrot.slane %v1558, 5
      %v1561 = vsel %vm394, %v1556, %v1560
      %v1563 = vshrl.u32 %v1409, 16
      %v1565 = vrot.slane %v1563, 4
      %v1566 = vshll.u32 %v1409, 16
      %v1568 = vrot.slane %v1566, 5
      %v1569 = vor.u32 %v1565, %v1568
      %v1570 = vrot.slane %v1569, 4
      %v1572 = vshll.u32 %v1410, 16
      %v1574 = vrot.slane %v1572, 5
      %v1575 = vsel %vm394, %v1570, %v1574
      %v1576 = vshrl.u32 %v1410, 16
      %v1578 = vrot.slane %v1576, 4
      %v1579 = vor.u32 %v1578, %v1574
      %v1580 = vrot.slane %v1579, 4
      %v1582 = vshll.u32 %v1411, 16
      %v1584 = vrot.slane %v1582, 5
      %v1585 = vsel %vm394, %v1580, %v1584
      %v1587 = vshrl.u32 %v1412, 16
      %v1589 = vrot.slane %v1587, 4
      %v1590 = vshll.u32 %v1412, 16
      %v1592 = vrot.slane %v1590, 5
      %v1593 = vor.u32 %v1589, %v1592
      %v1594 = vrot.slane %v1593, 4
      %v1596 = vshll.u32 %v1413, 16
      %v1598 = vrot.slane %v1596, 5
      %v1599 = vsel %vm394, %v1594, %v1598
      %v1600 = vshrl.u32 %v1413, 16
      %v1602 = vrot.slane %v1600, 4
      %v1603 = vor.u32 %v1602, %v1598
      %v1604 = vrot.slane %v1603, 4
      %v1606 = vshll.u32 %v1414, 16
      %v1608 = vrot.slane %v1606, 5
      %v1609 = vsel %vm394, %v1604, %v1608
      %v1611 = vshrl.u32 %v1415, 16
      %v1613 = vrot.slane %v1611, 4
      %v1614 = vshll.u32 %v1415, 16
      %v1616 = vrot.slane %v1614, 5
      %v1617 = vor.u32 %v1613, %v1616
      %v1618 = vrot.slane %v1617, 4
      %v1620 = vshll.u32 %v1416, 16
      %v1622 = vrot.slane %v1620, 5
      %v1623 = vsel %vm394, %v1618, %v1622
      %v1624 = vshrl.u32 %v1416, 16
      %v1626 = vrot.slane %v1624, 4
      %v1627 = vor.u32 %v1626, %v1622
      %v1628 = vrot.slane %v1627, 4
      %v1630 = vshll.u32 %v1417, 16
      %v1632 = vrot.slane %v1630, 5
      %v1633 = vsel %vm394, %v1628, %v1632
      %v1635 = vshrl.u32 %v1418, 16
      %v1637 = vrot.slane %v1635, 4
      %v1638 = vshll.u32 %v1418, 16
      %v1640 = vrot.slane %v1638, 5
      %v1641 = vor.u32 %v1637, %v1640
      %v1642 = vrot.slane %v1641, 4
      %v1644 = vshll.u32 %v1419, 16
      %v1646 = vrot.slane %v1644, 5
      %v1647 = vsel %vm394, %v1642, %v1646
      %v1648 = vshrl.u32 %v1419, 16
      %v1650 = vrot.slane %v1648, 4
      %v1651 = vor.u32 %v1650, %v1646
      %v1652 = vrot.slane %v1651, 4
      %v1654 = vshll.u32 %v1420, 16
      %v1656 = vrot.slane %v1654, 5
      %v1657 = vsel %vm394, %v1652, %v1656
      %v1659 = vshrl.u32 %v1421, 16
      %v1661 = vrot.slane %v1659, 4
      %v1662 = vshll.u32 %v1421, 16
      %v1664 = vrot.slane %v1662, 5
      %v1665 = vor.u32 %v1661, %v1664
      %v1666 = vrot.slane %v1665, 4
      %v1668 = vshll.u32 %v1422, 16
      %v1670 = vrot.slane %v1668, 5
      %v1671 = vsel %vm394, %v1666, %v1670
      %v1672 = vshrl.u32 %v1422, 16
      %v1674 = vrot.slane %v1672, 4
      %v1675 = vor.u32 %v1674, %v1670
      %v1676 = vrot.slane %v1675, 4
      %v1678 = vshll.u32 %v1423, 16
      %v1680 = vrot.slane %v1678, 5
      %v1681 = vsel %vm394, %v1676, %v1680
      %v1683 = vshrl.u32 %v1424, 16
      %v1685 = vrot.slane %v1683, 4
      %v1686 = vshll.u32 %v1424, 16
      %v1688 = vrot.slane %v1686, 5
      %v1689 = vor.u32 %v1685, %v1688
      %v1690 = vrot.slane %v1689, 4
      %v1692 = vshll.u32 %v1425, 16
      %v1694 = vrot.slane %v1692, 5
      %v1695 = vsel %vm394, %v1690, %v1694
      %v1696 = vshrl.u32 %v1425, 16
      %v1698 = vrot.slane %v1696, 4
      %v1699 = vor.u32 %v1698, %v1694
      %v1700 = vrot.slane %v1699, 4
      %v1702 = vshll.u32 %v1426, 16
      %v1704 = vrot.slane %v1702, 5
      %v1705 = vsel %vm394, %v1700, %v1704
      %v1707 = vshrl.u32 %v1427, 16
      %v1709 = vrot.slane %v1707, 4
      %v1710 = vshll.u32 %v1427, 16
      %v1712 = vrot.slane %v1710, 5
      %v1713 = vor.u32 %v1709, %v1712
      %v1714 = vrot.slane %v1713, 4
      %v1716 = vshll.u32 %v1428, 16
      %v1718 = vrot.slane %v1716, 5
      %v1719 = vsel %vm394, %v1714, %v1718
      %v1720 = vshrl.u32 %v1428, 16
      %v1722 = vrot.slane %v1720, 4
      %v1723 = vor.u32 %v1722, %v1718
      %v1724 = vrot.slane %v1723, 4
      %v1726 = vshll.u32 %v1429, 16
      %v1728 = vrot.slane %v1726, 5
      %v1729 = vsel %vm394, %v1724, %v1728
      %v1731 = vshrl.u32 %v1430, 16
      %v1733 = vrot.slane %v1731, 4
      %v1734 = vshll.u32 %v1430, 16
      %v1736 = vrot.slane %v1734, 5
      %v1737 = vor.u32 %v1733, %v1736
      %v1738 = vrot.slane %v1737, 4
      %v1740 = vshll.u32 %v1431, 16
      %v1742 = vrot.slane %v1740, 5
      %v1743 = vsel %vm394, %v1738, %v1742
      %v1744 = vshrl.u32 %v1431, 16
      %v1746 = vrot.slane %v1744, 4
      %v1747 = vor.u32 %v1746, %v1742
      %v1748 = vrot.slane %v1747, 4
      %v1750 = vshll.u32 %v1432, 16
      %v1752 = vrot.slane %v1750, 5
      %v1753 = vsel %vm394, %v1748, %v1752
      %v1755 = vshrl.u32 %v1433, 16
      %v1757 = vrot.slane %v1755, 4
      %v1758 = vshll.u32 %v1433, 16
      %v1760 = vrot.slane %v1758, 5
      %v1761 = vor.u32 %v1757, %v1760
      %v1762 = vrot.slane %v1761, 4
      %v1764 = vshll.u32 %v1434, 16
      %v1766 = vrot.slane %v1764, 5
      %v1767 = vsel %vm394, %v1762, %v1766
      %v1768 = vshrl.u32 %v1434, 16
      %v1770 = vrot.slane %v1768, 4
      %v1771 = vor.u32 %v1770, %v1766
      %v1772 = vrot.slane %v1771, 4
      %v1774 = vshll.u32 %v1435, 16
      %v1776 = vrot.slane %v1774, 5
      %v1777 = vsel %vm394, %v1772, %v1776
      %v1779 = vshrl.u32 %v1436, 16
      %v1781 = vrot.slane %v1779, 4
      %v1782 = vshll.u32 %v1436, 16
      %v1784 = vrot.slane %v1782, 5
      %v1785 = vor.u32 %v1781, %v1784
      %v1786 = vrot.slane %v1785, 4
      %v1788 = vshll.u32 %v1437, 16
      %v1790 = vrot.slane %v1788, 5
      %v1791 = vsel %vm394, %v1786, %v1790
      %v1792 = vshrl.u32 %v1437, 16
      %v1794 = vrot.slane %v1792, 4
      %v1795 = vor.u32 %v1794, %v1790
      %v1796 = vrot.slane %v1795, 4
      %v1798 = vshll.u32 %v1438, 16
      %v1800 = vrot.slane %v1798, 5
      %v1801 = vsel %vm394, %v1796, %v1800
      %v1803 = vshrl.u32 %v1439, 16
      %v1805 = vrot.slane %v1803, 4
      %v1806 = vshll.u32 %v1439, 16
      %v1808 = vrot.slane %v1806, 5
      %v1809 = vor.u32 %v1805, %v1808
      %v1810 = vrot.slane %v1809, 4
      %v1812 = vshll.u32 %v1440, 16
      %v1814 = vrot.slane %v1812, 5
      %v1815 = vsel %vm394, %v1810, %v1814
      %v1816 = vshrl.u32 %v1440, 16
      %v1818 = vrot.slane %v1816, 4
      %v1819 = vor.u32 %v1818, %v1814
      %v1820 = vrot.slane %v1819, 4
      %v1822 = vshll.u32 %v1441, 16
      %v1824 = vrot.slane %v1822, 5
      %v1825 = vsel %vm394, %v1820, %v1824
      %v1826 = vunpack.c.l.b16 %v1455
      %v1827 = vunpack.c.l.b16 %v1465
      %v1828 = vunpack.c.l.b16 %v1479
      %v1829 = vunpack.c.l.b16 %v1489
      %v1830 = vunpack.c.l.b16 %v1503
      %v1831 = vunpack.c.l.b16 %v1513
      %v1832 = vunpack.c.l.b16 %v1527
      %v1833 = vunpack.c.l.b16 %v1537
      %v1834 = vunpack.c.l.b16 %v1551
      %v1835 = vunpack.c.l.b16 %v1561
      %v1836 = vunpack.c.l.b16 %v1575
      %v1837 = vunpack.c.l.b16 %v1585
      %v1838 = vunpack.c.l.b16 %v1599
      %v1839 = vunpack.c.l.b16 %v1609
      %v1840 = vunpack.c.l.b16 %v1623
      %v1841 = vunpack.c.l.b16 %v1633
      %v1842 = vunpack.c.l.b16 %v1647
      %v1843 = vunpack.c.l.b16 %v1657
      %v1844 = vunpack.c.l.b16 %v1671
      %v1845 = vunpack.c.l.b16 %v1681
      %v1846 = vunpack.c.l.b16 %v1695
      %v1847 = vunpack.c.l.b16 %v1705
      %v1848 = vunpack.c.l.b16 %v1719
      %v1849 = vunpack.c.l.b16 %v1729
      %v1850 = vunpack.c.l.b16 %v1743
      %v1851 = vunpack.c.l.b16 %v1753
      %v1852 = vunpack.c.l.b16 %v1767
      %v1853 = vunpack.c.l.b16 %v1777
      %v1854 = vunpack.c.l.b16 %v1791
      %v1855 = vunpack.c.l.b16 %v1801
      %v1856 = vunpack.c.l.b16 %v1815
      %v1857 = vunpack.c.l.b16 %v1825
      %v1858 = vpack.c.b16 %v1827, %v1826
      %v1859 = vpack.c.b16 %v1829, %v1828
      %v1860 = vpack.c.b16 %v1831, %v1830
      %v1861 = vpack.c.b16 %v1833, %v1832
      %v1862 = vpack.c.b16 %v1835, %v1834
      %v1863 = vpack.c.b16 %v1837, %v1836
      %v1864 = vpack.c.b16 %v1839, %v1838
      %v1865 = vpack.c.b16 %v1841, %v1840
      %v1866 = vpack.c.b16 %v1843, %v1842
      %v1867 = vpack.c.b16 %v1845, %v1844
      %v1868 = vpack.c.b16 %v1847, %v1846
      %v1869 = vpack.c.b16 %v1849, %v1848
      %v1870 = vpack.c.b16 %v1851, %v1850
      %v1871 = vpack.c.b16 %v1853, %v1852
      %v1872 = vpack.c.b16 %v1855, %v1854
      %v1873 = vpack.c.b16 %v1857, %v1856
      %1874 = vrot.lane.b32.xlu0 %v1858, 16
      %v1875 = vpop.permute.xlu0 %1874
      %1876 = vrot.lane.b32.xlu0 %v1859, 16
      %v1877 = vpop.permute.xlu0 %1876
      %1878 = vrot.lane.b32.xlu0 %v1860, 16
      %v1879 = vpop.permute.xlu0 %1878
      %1880 = vrot.lane.b32.xlu0 %v1861, 16
      %v1881 = vpop.permute.xlu0 %1880
      %1882 = vrot.lane.b32.xlu0 %v1862, 16
      %v1883 = vpop.permute.xlu0 %1882
      %1884 = vrot.lane.b32.xlu0 %v1863, 16
      %v1885 = vpop.permute.xlu0 %1884
      %1886 = vrot.lane.b32.xlu0 %v1864, 16
      %v1887 = vpop.permute.xlu0 %1886
      %1888 = vrot.lane.b32.xlu0 %v1865, 16
      %v1889 = vpop.permute.xlu0 %1888
      %1890 = vrot.lane.b32.xlu0 %v1866, 16
      %v1891 = vpop.permute.xlu0 %1890
      %1892 = vrot.lane.b32.xlu0 %v1867, 16
      %v1893 = vpop.permute.xlu0 %1892
      %1894 = vrot.lane.b32.xlu0 %v1868, 16
      %v1895 = vpop.permute.xlu0 %1894
      %1896 = vrot.lane.b32.xlu0 %v1869, 16
      %v1897 = vpop.permute.xlu0 %1896
      %1898 = vrot.lane.b32.xlu0 %v1870, 16
      %v1899 = vpop.permute.xlu0 %1898
      %1900 = vrot.lane.b32.xlu0 %v1871, 16
      %v1901 = vpop.permute.xlu0 %1900
      %1902 = vrot.lane.b32.xlu0 %v1872, 16
      %v1903 = vpop.permute.xlu0 %1902
      %1904 = vrot.lane.b32.xlu0 %v1873, 16
      %v1905 = vpop.permute.xlu0 %1904
      %vm1922 = vcmask 162944
      %1923 = vst.msk [vmem:[#allocation2] sm:$0xff] %vm1922, %v1875
      %1924 = vst.msk [vmem:[#allocation2 + $0x8] sm:$0xff] %vm1922, %v1877
      %1925 = vst.msk [vmem:[#allocation2 + $0x10] sm:$0xff] %vm1922, %v1879
      %1926 = vst.msk [vmem:[#allocation2 + $0x18] sm:$0xff] %vm1922, %v1881
      %1927 = vst.msk [vmem:[#allocation2 + $0x20] sm:$0xff] %vm1922, %v1883
      %1928 = vst.msk [vmem:[#allocation2 + $0x28] sm:$0xff] %vm1922, %v1885
      %1929 = vst.msk [vmem:[#allocation2 + $0x30] sm:$0xff] %vm1922, %v1887
      %1930 = vst.msk [vmem:[#allocation2 + $0x38] sm:$0xff] %vm1922, %v1889
      %1931 = vst.msk [vmem:[#allocation2 + $0x40] sm:$0xff] %vm1922, %v1891
      %1932 = vst.msk [vmem:[#allocation2 + $0x48] sm:$0xff] %vm1922, %v1893
      %1933 = vst.msk [vmem:[#allocation2 + $0x50] sm:$0xff] %vm1922, %v1895
      %1934 = vst.msk [vmem:[#allocation2 + $0x58] sm:$0xff] %vm1922, %v1897
      %1935 = vst.msk [vmem:[#allocation2 + $0x60] sm:$0xff] %vm1922, %v1899
      %1936 = vst.msk [vmem:[#allocation2 + $0x68] sm:$0xff] %vm1922, %v1901
      %1937 = vst.msk [vmem:[#allocation2 + $0x70] sm:$0xff] %vm1922, %v1903
      %1938 = vst.msk [vmem:[#allocation2 + $0x78] sm:$0xff] %vm1922, %v1905
      %v1939 = vld [vmem:[%s1216] sm:$0xe]
      %v1940 = vld [vmem:[%s1216 + $0x4] sm:$0xf]
      %v1941 = vld [vmem:[%s1216 + $0x8] sm:$0x1]
      %v1942 = vld [vmem:[%s1216 + $0xc] sm:$0xe]
      %v1943 = vld [vmem:[%s1216 + $0x10] sm:$0xf]
      %v1944 = vld [vmem:[%s1216 + $0x14] sm:$0x1]
      %v1945 = vld [vmem:[%s1216 + $0x18] sm:$0xe]
      %v1946 = vld [vmem:[%s1216 + $0x1c] sm:$0xf]
      %v1947 = vld [vmem:[%s1216 + $0x20] sm:$0x1]
      %v1948 = vld [vmem:[%s1216 + $0x24] sm:$0xe]
      %v1949 = vld [vmem:[%s1216 + $0x28] sm:$0xf]
      %v1950 = vld [vmem:[%s1216 + $0x2c] sm:$0x1]
      %v1951 = vld [vmem:[%s1216 + $0x30] sm:$0xe]
      %v1952 = vld [vmem:[%s1216 + $0x34] sm:$0xf]
      %v1953 = vld [vmem:[%s1216 + $0x38] sm:$0x1]
      %v1954 = vld [vmem:[%s1216 + $0x3c] sm:$0xe]
      %v1955 = vld [vmem:[%s1216 + $0x40] sm:$0xf]
      %v1956 = vld [vmem:[%s1216 + $0x44] sm:$0x1]
      %v1957 = vld [vmem:[%s1216 + $0x48] sm:$0xe]
      %v1958 = vld [vmem:[%s1216 + $0x4c] sm:$0xf]
      %v1959 = vld [vmem:[%s1216 + $0x50] sm:$0x1]
      %v1960 = vld [vmem:[%s1216 + $0x54] sm:$0xe]
      %v1961 = vld [vmem:[%s1216 + $0x58] sm:$0xf]
      %v1962 = vld [vmem:[%s1216 + $0x5c] sm:$0x1]
      %v1963 = vld [vmem:[%s1216 + $0x60] sm:$0xe]
      %v1964 = vld [vmem:[%s1216 + $0x64] sm:$0xf]
      %v1965 = vld [vmem:[%s1216 + $0x68] sm:$0x1]
      %v1966 = vld [vmem:[%s1216 + $0x6c] sm:$0xe]
      %v1967 = vld [vmem:[%s1216 + $0x70] sm:$0xf]
      %v1968 = vld [vmem:[%s1216 + $0x74] sm:$0x1]
      %v1969 = vld [vmem:[%s1216 + $0x78] sm:$0xe]
      %v1970 = vld [vmem:[%s1216 + $0x7c] sm:$0xf]
      %v1971 = vld [vmem:[%s1216 + $0x80] sm:$0x1]
      %v1972 = vld [vmem:[%s1216 + $0x84] sm:$0xe]
      %v1973 = vld [vmem:[%s1216 + $0x88] sm:$0xf]
      %v1974 = vld [vmem:[%s1216 + $0x8c] sm:$0x1]
      %v1975 = vld [vmem:[%s1216 + $0x90] sm:$0xe]
      %v1976 = vld [vmem:[%s1216 + $0x94] sm:$0xf]
      %v1977 = vld [vmem:[%s1216 + $0x98] sm:$0x1]
      %v1978 = vld [vmem:[%s1216 + $0x9c] sm:$0xe]
      %v1979 = vld [vmem:[%s1216 + $0xa0] sm:$0xf]
      %v1980 = vld [vmem:[%s1216 + $0xa4] sm:$0x1]
      %v1981 = vld [vmem:[%s1216 + $0xa8] sm:$0xe]
      %v1982 = vld [vmem:[%s1216 + $0xac] sm:$0xf]
      %v1983 = vld [vmem:[%s1216 + $0xb0] sm:$0x1]
      %v1984 = vld [vmem:[%s1216 + $0xb4] sm:$0xe]
      %v1985 = vld [vmem:[%s1216 + $0xb8] sm:$0xf]
      %v1986 = vld [vmem:[%s1216 + $0xbc] sm:$0x1]
      %v2035 = vrot.slane %v1939, 5
      %v2036 = vrot.slane %v2035, 4
      %v2037 = vrot.slane %v1940, 5
      %v2038 = vsel %vm990, %v2036, %v2037
      %v2039 = vrot.slane %v2037, 4
      %v2040 = vrot.slane %v1941, 5
      %v2041 = vsel %vm990, %v2039, %v2040
      %v2042 = vrot.slane %v1942, 5
      %v2043 = vrot.slane %v2042, 4
      %v2044 = vrot.slane %v1943, 5
      %v2045 = vsel %vm990, %v2043, %v2044
      %v2046 = vrot.slane %v2044, 4
      %v2047 = vrot.slane %v1944, 5
      %v2048 = vsel %vm990, %v2046, %v2047
      %v2049 = vrot.slane %v1945, 5
      %v2050 = vrot.slane %v2049, 4
      %v2051 = vrot.slane %v1946, 5
      %v2052 = vsel %vm990, %v2050, %v2051
      %v2053 = vrot.slane %v2051, 4
      %v2054 = vrot.slane %v1947, 5
      %v2055 = vsel %vm990, %v2053, %v2054
      %v2056 = vrot.slane %v1948, 5
      %v2057 = vrot.slane %v2056, 4
      %v2058 = vrot.slane %v1949, 5
      %v2059 = vsel %vm990, %v2057, %v2058
      %v2060 = vrot.slane %v2058, 4
      %v2061 = vrot.slane %v1950, 5
      %v2062 = vsel %vm990, %v2060, %v2061
      %v2063 = vrot.slane %v1951, 5
      %v2064 = vrot.slane %v2063, 4
      %v2065 = vrot.slane %v1952, 5
      %v2066 = vsel %vm990, %v2064, %v2065
      %v2067 = vrot.slane %v2065, 4
      %v2068 = vrot.slane %v1953, 5
      %v2069 = vsel %vm990, %v2067, %v2068
      %v2070 = vrot.slane %v1954, 5
      %v2071 = vrot.slane %v2070, 4
      %v2072 = vrot.slane %v1955, 5
      %v2073 = vsel %vm990, %v2071, %v2072
      %v2074 = vrot.slane %v2072, 4
      %v2075 = vrot.slane %v1956, 5
      %v2076 = vsel %vm990, %v2074, %v2075
      %v2077 = vrot.slane %v1957, 5
      %v2078 = vrot.slane %v2077, 4
      %v2079 = vrot.slane %v1958, 5
      %v2080 = vsel %vm990, %v2078, %v2079
      %v2081 = vrot.slane %v2079, 4
      %v2082 = vrot.slane %v1959, 5
      %v2083 = vsel %vm990, %v2081, %v2082
      %v2084 = vrot.slane %v1960, 5
      %v2085 = vrot.slane %v2084, 4
      %v2086 = vrot.slane %v1961, 5
      %v2087 = vsel %vm990, %v2085, %v2086
      %v2088 = vrot.slane %v2086, 4
      %v2089 = vrot.slane %v1962, 5
      %v2090 = vsel %vm990, %v2088, %v2089
      %v2091 = vrot.slane %v1963, 5
      %v2092 = vrot.slane %v2091, 4
      %v2093 = vrot.slane %v1964, 5
      %v2094 = vsel %vm990, %v2092, %v2093
      %v2095 = vrot.slane %v2093, 4
      %v2096 = vrot.slane %v1965, 5
      %v2097 = vsel %vm990, %v2095, %v2096
      %v2098 = vrot.slane %v1966, 5
      %v2099 = vrot.slane %v2098, 4
      %v2100 = vrot.slane %v1967, 5
      %v2101 = vsel %vm990, %v2099, %v2100
      %v2102 = vrot.slane %v2100, 4
      %v2103 = vrot.slane %v1968, 5
      %v2104 = vsel %vm990, %v2102, %v2103
      %v2105 = vrot.slane %v1969, 5
      %v2106 = vrot.slane %v2105, 4
      %v2107 = vrot.slane %v1970, 5
      %v2108 = vsel %vm990, %v2106, %v2107
      %v2109 = vrot.slane %v2107, 4
      %v2110 = vrot.slane %v1971, 5
      %v2111 = vsel %vm990, %v2109, %v2110
      %v2112 = vrot.slane %v1972, 5
      %v2113 = vrot.slane %v2112, 4
      %v2114 = vrot.slane %v1973, 5
      %v2115 = vsel %vm990, %v2113, %v2114
      %v2116 = vrot.slane %v2114, 4
      %v2117 = vrot.slane %v1974, 5
      %v2118 = vsel %vm990, %v2116, %v2117
      %v2119 = vrot.slane %v1975, 5
      %v2120 = vrot.slane %v2119, 4
      %v2121 = vrot.slane %v1976, 5
      %v2122 = vsel %vm990, %v2120, %v2121
      %v2123 = vrot.slane %v2121, 4
      %v2124 = vrot.slane %v1977, 5
      %v2125 = vsel %vm990, %v2123, %v2124
      %v2126 = vrot.slane %v1978, 5
      %v2127 = vrot.slane %v2126, 4
      %v2128 = vrot.slane %v1979, 5
      %v2129 = vsel %vm990, %v2127, %v2128
      %v2130 = vrot.slane %v2128, 4
      %v2131 = vrot.slane %v1980, 5
      %v2132 = vsel %vm990, %v2130, %v2131
      %v2133 = vrot.slane %v1981, 5
      %v2134 = vrot.slane %v2133, 4
      %v2135 = vrot.slane %v1982, 5
      %v2136 = vsel %vm990, %v2134, %v2135
      %v2137 = vrot.slane %v2135, 4
      %v2138 = vrot.slane %v1983, 5
      %v2139 = vsel %vm990, %v2137, %v2138
      %v2140 = vrot.slane %v1984, 5
      %v2141 = vrot.slane %v2140, 4
      %v2142 = vrot.slane %v1985, 5
      %v2143 = vsel %vm990, %v2141, %v2142
      %v2144 = vrot.slane %v2142, 4
      %v2145 = vrot.slane %v1986, 5
      %v2146 = vsel %vm990, %v2144, %v2145
      %v2147 = vunpack.c.l.b16 %v2038
      %v2148 = vunpack.c.l.b16 %v2041
      %v2149 = vunpack.c.l.b16 %v2045
      %v2150 = vunpack.c.l.b16 %v2048
      %v2151 = vunpack.c.l.b16 %v2052
      %v2152 = vunpack.c.l.b16 %v2055
      %v2153 = vunpack.c.l.b16 %v2059
      %v2154 = vunpack.c.l.b16 %v2062
      %v2155 = vunpack.c.l.b16 %v2066
      %v2156 = vunpack.c.l.b16 %v2069
      %v2157 = vunpack.c.l.b16 %v2073
      %v2158 = vunpack.c.l.b16 %v2076
      %v2159 = vunpack.c.l.b16 %v2080
      %v2160 = vunpack.c.l.b16 %v2083
      %v2161 = vunpack.c.l.b16 %v2087
      %v2162 = vunpack.c.l.b16 %v2090
      %v2163 = vunpack.c.l.b16 %v2094
      %v2164 = vunpack.c.l.b16 %v2097
      %v2165 = vunpack.c.l.b16 %v2101
      %v2166 = vunpack.c.l.b16 %v2104
      %v2167 = vunpack.c.l.b16 %v2108
      %v2168 = vunpack.c.l.b16 %v2111
      %v2169 = vunpack.c.l.b16 %v2115
      %v2170 = vunpack.c.l.b16 %v2118
      %v2171 = vunpack.c.l.b16 %v2122
      %v2172 = vunpack.c.l.b16 %v2125
      %v2173 = vunpack.c.l.b16 %v2129
      %v2174 = vunpack.c.l.b16 %v2132
      %v2175 = vunpack.c.l.b16 %v2136
      %v2176 = vunpack.c.l.b16 %v2139
      %v2177 = vunpack.c.l.b16 %v2143
      %v2178 = vunpack.c.l.b16 %v2146
      %v2179 = vpack.c.b16 %v2148, %v2147
      %v2180 = vpack.c.b16 %v2150, %v2149
      %v2181 = vpack.c.b16 %v2152, %v2151
      %v2182 = vpack.c.b16 %v2154, %v2153
      %v2183 = vpack.c.b16 %v2156, %v2155
      %v2184 = vpack.c.b16 %v2158, %v2157
      %v2185 = vpack.c.b16 %v2160, %v2159
      %v2186 = vpack.c.b16 %v2162, %v2161
      %v2187 = vpack.c.b16 %v2164, %v2163
      %v2188 = vpack.c.b16 %v2166, %v2165
      %v2189 = vpack.c.b16 %v2168, %v2167
      %v2190 = vpack.c.b16 %v2170, %v2169
      %v2191 = vpack.c.b16 %v2172, %v2171
      %v2192 = vpack.c.b16 %v2174, %v2173
      %v2193 = vpack.c.b16 %v2176, %v2175
      %v2194 = vpack.c.b16 %v2178, %v2177
      %2195 = vrot.lane.b32.xlu0 %v2179, 20
      %v2196 = vpop.permute.xlu0 %2195
      %2197 = vrot.lane.b32.xlu0 %v2180, 20
      %v2198 = vpop.permute.xlu0 %2197
      %2199 = vrot.lane.b32.xlu0 %v2181, 20
      %v2200 = vpop.permute.xlu0 %2199
      %2201 = vrot.lane.b32.xlu0 %v2182, 20
      %v2202 = vpop.permute.xlu0 %2201
      %2203 = vrot.lane.b32.xlu0 %v2183, 20
      %v2204 = vpop.permute.xlu0 %2203
      %2205 = vrot.lane.b32.xlu0 %v2184, 20
      %v2206 = vpop.permute.xlu0 %2205
      %2207 = vrot.lane.b32.xlu0 %v2185, 20
      %v2208 = vpop.permute.xlu0 %2207
      %2209 = vrot.lane.b32.xlu0 %v2186, 20
      %v2210 = vpop.permute.xlu0 %2209
      %2211 = vrot.lane.b32.xlu0 %v2187, 20
      %v2212 = vpop.permute.xlu0 %2211
      %2213 = vrot.lane.b32.xlu0 %v2188, 20
      %v2214 = vpop.permute.xlu0 %2213
      %2215 = vrot.lane.b32.xlu0 %v2189, 20
      %v2216 = vpop.permute.xlu0 %2215
      %2217 = vrot.lane.b32.xlu0 %v2190, 20
      %v2218 = vpop.permute.xlu0 %2217
      %2219 = vrot.lane.b32.xlu0 %v2191, 20
      %v2220 = vpop.permute.xlu0 %2219
      %2221 = vrot.lane.b32.xlu0 %v2192, 20
      %v2222 = vpop.permute.xlu0 %2221
      %2223 = vrot.lane.b32.xlu0 %v2193, 20
      %v2224 = vpop.permute.xlu0 %2223
      %2225 = vrot.lane.b32.xlu0 %v2194, 20
      %v2226 = vpop.permute.xlu0 %2225
      %vm2243 = vcmask 195744
      %2244 = vst.msk [vmem:[#allocation2] sm:$0xff] %vm2243, %v2196
      %2245 = vst.msk [vmem:[#allocation2 + $0x8] sm:$0xff] %vm2243, %v2198
      %2246 = vst.msk [vmem:[#allocation2 + $0x10] sm:$0xff] %vm2243, %v2200
      %2247 = vst.msk [vmem:[#allocation2 + $0x18] sm:$0xff] %vm2243, %v2202
      %2248 = vst.msk [vmem:[#allocation2 + $0x20] sm:$0xff] %vm2243, %v2204
      %2249 = vst.msk [vmem:[#allocation2 + $0x28] sm:$0xff] %vm2243, %v2206
      %2250 = vst.msk [vmem:[#allocation2 + $0x30] sm:$0xff] %vm2243, %v2208
      %2251 = vst.msk [vmem:[#allocation2 + $0x38] sm:$0xff] %vm2243, %v2210
      %2252 = vst.msk [vmem:[#allocation2 + $0x40] sm:$0xff] %vm2243, %v2212
      %2253 = vst.msk [vmem:[#allocation2 + $0x48] sm:$0xff] %vm2243, %v2214
      %2254 = vst.msk [vmem:[#allocation2 + $0x50] sm:$0xff] %vm2243, %v2216
      %2255 = vst.msk [vmem:[#allocation2 + $0x58] sm:$0xff] %vm2243, %v2218
      %2256 = vst.msk [vmem:[#allocation2 + $0x60] sm:$0xff] %vm2243, %v2220
      %2257 = vst.msk [vmem:[#allocation2 + $0x68] sm:$0xff] %vm2243, %v2222
      %2258 = vst.msk [vmem:[#allocation2 + $0x70] sm:$0xff] %vm2243, %v2224
      %2259 = vst.msk [vmem:[#allocation2 + $0x78] sm:$0xff] %vm2243, %v2226
      %s2260 = scalar_lea.vmem %s192, 24
      %v2261 = vld [vmem:[%s2260] sm:$0xf]
      %v2262 = vld [vmem:[%s2260 + $0x4] sm:$0xf]
      %v2263 = vld [vmem:[%s2260 + $0xc] sm:$0xf]
      %v2264 = vld [vmem:[%s2260 + $0x10] sm:$0xf]
      %v2265 = vld [vmem:[%s2260 + $0x18] sm:$0xf]
      %v2266 = vld [vmem:[%s2260 + $0x1c] sm:$0xf]
      %v2267 = vld [vmem:[%s2260 + $0x24] sm:$0xf]
      %v2268 = vld [vmem:[%s2260 + $0x28] sm:$0xf]
      %v2269 = vld [vmem:[%s2260 + $0x30] sm:$0xf]
      %v2270 = vld [vmem:[%s2260 + $0x34] sm:$0xf]
      %v2271 = vld [vmem:[%s2260 + $0x3c] sm:$0xf]
      %v2272 = vld [vmem:[%s2260 + $0x40] sm:$0xf]
      %v2273 = vld [vmem:[%s2260 + $0x48] sm:$0xf]
      %v2274 = vld [vmem:[%s2260 + $0x4c] sm:$0xf]
      %v2275 = vld [vmem:[%s2260 + $0x54] sm:$0xf]
      %v2276 = vld [vmem:[%s2260 + $0x58] sm:$0xf]
      %v2277 = vld [vmem:[%s2260 + $0x60] sm:$0xf]
      %v2278 = vld [vmem:[%s2260 + $0x64] sm:$0xf]
      %v2279 = vld [vmem:[%s2260 + $0x6c] sm:$0xf]
      %v2280 = vld [vmem:[%s2260 + $0x70] sm:$0xf]
      %v2281 = vld [vmem:[%s2260 + $0x78] sm:$0xf]
      %v2282 = vld [vmem:[%s2260 + $0x7c] sm:$0xf]
      %v2283 = vld [vmem:[%s2260 + $0x84] sm:$0xf]
      %v2284 = vld [vmem:[%s2260 + $0x88] sm:$0xf]
      %v2285 = vld [vmem:[%s2260 + $0x90] sm:$0xf]
      %v2286 = vld [vmem:[%s2260 + $0x94] sm:$0xf]
      %v2287 = vld [vmem:[%s2260 + $0x9c] sm:$0xf]
      %v2288 = vld [vmem:[%s2260 + $0xa0] sm:$0xf]
      %v2289 = vld [vmem:[%s2260 + $0xa8] sm:$0xf]
      %v2290 = vld [vmem:[%s2260 + $0xac] sm:$0xf]
      %v2291 = vld [vmem:[%s2260 + $0xb4] sm:$0xf]
      %v2292 = vld [vmem:[%s2260 + $0xb8] sm:$0xf]
      %v2325 = vunpack.c.l.b16 %v2261
      %v2326 = vunpack.c.l.b16 %v2262
      %v2327 = vunpack.c.l.b16 %v2263
      %v2328 = vunpack.c.l.b16 %v2264
      %v2329 = vunpack.c.l.b16 %v2265
      %v2330 = vunpack.c.l.b16 %v2266
      %v2331 = vunpack.c.l.b16 %v2267
      %v2332 = vunpack.c.l.b16 %v2268
      %v2333 = vunpack.c.l.b16 %v2269
      %v2334 = vunpack.c.l.b16 %v2270
      %v2335 = vunpack.c.l.b16 %v2271
      %v2336 = vunpack.c.l.b16 %v2272
      %v2337 = vunpack.c.l.b16 %v2273
      %v2338 = vunpack.c.l.b16 %v2274
      %v2339 = vunpack.c.l.b16 %v2275
      %v2340 = vunpack.c.l.b16 %v2276
      %v2341 = vunpack.c.l.b16 %v2277
      %v2342 = vunpack.c.l.b16 %v2278
      %v2343 = vunpack.c.l.b16 %v2279
      %v2344 = vunpack.c.l.b16 %v2280
      %v2345 = vunpack.c.l.b16 %v2281
      %v2346 = vunpack.c.l.b16 %v2282
      %v2347 = vunpack.c.l.b16 %v2283
      %v2348 = vunpack.c.l.b16 %v2284
      %v2349 = vunpack.c.l.b16 %v2285
      %v2350 = vunpack.c.l.b16 %v2286
      %v2351 = vunpack.c.l.b16 %v2287
      %v2352 = vunpack.c.l.b16 %v2288
      %v2353 = vunpack.c.l.b16 %v2289
      %v2354 = vunpack.c.l.b16 %v2290
      %v2355 = vunpack.c.l.b16 %v2291
      %v2356 = vunpack.c.l.b16 %v2292
      %v2357 = vpack.c.b16 %v2326, %v2325
      %v2358 = vpack.c.b16 %v2328, %v2327
      %v2359 = vpack.c.b16 %v2330, %v2329
      %v2360 = vpack.c.b16 %v2332, %v2331
      %v2361 = vpack.c.b16 %v2334, %v2333
      %v2362 = vpack.c.b16 %v2336, %v2335
      %v2363 = vpack.c.b16 %v2338, %v2337
      %v2364 = vpack.c.b16 %v2340, %v2339
      %v2365 = vpack.c.b16 %v2342, %v2341
      %v2366 = vpack.c.b16 %v2344, %v2343
      %v2367 = vpack.c.b16 %v2346, %v2345
      %v2368 = vpack.c.b16 %v2348, %v2347
      %v2369 = vpack.c.b16 %v2350, %v2349
      %v2370 = vpack.c.b16 %v2352, %v2351
      %v2371 = vpack.c.b16 %v2354, %v2353
      %v2372 = vpack.c.b16 %v2356, %v2355
      %2373 = vrot.lane.b32.xlu0 %v2357, 24
      %v2374 = vpop.permute.xlu0 %2373
      %2375 = vrot.lane.b32.xlu0 %v2358, 24
      %v2376 = vpop.permute.xlu0 %2375
      %2377 = vrot.lane.b32.xlu0 %v2359, 24
      %v2378 = vpop.permute.xlu0 %2377
      %2379 = vrot.lane.b32.xlu0 %v2360, 24
      %v2380 = vpop.permute.xlu0 %2379
      %2381 = vrot.lane.b32.xlu0 %v2361, 24
      %v2382 = vpop.permute.xlu0 %2381
      %2383 = vrot.lane.b32.xlu0 %v2362, 24
      %v2384 = vpop.permute.xlu0 %2383
      %2385 = vrot.lane.b32.xlu0 %v2363, 24
      %v2386 = vpop.permute.xlu0 %2385
      %2387 = vrot.lane.b32.xlu0 %v2364, 24
      %v2388 = vpop.permute.xlu0 %2387
      %2389 = vrot.lane.b32.xlu0 %v2365, 24
      %v2390 = vpop.permute.xlu0 %2389
      %2391 = vrot.lane.b32.xlu0 %v2366, 24
      %v2392 = vpop.permute.xlu0 %2391
      %2393 = vrot.lane.b32.xlu0 %v2367, 24
      %v2394 = vpop.permute.xlu0 %2393
      %2395 = vrot.lane.b32.xlu0 %v2368, 24
      %v2396 = vpop.permute.xlu0 %2395
      %2397 = vrot.lane.b32.xlu0 %v2369, 24
      %v2398 = vpop.permute.xlu0 %2397
      %2399 = vrot.lane.b32.xlu0 %v2370, 24
      %v2400 = vpop.permute.xlu0 %2399
      %2401 = vrot.lane.b32.xlu0 %v2371, 24
      %v2402 = vpop.permute.xlu0 %2401
      %2403 = vrot.lane.b32.xlu0 %v2372, 24
      %v2404 = vpop.permute.xlu0 %2403
      %vm2421 = vcmask 228544
      %2422 = vst.msk [vmem:[#allocation2] sm:$0xff] %vm2421, %v2374
      %2423 = vst.msk [vmem:[#allocation2 + $0x8] sm:$0xff] %vm2421, %v2376
      %2424 = vst.msk [vmem:[#allocation2 + $0x10] sm:$0xff] %vm2421, %v2378
      %2425 = vst.msk [vmem:[#allocation2 + $0x18] sm:$0xff] %vm2421, %v2380
      %2426 = vst.msk [vmem:[#allocation2 + $0x20] sm:$0xff] %vm2421, %v2382
      %2427 = vst.msk [vmem:[#allocation2 + $0x28] sm:$0xff] %vm2421, %v2384
      %2428 = vst.msk [vmem:[#allocation2 + $0x30] sm:$0xff] %vm2421, %v2386
      %2429 = vst.msk [vmem:[#allocation2 + $0x38] sm:$0xff] %vm2421, %v2388
      %2430 = vst.msk [vmem:[#allocation2 + $0x40] sm:$0xff] %vm2421, %v2390
      %2431 = vst.msk [vmem:[#allocation2 + $0x48] sm:$0xff] %vm2421, %v2392
      %2432 = vst.msk [vmem:[#allocation2 + $0x50] sm:$0xff] %vm2421, %v2394
      %2433 = vst.msk [vmem:[#allocation2 + $0x58] sm:$0xff] %vm2421, %v2396
      %2434 = vst.msk [vmem:[#allocation2 + $0x60] sm:$0xff] %vm2421, %v2398
      %2435 = vst.msk [vmem:[#allocation2 + $0x68] sm:$0xff] %vm2421, %v2400
      %2436 = vst.msk [vmem:[#allocation2 + $0x70] sm:$0xff] %vm2421, %v2402
      %2437 = vst.msk [vmem:[#allocation2 + $0x78] sm:$0xff] %vm2421, %v2404
      %v2438 = vld [vmem:[%s2260] sm:$0xf]
      %v2439 = vld [vmem:[%s2260 + $0x4] sm:$0xf]
      %v2440 = vld [vmem:[%s2260 + $0x8] sm:$0x1]
      %v2441 = vld [vmem:[%s2260 + $0xc] sm:$0xf]
      %v2442 = vld [vmem:[%s2260 + $0x10] sm:$0xf]
      %v2443 = vld [vmem:[%s2260 + $0x14] sm:$0x1]
      %v2444 = vld [vmem:[%s2260 + $0x18] sm:$0xf]
      %v2445 = vld [vmem:[%s2260 + $0x1c] sm:$0xf]
      %v2446 = vld [vmem:[%s2260 + $0x20] sm:$0x1]
      %v2447 = vld [vmem:[%s2260 + $0x24] sm:$0xf]
      %v2448 = vld [vmem:[%s2260 + $0x28] sm:$0xf]
      %v2449 = vld [vmem:[%s2260 + $0x2c] sm:$0x1]
      %v2450 = vld [vmem:[%s2260 + $0x30] sm:$0xf]
      %v2451 = vld [vmem:[%s2260 + $0x34] sm:$0xf]
      %v2452 = vld [vmem:[%s2260 + $0x38] sm:$0x1]
      %v2453 = vld [vmem:[%s2260 + $0x3c] sm:$0xf]
      %v2454 = vld [vmem:[%s2260 + $0x40] sm:$0xf]
      %v2455 = vld [vmem:[%s2260 + $0x44] sm:$0x1]
      %v2456 = vld [vmem:[%s2260 + $0x48] sm:$0xf]
      %v2457 = vld [vmem:[%s2260 + $0x4c] sm:$0xf]
      %v2458 = vld [vmem:[%s2260 + $0x50] sm:$0x1]
      %v2459 = vld [vmem:[%s2260 + $0x54] sm:$0xf]
      %v2460 = vld [vmem:[%s2260 + $0x58] sm:$0xf]
      %v2461 = vld [vmem:[%s2260 + $0x5c] sm:$0x1]
      %v2462 = vld [vmem:[%s2260 + $0x60] sm:$0xf]
      %v2463 = vld [vmem:[%s2260 + $0x64] sm:$0xf]
      %v2464 = vld [vmem:[%s2260 + $0x68] sm:$0x1]
      %v2465 = vld [vmem:[%s2260 + $0x6c] sm:$0xf]
      %v2466 = vld [vmem:[%s2260 + $0x70] sm:$0xf]
      %v2467 = vld [vmem:[%s2260 + $0x74] sm:$0x1]
      %v2468 = vld [vmem:[%s2260 + $0x78] sm:$0xf]
      %v2469 = vld [vmem:[%s2260 + $0x7c] sm:$0xf]
      %v2470 = vld [vmem:[%s2260 + $0x80] sm:$0x1]
      %v2471 = vld [vmem:[%s2260 + $0x84] sm:$0xf]
      %v2472 = vld [vmem:[%s2260 + $0x88] sm:$0xf]
      %v2473 = vld [vmem:[%s2260 + $0x8c] sm:$0x1]
      %v2474 = vld [vmem:[%s2260 + $0x90] sm:$0xf]
      %v2475 = vld [vmem:[%s2260 + $0x94] sm:$0xf]
      %v2476 = vld [vmem:[%s2260 + $0x98] sm:$0x1]
      %v2477 = vld [vmem:[%s2260 + $0x9c] sm:$0xf]
      %v2478 = vld [vmem:[%s2260 + $0xa0] sm:$0xf]
      %v2479 = vld [vmem:[%s2260 + $0xa4] sm:$0x1]
      %v2480 = vld [vmem:[%s2260 + $0xa8] sm:$0xf]
      %v2481 = vld [vmem:[%s2260 + $0xac] sm:$0xf]
      %v2482 = vld [vmem:[%s2260 + $0xb0] sm:$0x1]
      %v2483 = vld [vmem:[%s2260 + $0xb4] sm:$0xf]
      %v2484 = vld [vmem:[%s2260 + $0xb8] sm:$0xf]
      %v2485 = vld [vmem:[%s2260 + $0xbc] sm:$0x1]
      %v2487 = vshrl.u32 %v2438, 16
      %v2489 = vrot.slane %v2487, 4
      %v2490 = vshll.u32 %v2438, 16
      %v2492 = vrot.slane %v2490, 5
      %v2493 = vor.u32 %v2489, %v2492
      %v2494 = vrot.slane %v2493, 4
      %v2496 = vshll.u32 %v2439, 16
      %v2498 = vrot.slane %v2496, 5
      %v2499 = vsel %vm394, %v2494, %v2498
      %v2500 = vshrl.u32 %v2439, 16
      %v2502 = vrot.slane %v2500, 4
      %v2503 = vor.u32 %v2502, %v2498
      %v2504 = vrot.slane %v2503, 4
      %v2506 = vshll.u32 %v2440, 16
      %v2508 = vrot.slane %v2506, 5
      %v2509 = vsel %vm394, %v2504, %v2508
      %v2511 = vshrl.u32 %v2441, 16
      %v2513 = vrot.slane %v2511, 4
      %v2514 = vshll.u32 %v2441, 16
      %v2516 = vrot.slane %v2514, 5
      %v2517 = vor.u32 %v2513, %v2516
      %v2518 = vrot.slane %v2517, 4
      %v2520 = vshll.u32 %v2442, 16
      %v2522 = vrot.slane %v2520, 5
      %v2523 = vsel %vm394, %v2518, %v2522
      %v2524 = vshrl.u32 %v2442, 16
      %v2526 = vrot.slane %v2524, 4
      %v2527 = vor.u32 %v2526, %v2522
      %v2528 = vrot.slane %v2527, 4
      %v2530 = vshll.u32 %v2443, 16
      %v2532 = vrot.slane %v2530, 5
      %v2533 = vsel %vm394, %v2528, %v2532
      %v2535 = vshrl.u32 %v2444, 16
      %v2537 = vrot.slane %v2535, 4
      %v2538 = vshll.u32 %v2444, 16
      %v2540 = vrot.slane %v2538, 5
      %v2541 = vor.u32 %v2537, %v2540
      %v2542 = vrot.slane %v2541, 4
      %v2544 = vshll.u32 %v2445, 16
      %v2546 = vrot.slane %v2544, 5
      %v2547 = vsel %vm394, %v2542, %v2546
      %v2548 = vshrl.u32 %v2445, 16
      %v2550 = vrot.slane %v2548, 4
      %v2551 = vor.u32 %v2550, %v2546
      %v2552 = vrot.slane %v2551, 4
      %v2554 = vshll.u32 %v2446, 16
      %v2556 = vrot.slane %v2554, 5
      %v2557 = vsel %vm394, %v2552, %v2556
      %v2559 = vshrl.u32 %v2447, 16
      %v2561 = vrot.slane %v2559, 4
      %v2562 = vshll.u32 %v2447, 16
      %v2564 = vrot.slane %v2562, 5
      %v2565 = vor.u32 %v2561, %v2564
      %v2566 = vrot.slane %v2565, 4
      %v2568 = vshll.u32 %v2448, 16
      %v2570 = vrot.slane %v2568, 5
      %v2571 = vsel %vm394, %v2566, %v2570
      %v2572 = vshrl.u32 %v2448, 16
      %v2574 = vrot.slane %v2572, 4
      %v2575 = vor.u32 %v2574, %v2570
      %v2576 = vrot.slane %v2575, 4
      %v2578 = vshll.u32 %v2449, 16
      %v2580 = vrot.slane %v2578, 5
      %v2581 = vsel %vm394, %v2576, %v2580
      %v2583 = vshrl.u32 %v2450, 16
      %v2585 = vrot.slane %v2583, 4
      %v2586 = vshll.u32 %v2450, 16
      %v2588 = vrot.slane %v2586, 5
      %v2589 = vor.u32 %v2585, %v2588
      %v2590 = vrot.slane %v2589, 4
      %v2592 = vshll.u32 %v2451, 16
      %v2594 = vrot.slane %v2592, 5
      %v2595 = vsel %vm394, %v2590, %v2594
      %v2596 = vshrl.u32 %v2451, 16
      %v2598 = vrot.slane %v2596, 4
      %v2599 = vor.u32 %v2598, %v2594
      %v2600 = vrot.slane %v2599, 4
      %v2602 = vshll.u32 %v2452, 16
      %v2604 = vrot.slane %v2602, 5
      %v2605 = vsel %vm394, %v2600, %v2604
      %v2607 = vshrl.u32 %v2453, 16
      %v2609 = vrot.slane %v2607, 4
      %v2610 = vshll.u32 %v2453, 16
      %v2612 = vrot.slane %v2610, 5
      %v2613 = vor.u32 %v2609, %v2612
      %v2614 = vrot.slane %v2613, 4
      %v2616 = vshll.u32 %v2454, 16
      %v2618 = vrot.slane %v2616, 5
      %v2619 = vsel %vm394, %v2614, %v2618
      %v2620 = vshrl.u32 %v2454, 16
      %v2622 = vrot.slane %v2620, 4
      %v2623 = vor.u32 %v2622, %v2618
      %v2624 = vrot.slane %v2623, 4
      %v2626 = vshll.u32 %v2455, 16
      %v2628 = vrot.slane %v2626, 5
      %v2629 = vsel %vm394, %v2624, %v2628
      %v2631 = vshrl.u32 %v2456, 16
      %v2633 = vrot.slane %v2631, 4
      %v2634 = vshll.u32 %v2456, 16
      %v2636 = vrot.slane %v2634, 5
      %v2637 = vor.u32 %v2633, %v2636
      %v2638 = vrot.slane %v2637, 4
      %v2640 = vshll.u32 %v2457, 16
      %v2642 = vrot.slane %v2640, 5
      %v2643 = vsel %vm394, %v2638, %v2642
      %v2644 = vshrl.u32 %v2457, 16
      %v2646 = vrot.slane %v2644, 4
      %v2647 = vor.u32 %v2646, %v2642
      %v2648 = vrot.slane %v2647, 4
      %v2650 = vshll.u32 %v2458, 16
      %v2652 = vrot.slane %v2650, 5
      %v2653 = vsel %vm394, %v2648, %v2652
      %v2655 = vshrl.u32 %v2459, 16
      %v2657 = vrot.slane %v2655, 4
      %v2658 = vshll.u32 %v2459, 16
      %v2660 = vrot.slane %v2658, 5
      %v2661 = vor.u32 %v2657, %v2660
      %v2662 = vrot.slane %v2661, 4
      %v2664 = vshll.u32 %v2460, 16
      %v2666 = vrot.slane %v2664, 5
      %v2667 = vsel %vm394, %v2662, %v2666
      %v2668 = vshrl.u32 %v2460, 16
      %v2670 = vrot.slane %v2668, 4
      %v2671 = vor.u32 %v2670, %v2666
      %v2672 = vrot.slane %v2671, 4
      %v2674 = vshll.u32 %v2461, 16
      %v2676 = vrot.slane %v2674, 5
      %v2677 = vsel %vm394, %v2672, %v2676
      %v2679 = vshrl.u32 %v2462, 16
      %v2681 = vrot.slane %v2679, 4
      %v2682 = vshll.u32 %v2462, 16
      %v2684 = vrot.slane %v2682, 5
      %v2685 = vor.u32 %v2681, %v2684
      %v2686 = vrot.slane %v2685, 4
      %v2688 = vshll.u32 %v2463, 16
      %v2690 = vrot.slane %v2688, 5
      %v2691 = vsel %vm394, %v2686, %v2690
      %v2692 = vshrl.u32 %v2463, 16
      %v2694 = vrot.slane %v2692, 4
      %v2695 = vor.u32 %v2694, %v2690
      %v2696 = vrot.slane %v2695, 4
      %v2698 = vshll.u32 %v2464, 16
      %v2700 = vrot.slane %v2698, 5
      %v2701 = vsel %vm394, %v2696, %v2700
      %v2703 = vshrl.u32 %v2465, 16
      %v2705 = vrot.slane %v2703, 4
      %v2706 = vshll.u32 %v2465, 16
      %v2708 = vrot.slane %v2706, 5
      %v2709 = vor.u32 %v2705, %v2708
      %v2710 = vrot.slane %v2709, 4
      %v2712 = vshll.u32 %v2466, 16
      %v2714 = vrot.slane %v2712, 5
      %v2715 = vsel %vm394, %v2710, %v2714
      %v2716 = vshrl.u32 %v2466, 16
      %v2718 = vrot.slane %v2716, 4
      %v2719 = vor.u32 %v2718, %v2714
      %v2720 = vrot.slane %v2719, 4
      %v2722 = vshll.u32 %v2467, 16
      %v2724 = vrot.slane %v2722, 5
      %v2725 = vsel %vm394, %v2720, %v2724
      %v2727 = vshrl.u32 %v2468, 16
      %v2729 = vrot.slane %v2727, 4
      %v2730 = vshll.u32 %v2468, 16
      %v2732 = vrot.slane %v2730, 5
      %v2733 = vor.u32 %v2729, %v2732
      %v2734 = vrot.slane %v2733, 4
      %v2736 = vshll.u32 %v2469, 16
      %v2738 = vrot.slane %v2736, 5
      %v2739 = vsel %vm394, %v2734, %v2738
      %v2740 = vshrl.u32 %v2469, 16
      %v2742 = vrot.slane %v2740, 4
      %v2743 = vor.u32 %v2742, %v2738
      %v2744 = vrot.slane %v2743, 4
      %v2746 = vshll.u32 %v2470, 16
      %v2748 = vrot.slane %v2746, 5
      %v2749 = vsel %vm394, %v2744, %v2748
      %v2751 = vshrl.u32 %v2471, 16
      %v2753 = vrot.slane %v2751, 4
      %v2754 = vshll.u32 %v2471, 16
      %v2756 = vrot.slane %v2754, 5
      %v2757 = vor.u32 %v2753, %v2756
      %v2758 = vrot.slane %v2757, 4
      %v2760 = vshll.u32 %v2472, 16
      %v2762 = vrot.slane %v2760, 5
      %v2763 = vsel %vm394, %v2758, %v2762
      %v2764 = vshrl.u32 %v2472, 16
      %v2766 = vrot.slane %v2764, 4
      %v2767 = vor.u32 %v2766, %v2762
      %v2768 = vrot.slane %v2767, 4
      %v2770 = vshll.u32 %v2473, 16
      %v2772 = vrot.slane %v2770, 5
      %v2773 = vsel %vm394, %v2768, %v2772
      %v2775 = vshrl.u32 %v2474, 16
      %v2777 = vrot.slane %v2775, 4
      %v2778 = vshll.u32 %v2474, 16
      %v2780 = vrot.slane %v2778, 5
      %v2781 = vor.u32 %v2777, %v2780
      %v2782 = vrot.slane %v2781, 4
      %v2784 = vshll.u32 %v2475, 16
      %v2786 = vrot.slane %v2784, 5
      %v2787 = vsel %vm394, %v2782, %v2786
      %v2788 = vshrl.u32 %v2475, 16
      %v2790 = vrot.slane %v2788, 4
      %v2791 = vor.u32 %v2790, %v2786
      %v2792 = vrot.slane %v2791, 4
      %v2794 = vshll.u32 %v2476, 16
      %v2796 = vrot.slane %v2794, 5
      %v2797 = vsel %vm394, %v2792, %v2796
      %v2799 = vshrl.u32 %v2477, 16
      %v2801 = vrot.slane %v2799, 4
      %v2802 = vshll.u32 %v2477, 16
      %v2804 = vrot.slane %v2802, 5
      %v2805 = vor.u32 %v2801, %v2804
      %v2806 = vrot.slane %v2805, 4
      %v2808 = vshll.u32 %v2478, 16
      %v2810 = vrot.slane %v2808, 5
      %v2811 = vsel %vm394, %v2806, %v2810
      %v2812 = vshrl.u32 %v2478, 16
      %v2814 = vrot.slane %v2812, 4
      %v2815 = vor.u32 %v2814, %v2810
      %v2816 = vrot.slane %v2815, 4
      %v2818 = vshll.u32 %v2479, 16
      %v2820 = vrot.slane %v2818, 5
      %v2821 = vsel %vm394, %v2816, %v2820
      %v2823 = vshrl.u32 %v2480, 16
      %v2825 = vrot.slane %v2823, 4
      %v2826 = vshll.u32 %v2480, 16
      %v2828 = vrot.slane %v2826, 5
      %v2829 = vor.u32 %v2825, %v2828
      %v2830 = vrot.slane %v2829, 4
      %v2832 = vshll.u32 %v2481, 16
      %v2834 = vrot.slane %v2832, 5
      %v2835 = vsel %vm394, %v2830, %v2834
      %v2836 = vshrl.u32 %v2481, 16
      %v2838 = vrot.slane %v2836, 4
      %v2839 = vor.u32 %v2838, %v2834
      %v2840 = vrot.slane %v2839, 4
      %v2842 = vshll.u32 %v2482, 16
      %v2844 = vrot.slane %v2842, 5
      %v2845 = vsel %vm394, %v2840, %v2844
      %v2847 = vshrl.u32 %v2483, 16
      %v2849 = vrot.slane %v2847, 4
      %v2850 = vshll.u32 %v2483, 16
      %v2852 = vrot.slane %v2850, 5
      %v2853 = vor.u32 %v2849, %v2852
      %v2854 = vrot.slane %v2853, 4
      %v2856 = vshll.u32 %v2484, 16
      %v2858 = vrot.slane %v2856, 5
      %v2859 = vsel %vm394, %v2854, %v2858
      %v2860 = vshrl.u32 %v2484, 16
      %v2862 = vrot.slane %v2860, 4
      %v2863 = vor.u32 %v2862, %v2858
      %v2864 = vrot.slane %v2863, 4
      %v2866 = vshll.u32 %v2485, 16
      %v2868 = vrot.slane %v2866, 5
      %v2869 = vsel %vm394, %v2864, %v2868
      %v2870 = vunpack.c.l.b16 %v2499
      %v2871 = vunpack.c.l.b16 %v2509
      %v2872 = vunpack.c.l.b16 %v2523
      %v2873 = vunpack.c.l.b16 %v2533
      %v2874 = vunpack.c.l.b16 %v2547
      %v2875 = vunpack.c.l.b16 %v2557
      %v2876 = vunpack.c.l.b16 %v2571
      %v2877 = vunpack.c.l.b16 %v2581
      %v2878 = vunpack.c.l.b16 %v2595
      %v2879 = vunpack.c.l.b16 %v2605
      %v2880 = vunpack.c.l.b16 %v2619
      %v2881 = vunpack.c.l.b16 %v2629
      %v2882 = vunpack.c.l.b16 %v2643
      %v2883 = vunpack.c.l.b16 %v2653
      %v2884 = vunpack.c.l.b16 %v2667
      %v2885 = vunpack.c.l.b16 %v2677
      %v2886 = vunpack.c.l.b16 %v2691
      %v2887 = vunpack.c.l.b16 %v2701
      %v2888 = vunpack.c.l.b16 %v2715
      %v2889 = vunpack.c.l.b16 %v2725
      %v2890 = vunpack.c.l.b16 %v2739
      %v2891 = vunpack.c.l.b16 %v2749
      %v2892 = vunpack.c.l.b16 %v2763
      %v2893 = vunpack.c.l.b16 %v2773
      %v2894 = vunpack.c.l.b16 %v2787
      %v2895 = vunpack.c.l.b16 %v2797
      %v2896 = vunpack.c.l.b16 %v2811
      %v2897 = vunpack.c.l.b16 %v2821
      %v2898 = vunpack.c.l.b16 %v2835
      %v2899 = vunpack.c.l.b16 %v2845
      %v2900 = vunpack.c.l.b16 %v2859
      %v2901 = vunpack.c.l.b16 %v2869
      %v2902 = vpack.c.b16 %v2871, %v2870
      %v2903 = vpack.c.b16 %v2873, %v2872
      %v2904 = vpack.c.b16 %v2875, %v2874
      %v2905 = vpack.c.b16 %v2877, %v2876
      %v2906 = vpack.c.b16 %v2879, %v2878
      %v2907 = vpack.c.b16 %v2881, %v2880
      %v2908 = vpack.c.b16 %v2883, %v2882
      %v2909 = vpack.c.b16 %v2885, %v2884
      %v2910 = vpack.c.b16 %v2887, %v2886
      %v2911 = vpack.c.b16 %v2889, %v2888
      %v2912 = vpack.c.b16 %v2891, %v2890
      %v2913 = vpack.c.b16 %v2893, %v2892
      %v2914 = vpack.c.b16 %v2895, %v2894
      %v2915 = vpack.c.b16 %v2897, %v2896
      %v2916 = vpack.c.b16 %v2899, %v2898
      %v2917 = vpack.c.b16 %v2901, %v2900
      %2918 = vrot.lane.b32.xlu0 %v2902, 28
      %v2919 = vpop.permute.xlu0 %2918
      %2920 = vrot.lane.b32.xlu0 %v2903, 28
      %v2921 = vpop.permute.xlu0 %2920
      %2922 = vrot.lane.b32.xlu0 %v2904, 28
      %v2923 = vpop.permute.xlu0 %2922
      %2924 = vrot.lane.b32.xlu0 %v2905, 28
      %v2925 = vpop.permute.xlu0 %2924
      %2926 = vrot.lane.b32.xlu0 %v2906, 28
      %v2927 = vpop.permute.xlu0 %2926
      %2928 = vrot.lane.b32.xlu0 %v2907, 28
      %v2929 = vpop.permute.xlu0 %2928
      %2930 = vrot.lane.b32.xlu0 %v2908, 28
      %v2931 = vpop.permute.xlu0 %2930
      %2932 = vrot.lane.b32.xlu0 %v2909, 28
      %v2933 = vpop.permute.xlu0 %2932
      %2934 = vrot.lane.b32.xlu0 %v2910, 28
      %v2935 = vpop.permute.xlu0 %2934
      %2936 = vrot.lane.b32.xlu0 %v2911, 28
      %v2937 = vpop.permute.xlu0 %2936
      %2938 = vrot.lane.b32.xlu0 %v2912, 28
      %v2939 = vpop.permute.xlu0 %2938
      %2940 = vrot.lane.b32.xlu0 %v2913, 28
      %v2941 = vpop.permute.xlu0 %2940
      %2942 = vrot.lane.b32.xlu0 %v2914, 28
      %v2943 = vpop.permute.xlu0 %2942
      %2944 = vrot.lane.b32.xlu0 %v2915, 28
      %v2945 = vpop.permute.xlu0 %2944
      %2946 = vrot.lane.b32.xlu0 %v2916, 28
      %v2947 = vpop.permute.xlu0 %2946
      %2948 = vrot.lane.b32.xlu0 %v2917, 28
      %v2949 = vpop.permute.xlu0 %2948
      %vm2966 = vcmask 261344
      %2967 = vst.msk [vmem:[#allocation2] sm:$0xff] %vm2966, %v2919
      %2968 = vst.msk [vmem:[#allocation2 + $0x8] sm:$0xff] %vm2966, %v2921
      %2969 = vst.msk [vmem:[#allocation2 + $0x10] sm:$0xff] %vm2966, %v2923
      %2970 = vst.msk [vmem:[#allocation2 + $0x18] sm:$0xff] %vm2966, %v2925
      %2971 = vst.msk [vmem:[#allocation2 + $0x20] sm:$0xff] %vm2966, %v2927
      %2972 = vst.msk [vmem:[#allocation2 + $0x28] sm:$0xff] %vm2966, %v2929
      %2973 = vst.msk [vmem:[#allocation2 + $0x30] sm:$0xff] %vm2966, %v2931
      %2974 = vst.msk [vmem:[#allocation2 + $0x38] sm:$0xff] %vm2966, %v2933
      %2975 = vst.msk [vmem:[#allocation2 + $0x40] sm:$0xff] %vm2966, %v2935
      %2976 = vst.msk [vmem:[#allocation2 + $0x48] sm:$0xff] %vm2966, %v2937
      %2977 = vst.msk [vmem:[#allocation2 + $0x50] sm:$0xff] %vm2966, %v2939
      %2978 = vst.msk [vmem:[#allocation2 + $0x58] sm:$0xff] %vm2966, %v2941
      %2979 = vst.msk [vmem:[#allocation2 + $0x60] sm:$0xff] %vm2966, %v2943
      %2980 = vst.msk [vmem:[#allocation2 + $0x68] sm:$0xff] %vm2966, %v2945
      %2981 = vst.msk [vmem:[#allocation2 + $0x70] sm:$0xff] %vm2966, %v2947
      %2982 = vst.msk [vmem:[#allocation2 + $0x78] sm:$0xff] %vm2966, %v2949
      %v2983 = vld [vmem:[%s2260] sm:$0xe]
      %v2984 = vld [vmem:[%s2260 + $0x4] sm:$0xf]
      %v2985 = vld [vmem:[%s2260 + $0x8] sm:$0x1]
      %v2986 = vld [vmem:[%s2260 + $0xc] sm:$0xe]
      %v2987 = vld [vmem:[%s2260 + $0x10] sm:$0xf]
      %v2988 = vld [vmem:[%s2260 + $0x14] sm:$0x1]
      %v2989 = vld [vmem:[%s2260 + $0x18] sm:$0xe]
      %v2990 = vld [vmem:[%s2260 + $0x1c] sm:$0xf]
      %v2991 = vld [vmem:[%s2260 + $0x20] sm:$0x1]
      %v2992 = vld [vmem:[%s2260 + $0x24] sm:$0xe]
      %v2993 = vld [vmem:[%s2260 + $0x28] sm:$0xf]
      %v2994 = vld [vmem:[%s2260 + $0x2c] sm:$0x1]
      %v2995 = vld [vmem:[%s2260 + $0x30] sm:$0xe]
      %v2996 = vld [vmem:[%s2260 + $0x34] sm:$0xf]
      %v2997 = vld [vmem:[%s2260 + $0x38] sm:$0x1]
      %v2998 = vld [vmem:[%s2260 + $0x3c] sm:$0xe]
      %v2999 = vld [vmem:[%s2260 + $0x40] sm:$0xf]
      %v3000 = vld [vmem:[%s2260 + $0x44] sm:$0x1]
      %v3001 = vld [vmem:[%s2260 + $0x48] sm:$0xe]
      %v3002 = vld [vmem:[%s2260 + $0x4c] sm:$0xf]
      %v3003 = vld [vmem:[%s2260 + $0x50] sm:$0x1]
      %v3004 = vld [vmem:[%s2260 + $0x54] sm:$0xe]
      %v3005 = vld [vmem:[%s2260 + $0x58] sm:$0xf]
      %v3006 = vld [vmem:[%s2260 + $0x5c] sm:$0x1]
      %v3007 = vld [vmem:[%s2260 + $0x60] sm:$0xe]
      %v3008 = vld [vmem:[%s2260 + $0x64] sm:$0xf]
      %v3009 = vld [vmem:[%s2260 + $0x68] sm:$0x1]
      %v3010 = vld [vmem:[%s2260 + $0x6c] sm:$0xe]
      %v3011 = vld [vmem:[%s2260 + $0x70] sm:$0xf]
      %v3012 = vld [vmem:[%s2260 + $0x74] sm:$0x1]
      %v3013 = vld [vmem:[%s2260 + $0x78] sm:$0xe]
      %v3014 = vld [vmem:[%s2260 + $0x7c] sm:$0xf]
      %v3015 = vld [vmem:[%s2260 + $0x80] sm:$0x1]
      %v3016 = vld [vmem:[%s2260 + $0x84] sm:$0xe]
      %v3017 = vld [vmem:[%s2260 + $0x88] sm:$0xf]
      %v3018 = vld [vmem:[%s2260 + $0x8c] sm:$0x1]
      %v3019 = vld [vmem:[%s2260 + $0x90] sm:$0xe]
      %v3020 = vld [vmem:[%s2260 + $0x94] sm:$0xf]
      %v3021 = vld [vmem:[%s2260 + $0x98] sm:$0x1]
      %v3022 = vld [vmem:[%s2260 + $0x9c] sm:$0xe]
      %v3023 = vld [vmem:[%s2260 + $0xa0] sm:$0xf]
      %v3024 = vld [vmem:[%s2260 + $0xa4] sm:$0x1]
      %v3025 = vld [vmem:[%s2260 + $0xa8] sm:$0xe]
      %v3026 = vld [vmem:[%s2260 + $0xac] sm:$0xf]
      %v3027 = vld [vmem:[%s2260 + $0xb0] sm:$0x1]
      %v3028 = vld [vmem:[%s2260 + $0xb4] sm:$0xe]
      %v3029 = vld [vmem:[%s2260 + $0xb8] sm:$0xf]
      %v3030 = vld [vmem:[%s2260 + $0xbc] sm:$0x1]
      %v3079 = vrot.slane %v2983, 5
      %v3080 = vrot.slane %v3079, 4
      %v3081 = vrot.slane %v2984, 5
      %v3082 = vsel %vm990, %v3080, %v3081
      %v3083 = vrot.slane %v3081, 4
      %v3084 = vrot.slane %v2985, 5
      %v3085 = vsel %vm990, %v3083, %v3084
      %v3086 = vrot.slane %v2986, 5
      %v3087 = vrot.slane %v3086, 4
      %v3088 = vrot.slane %v2987, 5
      %v3089 = vsel %vm990, %v3087, %v3088
      %v3090 = vrot.slane %v3088, 4
      %v3091 = vrot.slane %v2988, 5
      %v3092 = vsel %vm990, %v3090, %v3091
      %v3093 = vrot.slane %v2989, 5
      %v3094 = vrot.slane %v3093, 4
      %v3095 = vrot.slane %v2990, 5
      %v3096 = vsel %vm990, %v3094, %v3095
      %v3097 = vrot.slane %v3095, 4
      %v3098 = vrot.slane %v2991, 5
      %v3099 = vsel %vm990, %v3097, %v3098
      %v3100 = vrot.slane %v2992, 5
      %v3101 = vrot.slane %v3100, 4
      %v3102 = vrot.slane %v2993, 5
      %v3103 = vsel %vm990, %v3101, %v3102
      %v3104 = vrot.slane %v3102, 4
      %v3105 = vrot.slane %v2994, 5
      %v3106 = vsel %vm990, %v3104, %v3105
      %v3107 = vrot.slane %v2995, 5
      %v3108 = vrot.slane %v3107, 4
      %v3109 = vrot.slane %v2996, 5
      %v3110 = vsel %vm990, %v3108, %v3109
      %v3111 = vrot.slane %v3109, 4
      %v3112 = vrot.slane %v2997, 5
      %v3113 = vsel %vm990, %v3111, %v3112
      %v3114 = vrot.slane %v2998, 5
      %v3115 = vrot.slane %v3114, 4
      %v3116 = vrot.slane %v2999, 5
      %v3117 = vsel %vm990, %v3115, %v3116
      %v3118 = vrot.slane %v3116, 4
      %v3119 = vrot.slane %v3000, 5
      %v3120 = vsel %vm990, %v3118, %v3119
      %v3121 = vrot.slane %v3001, 5
      %v3122 = vrot.slane %v3121, 4
      %v3123 = vrot.slane %v3002, 5
      %v3124 = vsel %vm990, %v3122, %v3123
      %v3125 = vrot.slane %v3123, 4
      %v3126 = vrot.slane %v3003, 5
      %v3127 = vsel %vm990, %v3125, %v3126
      %v3128 = vrot.slane %v3004, 5
      %v3129 = vrot.slane %v3128, 4
      %v3130 = vrot.slane %v3005, 5
      %v3131 = vsel %vm990, %v3129, %v3130
      %v3132 = vrot.slane %v3130, 4
      %v3133 = vrot.slane %v3006, 5
      %v3134 = vsel %vm990, %v3132, %v3133
      %v3135 = vrot.slane %v3007, 5
      %v3136 = vrot.slane %v3135, 4
      %v3137 = vrot.slane %v3008, 5
      %v3138 = vsel %vm990, %v3136, %v3137
      %v3139 = vrot.slane %v3137, 4
      %v3140 = vrot.slane %v3009, 5
      %v3141 = vsel %vm990, %v3139, %v3140
      %v3142 = vrot.slane %v3010, 5
      %v3143 = vrot.slane %v3142, 4
      %v3144 = vrot.slane %v3011, 5
      %v3145 = vsel %vm990, %v3143, %v3144
      %v3146 = vrot.slane %v3144, 4
      %v3147 = vrot.slane %v3012, 5
      %v3148 = vsel %vm990, %v3146, %v3147
      %v3149 = vrot.slane %v3013, 5
      %v3150 = vrot.slane %v3149, 4
      %v3151 = vrot.slane %v3014, 5
      %v3152 = vsel %vm990, %v3150, %v3151
      %v3153 = vrot.slane %v3151, 4
      %v3154 = vrot.slane %v3015, 5
      %v3155 = vsel %vm990, %v3153, %v3154
      %v3156 = vrot.slane %v3016, 5
      %v3157 = vrot.slane %v3156, 4
      %v3158 = vrot.slane %v3017, 5
      %v3159 = vsel %vm990, %v3157, %v3158
      %v3160 = vrot.slane %v3158, 4
      %v3161 = vrot.slane %v3018, 5
      %v3162 = vsel %vm990, %v3160, %v3161
      %v3163 = vrot.slane %v3019, 5
      %v3164 = vrot.slane %v3163, 4
      %v3165 = vrot.slane %v3020, 5
      %v3166 = vsel %vm990, %v3164, %v3165
      %v3167 = vrot.slane %v3165, 4
      %v3168 = vrot.slane %v3021, 5
      %v3169 = vsel %vm990, %v3167, %v3168
      %v3170 = vrot.slane %v3022, 5
      %v3171 = vrot.slane %v3170, 4
      %v3172 = vrot.slane %v3023, 5
      %v3173 = vsel %vm990, %v3171, %v3172
      %v3174 = vrot.slane %v3172, 4
      %v3175 = vrot.slane %v3024, 5
      %v3176 = vsel %vm990, %v3174, %v3175
      %v3177 = vrot.slane %v3025, 5
      %v3178 = vrot.slane %v3177, 4
      %v3179 = vrot.slane %v3026, 5
      %v3180 = vsel %vm990, %v3178, %v3179
      %v3181 = vrot.slane %v3179, 4
      %v3182 = vrot.slane %v3027, 5
      %v3183 = vsel %vm990, %v3181, %v3182
      %v3184 = vrot.slane %v3028, 5
      %v3185 = vrot.slane %v3184, 4
      %v3186 = vrot.slane %v3029, 5
      %v3187 = vsel %vm990, %v3185, %v3186
      %v3188 = vrot.slane %v3186, 4
      %v3189 = vrot.slane %v3030, 5
      %v3190 = vsel %vm990, %v3188, %v3189
      %v3191 = vunpack.c.l.b16 %v3082
      %v3192 = vunpack.c.l.b16 %v3085
      %v3193 = vunpack.c.l.b16 %v3089
      %v3194 = vunpack.c.l.b16 %v3092
      %v3195 = vunpack.c.l.b16 %v3096
      %v3196 = vunpack.c.l.b16 %v3099
      %v3197 = vunpack.c.l.b16 %v3103
      %v3198 = vunpack.c.l.b16 %v3106
      %v3199 = vunpack.c.l.b16 %v3110
      %v3200 = vunpack.c.l.b16 %v3113
      %v3201 = vunpack.c.l.b16 %v3117
      %v3202 = vunpack.c.l.b16 %v3120
      %v3203 = vunpack.c.l.b16 %v3124
      %v3204 = vunpack.c.l.b16 %v3127
      %v3205 = vunpack.c.l.b16 %v3131
      %v3206 = vunpack.c.l.b16 %v3134
      %v3207 = vunpack.c.l.b16 %v3138
      %v3208 = vunpack.c.l.b16 %v3141
      %v3209 = vunpack.c.l.b16 %v3145
      %v3210 = vunpack.c.l.b16 %v3148
      %v3211 = vunpack.c.l.b16 %v3152
      %v3212 = vunpack.c.l.b16 %v3155
      %v3213 = vunpack.c.l.b16 %v3159
      %v3214 = vunpack.c.l.b16 %v3162
      %v3215 = vunpack.c.l.b16 %v3166
      %v3216 = vunpack.c.l.b16 %v3169
      %v3217 = vunpack.c.l.b16 %v3173
      %v3218 = vunpack.c.l.b16 %v3176
      %v3219 = vunpack.c.l.b16 %v3180
      %v3220 = vunpack.c.l.b16 %v3183
      %v3221 = vunpack.c.l.b16 %v3187
      %v3222 = vunpack.c.l.b16 %v3190
      %v3223 = vpack.c.b16 %v3192, %v3191
      %v3224 = vpack.c.b16 %v3194, %v3193
      %v3225 = vpack.c.b16 %v3196, %v3195
      %v3226 = vpack.c.b16 %v3198, %v3197
      %v3227 = vpack.c.b16 %v3200, %v3199
      %v3228 = vpack.c.b16 %v3202, %v3201
      %v3229 = vpack.c.b16 %v3204, %v3203
      %v3230 = vpack.c.b16 %v3206, %v3205
      %v3231 = vpack.c.b16 %v3208, %v3207
      %v3232 = vpack.c.b16 %v3210, %v3209
      %v3233 = vpack.c.b16 %v3212, %v3211
      %v3234 = vpack.c.b16 %v3214, %v3213
      %v3235 = vpack.c.b16 %v3216, %v3215
      %v3236 = vpack.c.b16 %v3218, %v3217
      %v3237 = vpack.c.b16 %v3220, %v3219
      %v3238 = vpack.c.b16 %v3222, %v3221
      %3239 = vrot.lane.b32.xlu0 %v3223, 32
      %v3240 = vpop.permute.xlu0 %3239
      %3241 = vrot.lane.b32.xlu0 %v3224, 32
      %v3242 = vpop.permute.xlu0 %3241
      %3243 = vrot.lane.b32.xlu0 %v3225, 32
      %v3244 = vpop.permute.xlu0 %3243
      %3245 = vrot.lane.b32.xlu0 %v3226, 32
      %v3246 = vpop.permute.xlu0 %3245
      %3247 = vrot.lane.b32.xlu0 %v3227, 32
      %v3248 = vpop.permute.xlu0 %3247
      %3249 = vrot.lane.b32.xlu0 %v3228, 32
      %v3250 = vpop.permute.xlu0 %3249
      %3251 = vrot.lane.b32.xlu0 %v3229, 32
      %v3252 = vpop.permute.xlu0 %3251
      %3253 = vrot.lane.b32.xlu0 %v3230, 32
      %v3254 = vpop.permute.xlu0 %3253
      %3255 = vrot.lane.b32.xlu0 %v3231, 32
      %v3256 = vpop.permute.xlu0 %3255
      %3257 = vrot.lane.b32.xlu0 %v3232, 32
      %v3258 = vpop.permute.xlu0 %3257
      %3259 = vrot.lane.b32.xlu0 %v3233, 32
      %v3260 = vpop.permute.xlu0 %3259
      %3261 = vrot.lane.b32.xlu0 %v3234, 32
      %v3262 = vpop.permute.xlu0 %3261
      %3263 = vrot.lane.b32.xlu0 %v3235, 32
      %v3264 = vpop.permute.xlu0 %3263
      %3265 = vrot.lane.b32.xlu0 %v3236, 32
      %v3266 = vpop.permute.xlu0 %3265
      %3267 = vrot.lane.b32.xlu0 %v3237, 32
      %v3268 = vpop.permute.xlu0 %3267
      %3269 = vrot.lane.b32.xlu0 %v3238, 32
      %v3270 = vpop.permute.xlu0 %3269
      %vm3287 = vcmask 294144
      %3288 = vst.msk [vmem:[#allocation2] sm:$0xff] %vm3287, %v3240
      %3289 = vst.msk [vmem:[#allocation2 + $0x8] sm:$0xff] %vm3287, %v3242
      %3290 = vst.msk [vmem:[#allocation2 + $0x10] sm:$0xff] %vm3287, %v3244
      %3291 = vst.msk [vmem:[#allocation2 + $0x18] sm:$0xff] %vm3287, %v3246
      %3292 = vst.msk [vmem:[#allocation2 + $0x20] sm:$0xff] %vm3287, %v3248
      %3293 = vst.msk [vmem:[#allocation2 + $0x28] sm:$0xff] %vm3287, %v3250
      %3294 = vst.msk [vmem:[#allocation2 + $0x30] sm:$0xff] %vm3287, %v3252
      %3295 = vst.msk [vmem:[#allocation2 + $0x38] sm:$0xff] %vm3287, %v3254
      %3296 = vst.msk [vmem:[#allocation2 + $0x40] sm:$0xff] %vm3287, %v3256
      %3297 = vst.msk [vmem:[#allocation2 + $0x48] sm:$0xff] %vm3287, %v3258
      %3298 = vst.msk [vmem:[#allocation2 + $0x50] sm:$0xff] %vm3287, %v3260
      %3299 = vst.msk [vmem:[#allocation2 + $0x58] sm:$0xff] %vm3287, %v3262
      %3300 = vst.msk [vmem:[#allocation2 + $0x60] sm:$0xff] %vm3287, %v3264
      %3301 = vst.msk [vmem:[#allocation2 + $0x68] sm:$0xff] %vm3287, %v3266
      %3302 = vst.msk [vmem:[#allocation2 + $0x70] sm:$0xff] %vm3287, %v3268
      %3303 = vst.msk [vmem:[#allocation2 + $0x78] sm:$0xff] %vm3287, %v3270
      %v3304 = vld [vmem:[#allocation2] sm:$0xff]
      %v3305 = vld [vmem:[#allocation2 + $0x8] sm:$0xff]
      %v3306 = vld [vmem:[#allocation2 + $0x10] sm:$0xff]
      %v3307 = vld [vmem:[#allocation2 + $0x18] sm:$0xff]
      %v3308 = vld [vmem:[#allocation2 + $0x20] sm:$0xff]
      %v3309 = vld [vmem:[#allocation2 + $0x28] sm:$0xff]
      %v3310 = vld [vmem:[#allocation2 + $0x30] sm:$0xff]
      %v3311 = vld [vmem:[#allocation2 + $0x38] sm:$0xff]
      %v3312 = vld [vmem:[#allocation2 + $0x40] sm:$0xff]
      %v3313 = vld [vmem:[#allocation2 + $0x48] sm:$0xff]
      %v3314 = vld [vmem:[#allocation2 + $0x50] sm:$0xff]
      %v3315 = vld [vmem:[#allocation2 + $0x58] sm:$0xff]
      %v3316 = vld [vmem:[#allocation2 + $0x60] sm:$0xff]
      %v3317 = vld [vmem:[#allocation2 + $0x68] sm:$0xff]
      %v3318 = vld [vmem:[#allocation2 + $0x70] sm:$0xff]
      %v3319 = vld [vmem:[#allocation2 + $0x78] sm:$0xff]
      %v3320 = vld [vmem:[%s1] sm:$0xf]
      %v3321 = vld [vmem:[%s1 + $0x4] sm:$0xf]
      %v3322 = vld [vmem:[%s1 + $0x8] sm:$0xf]
      %v3323 = vld [vmem:[%s1 + $0xc] sm:$0xf]
      %v3324 = vld [vmem:[%s1 + $0x10] sm:$0x3]
      %v3325 = vld [vmem:[%s2] sm:$0x1]
      %v3327 = vlaneseq
      %v3328 = vshrl.u32 %v3327, 7
      %v3329 = vsub.s32 0, %v3328
      %v3330 = vrot.slane %v3325, %v3329
      %v3337 = vunpack.c.l.b16 %v3320
      %v3338 = vunpack.c.l.b16 %v3321
      %v3339 = vunpack.c.l.b16 %v3322
      %v3340 = vunpack.c.l.b16 %v3323
      %v3341 = vunpack.c.l.b16 %v3324
      %v3342 = vpack.c.b16 %v3338, %v3337
      %v3343 = vpack.c.b16 %v3340, %v3339
      %v3344 = vpack.c.b16 %v3341, %v3341
      %vm3347 = vcmask 293888
      %v3349 = vsel %vm3347, %v3304, 0
      %v3352 = vsel %vm3347, %v3305, 0
      %v3355 = vsel %vm3347, %v3306, 0
      %v3358 = vsel %vm3347, %v3307, 0
      %v3361 = vsel %vm3347, %v3308, 0
      %v3364 = vsel %vm3347, %v3309, 0
      %v3367 = vsel %vm3347, %v3310, 0
      %v3370 = vsel %vm3347, %v3311, 0
      %v3373 = vsel %vm3347, %v3312, 0
      %v3376 = vsel %vm3347, %v3313, 0
      %v3379 = vsel %vm3347, %v3314, 0
      %v3382 = vsel %vm3347, %v3315, 0
      %v3385 = vsel %vm3347, %v3316, 0
      %v3388 = vsel %vm3347, %v3317, 0
      %v3391 = vsel %vm3347, %v3318, 0
      %v3394 = vsel %vm3347, %v3319, 0
      %vm3396 = vcmask 1041408
      %v3398 = vsel %vm3396, %v3344, 0
      %3400 = vmatprep.subr.bf16.mxu0 0
      %3401 = vmatpush1.bf16.msra.mxu0 %v3342
      %3402 = vmatprep.subr.bf16.mxu0 0
      %3403 = vmatpush1.bf16.msra.mxu0 %v3343
      %3404 = vmatprep.subr.bf16.mxu0 0
      %3405 = vmatpush1.bf16.msra.mxu0 %v3398
      %3406 = vmatprep.subr.bf16.mxu0 0
      %3407 = vmatpush1.bf16.msra.mxu0 0
      %3408 = vmatprep.subr.bf16.mxu0 0
      %3409 = vmatpush1.bf16.msra.mxu0 0
      %3410 = vmatprep.subr.bf16.mxu0 0
      %3411 = vmatpush1.bf16.msra.mxu0 0
      %3412 = vmatprep.subr.bf16.mxu0 0
      %3413 = vmatpush1.bf16.msra.mxu0 0
      %3414 = vmatprep.subr.bf16.mxu0 0
      %3415 = vmatpush1.bf16.msra.mxu0 0
      %3416 = vmatprep.subr.bf16.mxu0 0
      %3417 = vmatpush1.bf16.msra.mxu0 0
      %3418 = vmatprep.subr.bf16.mxu0 0
      %3419 = vmatpush1.bf16.msra.mxu0 0
      %3420 = vmatprep.subr.bf16.mxu0 0
      %3421 = vmatpush1.bf16.msra.mxu0 0
      %3422 = vmatprep.subr.bf16.mxu0 0
      %3423 = vmatpush1.bf16.msra.mxu0 0
      %3424 = vmatprep.subr.bf16.mxu0 0
      %3425 = vmatpush1.bf16.msra.mxu0 0
      %3426 = vmatprep.subr.bf16.mxu0 0
      %3427 = vmatpush1.bf16.msra.mxu0 0
      %3428 = vmatprep.subr.bf16.mxu0 0
      %3429 = vmatpush1.bf16.msra.mxu0 0
      %3430 = vmatprep.subr.bf16.mxu0 0
      %3431 = vmatpush1.bf16.msra.mxu0 0
      %3432 = vmatprep.mubr.bf16.mxu0 0
      %3433 = vmatmul.mubr.bf16.gmra.mrb[0].mxu0 %v3349
      %v3434 = vpop.f32.mrb[0].mxu0
      %v3435 = vadd.f32 %v3330, %v3434
      %v3436 = vpop.f32.mrb[0].mxu0
      %v3437 = vpop.f32.mrb[0].mxu0
      %v3438 = vadd.f32 %v3330, %v3437
      %v3439 = vpop.f32.mrb[0].mxu0
      %3440 = vmatprep.mubr.bf16.mxu0 0
      %3441 = vmatmul.mubr.bf16.gmra.mrb[0].mxu0 %v3352
      %v3442 = vpop.f32.mrb[0].mxu0
      %v3443 = vadd.f32 %v3330, %v3442
      %v3444 = vpop.f32.mrb[0].mxu0
      %v3445 = vpop.f32.mrb[0].mxu0
      %v3446 = vadd.f32 %v3330, %v3445
      %v3447 = vpop.f32.mrb[0].mxu0
      %3448 = vmatprep.mubr.bf16.mxu0 0
      %3449 = vmatmul.mubr.bf16.gmra.mrb[0].mxu0 %v3355
      %v3450 = vpop.f32.mrb[0].mxu0
      %v3451 = vadd.f32 %v3330, %v3450
      %v3452 = vpop.f32.mrb[0].mxu0
      %v3453 = vpop.f32.mrb[0].mxu0
      %v3454 = vadd.f32 %v3330, %v3453
      %v3455 = vpop.f32.mrb[0].mxu0
      %3456 = vmatprep.mubr.bf16.mxu0 0
      %3457 = vmatmul.mubr.bf16.gmra.mrb[0].mxu0 %v3358
      %v3458 = vpop.f32.mrb[0].mxu0
      %v3459 = vadd.f32 %v3330, %v3458
      %v3460 = vpop.f32.mrb[0].mxu0
      %v3461 = vpop.f32.mrb[0].mxu0
      %v3462 = vadd.f32 %v3330, %v3461
      %v3463 = vpop.f32.mrb[0].mxu0
      %3464 = vmatprep.mubr.bf16.mxu0 0
      %3465 = vmatmul.mubr.bf16.gmra.mrb[0].mxu0 %v3361
      %v3466 = vpop.f32.mrb[0].mxu0
      %v3467 = vadd.f32 %v3330, %v3466
      %v3468 = vpop.f32.mrb[0].mxu0
      %v3469 = vpop.f32.mrb[0].mxu0
      %v3470 = vadd.f32 %v3330, %v3469
      %v3471 = vpop.f32.mrb[0].mxu0
      %3472 = vmatprep.mubr.bf16.mxu0 0
      %3473 = vmatmul.mubr.bf16.gmra.mrb[0].mxu0 %v3364
      %v3474 = vpop.f32.mrb[0].mxu0
      %v3475 = vadd.f32 %v3330, %v3474
      %v3476 = vpop.f32.mrb[0].mxu0
      %v3477 = vpop.f32.mrb[0].mxu0
      %v3478 = vadd.f32 %v3330, %v3477
      %v3479 = vpop.f32.mrb[0].mxu0
      %3480 = vmatprep.mubr.bf16.mxu0 0
      %3481 = vmatmul.mubr.bf16.gmra.mrb[0].mxu0 %v3367
      %v3482 = vpop.f32.mrb[0].mxu0
      %v3483 = vadd.f32 %v3330, %v3482
      %v3484 = vpop.f32.mrb[0].mxu0
      %v3485 = vpop.f32.mrb[0].mxu0
      %v3486 = vadd.f32 %v3330, %v3485
      %v3487 = vpop.f32.mrb[0].mxu0
      %3488 = vmatprep.mubr.bf16.mxu0 0
      %3489 = vmatmul.mubr.bf16.gmra.mrb[0].mxu0 %v3370
      %v3490 = vpop.f32.mrb[0].mxu0
      %v3491 = vadd.f32 %v3330, %v3490
      %v3492 = vpop.f32.mrb[0].mxu0
      %v3493 = vpop.f32.mrb[0].mxu0
      %v3494 = vadd.f32 %v3330, %v3493
      %v3495 = vpop.f32.mrb[0].mxu0
      %3496 = vmatprep.mubr.bf16.mxu0 0
      %3497 = vmatmul.mubr.bf16.gmra.mrb[0].mxu0 %v3373
      %v3498 = vpop.f32.mrb[0].mxu0
      %v3499 = vadd.f32 %v3330, %v3498
      %v3500 = vpop.f32.mrb[0].mxu0
      %v3501 = vpop.f32.mrb[0].mxu0
      %v3502 = vadd.f32 %v3330, %v3501
      %v3503 = vpop.f32.mrb[0].mxu0
      %3504 = vmatprep.mubr.bf16.mxu0 0
      %3505 = vmatmul.mubr.bf16.gmra.mrb[0].mxu0 %v3376
      %v3506 = vpop.f32.mrb[0].mxu0
      %v3507 = vadd.f32 %v3330, %v3506
      %v3508 = vpop.f32.mrb[0].mxu0
      %v3509 = vpop.f32.mrb[0].mxu0
      %v3510 = vadd.f32 %v3330, %v3509
      %v3511 = vpop.f32.mrb[0].mxu0
      %3512 = vmatprep.mubr.bf16.mxu0 0
      %3513 = vmatmul.mubr.bf16.gmra.mrb[0].mxu0 %v3379
      %v3514 = vpop.f32.mrb[0].mxu0
      %v3515 = vadd.f32 %v3330, %v3514
      %v3516 = vpop.f32.mrb[0].mxu0
      %v3517 = vpop.f32.mrb[0].mxu0
      %v3518 = vadd.f32 %v3330, %v3517
      %v3519 = vpop.f32.mrb[0].mxu0
      %3520 = vmatprep.mubr.bf16.mxu0 0
      %3521 = vmatmul.mubr.bf16.gmra.mrb[0].mxu0 %v3382
      %v3522 = vpop.f32.mrb[0].mxu0
      %v3523 = vadd.f32 %v3330, %v3522
      %v3524 = vpop.f32.mrb[0].mxu0
      %v3525 = vpop.f32.mrb[0].mxu0
      %v3526 = vadd.f32 %v3330, %v3525
      %v3527 = vpop.f32.mrb[0].mxu0
      %3528 = vmatprep.mubr.bf16.mxu0 0
      %3529 = vmatmul.mubr.bf16.gmra.mrb[0].mxu0 %v3385
      %v3530 = vpop.f32.mrb[0].mxu0
      %v3531 = vadd.f32 %v3330, %v3530
      %v3532 = vpop.f32.mrb[0].mxu0
      %v3533 = vpop.f32.mrb[0].mxu0
      %v3534 = vadd.f32 %v3330, %v3533
      %v3535 = vpop.f32.mrb[0].mxu0
      %3536 = vmatprep.mubr.bf16.mxu0 0
      %3537 = vmatmul.mubr.bf16.gmra.mrb[0].mxu0 %v3388
      %v3538 = vpop.f32.mrb[0].mxu0
      %v3539 = vadd.f32 %v3330, %v3538
      %v3540 = vpop.f32.mrb[0].mxu0
      %v3541 = vpop.f32.mrb[0].mxu0
      %v3542 = vadd.f32 %v3330, %v3541
      %v3543 = vpop.f32.mrb[0].mxu0
      %3544 = vmatprep.mubr.bf16.mxu0 0
      %3545 = vmatmul.mubr.bf16.gmra.mrb[0].mxu0 %v3391
      %v3546 = vpop.f32.mrb[0].mxu0
      %v3547 = vadd.f32 %v3330, %v3546
      %v3548 = vpop.f32.mrb[0].mxu0
      %v3549 = vpop.f32.mrb[0].mxu0
      %v3550 = vadd.f32 %v3330, %v3549
      %v3551 = vpop.f32.mrb[0].mxu0
      %3552 = vmatprep.mubr.bf16.mxu0 0
      %3553 = vmatmul.mubr.bf16.gmra.mrb[0].mxu0 %v3394
      %v3554 = vpop.f32.mrb[0].mxu0
      %v3555 = vadd.f32 %v3330, %v3554
      %v3556 = vpop.f32.mrb[0].mxu0
      %v3557 = vpop.f32.mrb[0].mxu0
      %v3558 = vadd.f32 %v3330, %v3557
      %v3559 = vpop.f32.mrb[0].mxu0
      %3560 = vdwg.mxu0
      %vm3561 = vcmp.ge.f32.partialorder %v3435, 0.0
      %vm3562 = vcmp.ge.f32.partialorder %v3438, 0.0
      %vm3563 = vcmp.ge.f32.partialorder %v3443, 0.0
      %vm3564 = vcmp.ge.f32.partialorder %v3446, 0.0
      %vm3565 = vcmp.ge.f32.partialorder %v3451, 0.0
      %vm3566 = vcmp.ge.f32.partialorder %v3454, 0.0
      %vm3567 = vcmp.ge.f32.partialorder %v3459, 0.0
      %vm3568 = vcmp.ge.f32.partialorder %v3462, 0.0
      %vm3569 = vcmp.ge.f32.partialorder %v3467, 0.0
      %vm3570 = vcmp.ge.f32.partialorder %v3470, 0.0
      %vm3571 = vcmp.ge.f32.partialorder %v3475, 0.0
      %vm3572 = vcmp.ge.f32.partialorder %v3478, 0.0
      %vm3573 = vcmp.ge.f32.partialorder %v3483, 0.0
      %vm3574 = vcmp.ge.f32.partialorder %v3486, 0.0
      %vm3575 = vcmp.ge.f32.partialorder %v3491, 0.0
      %vm3576 = vcmp.ge.f32.partialorder %v3494, 0.0
      %vm3577 = vcmp.ge.f32.partialorder %v3499, 0.0
      %vm3578 = vcmp.ge.f32.partialorder %v3502, 0.0
      %vm3579 = vcmp.ge.f32.partialorder %v3507, 0.0
      %vm3580 = vcmp.ge.f32.partialorder %v3510, 0.0
      %vm3581 = vcmp.ge.f32.partialorder %v3515, 0.0
      %vm3582 = vcmp.ge.f32.partialorder %v3518, 0.0
      %vm3583 = vcmp.ge.f32.partialorder %v3523, 0.0
      %vm3584 = vcmp.ge.f32.partialorder %v3526, 0.0
      %vm3585 = vcmp.ge.f32.partialorder %v3531, 0.0
      %vm3586 = vcmp.ge.f32.partialorder %v3534, 0.0
      %vm3587 = vcmp.ge.f32.partialorder %v3539, 0.0
      %vm3588 = vcmp.ge.f32.partialorder %v3542, 0.0
      %vm3589 = vcmp.ge.f32.partialorder %v3547, 0.0
      %vm3590 = vcmp.ge.f32.partialorder %v3550, 0.0
      %vm3591 = vcmp.ge.f32.partialorder %v3555, 0.0
      %vm3592 = vcmp.ge.f32.partialorder %v3558, 0.0
      %v3593 = vld [vmem:[%s3] sm:$0x1]
      %v3595 = vlaneseq
      %v3596 = vshrl.u32 %v3595, 7
      %v3597 = vsub.s32 0, %v3596
      %v3598 = vrot.slane %v3593, %v3597
      %v3600 = vmul.f32 %v3598, %v3435
      %v3601 = vmul.f32 %v3598, %v3438
      %v3602 = vmul.f32 %v3598, %v3443
      %v3603 = vmul.f32 %v3598, %v3446
      %v3604 = vmul.f32 %v3598, %v3451
      %v3605 = vmul.f32 %v3598, %v3454
      %v3606 = vmul.f32 %v3598, %v3459
      %v3607 = vmul.f32 %v3598, %v3462
      %v3608 = vmul.f32 %v3598, %v3467
      %v3609 = vmul.f32 %v3598, %v3470
      %v3610 = vmul.f32 %v3598, %v3475
      %v3611 = vmul.f32 %v3598, %v3478
      %v3612 = vmul.f32 %v3598, %v3483
      %v3613 = vmul.f32 %v3598, %v3486
      %v3614 = vmul.f32 %v3598, %v3491
      %v3615 = vmul.f32 %v3598, %v3494
      %v3616 = vmul.f32 %v3598, %v3499
      %v3617 = vmul.f32 %v3598, %v3502
      %v3618 = vmul.f32 %v3598, %v3507
      %v3619 = vmul.f32 %v3598, %v3510
      %v3620 = vmul.f32 %v3598, %v3515
      %v3621 = vmul.f32 %v3598, %v3518
      %v3622 = vmul.f32 %v3598, %v3523
      %v3623 = vmul.f32 %v3598, %v3526
      %v3624 = vmul.f32 %v3598, %v3531
      %v3625 = vmul.f32 %v3598, %v3534
      %v3626 = vmul.f32 %v3598, %v3539
      %v3627 = vmul.f32 %v3598, %v3542
      %v3628 = vmul.f32 %v3598, %v3547
      %v3629 = vmul.f32 %v3598, %v3550
      %v3630 = vmul.f32 %v3598, %v3555
      %v3631 = vmul.f32 %v3598, %v3558
      %v3632 = vsel %vm3561, %v3435, %v3600
      %v3633 = vsel %vm3562, %v3438, %v3601
      %v3634 = vsel %vm3563, %v3443, %v3602
      %v3635 = vsel %vm3564, %v3446, %v3603
      %v3636 = vsel %vm3565, %v3451, %v3604
      %v3637 = vsel %vm3566, %v3454, %v3605
      %v3638 = vsel %vm3567, %v3459, %v3606
      %v3639 = vsel %vm3568, %v3462, %v3607
      %v3640 = vsel %vm3569, %v3467, %v3608
      %v3641 = vsel %vm3570, %v3470, %v3609
      %v3642 = vsel %vm3571, %v3475, %v3610
      %v3643 = vsel %vm3572, %v3478, %v3611
      %v3644 = vsel %vm3573, %v3483, %v3612
      %v3645 = vsel %vm3574, %v3486, %v3613
      %v3646 = vsel %vm3575, %v3491, %v3614
      %v3647 = vsel %vm3576, %v3494, %v3615
      %v3648 = vsel %vm3577, %v3499, %v3616
      %v3649 = vsel %vm3578, %v3502, %v3617
      %v3650 = vsel %vm3579, %v3507, %v3618
      %v3651 = vsel %vm3580, %v3510, %v3619
      %v3652 = vsel %vm3581, %v3515, %v3620
      %v3653 = vsel %vm3582, %v3518, %v3621
      %v3654 = vsel %vm3583, %v3523, %v3622
      %v3655 = vsel %vm3584, %v3526, %v3623
      %v3656 = vsel %vm3585, %v3531, %v3624
      %v3657 = vsel %vm3586, %v3534, %v3625
      %v3658 = vsel %vm3587, %v3539, %v3626
      %v3659 = vsel %vm3588, %v3542, %v3627
      %v3660 = vsel %vm3589, %v3547, %v3628
      %v3661 = vsel %vm3590, %v3550, %v3629
      %v3662 = vsel %vm3591, %v3555, %v3630
      %v3663 = vsel %vm3592, %v3558, %v3631
      %3664 = vxpose.xlu0.b32.start [1/16] %v3632, 128
      %3665 = vxpose.xlu0.b32.cont [2/16] %v3633, 128
      %3666 = vxpose.xlu0.b32.cont [3/16] %v3634, 128
      %3667 = vxpose.xlu0.b32.cont [4/16] %v3635, 128
      %3668 = vxpose.xlu0.b32.cont [5/16] %v3636, 128
      %3669 = vxpose.xlu0.b32.cont [6/16] %v3637, 128
      %3670 = vxpose.xlu0.b32.cont [7/16] %v3638, 128
      %3671 = vxpose.xlu0.b32.cont [8/16] %v3639, 128
      %3672 = vxpose.xlu0.b32.cont [9/16] %v3640, 128
      %3673 = vxpose.xlu0.b32.cont [10/16] %v3641, 128
      %3674 = vxpose.xlu0.b32.cont [11/16] %v3642, 128
      %3675 = vxpose.xlu0.b32.cont [12/16] %v3643, 128
      %3676 = vxpose.xlu0.b32.cont [13/16] %v3644, 128
      %3677 = vxpose.xlu0.b32.cont [14/16] %v3645, 128
      %3678 = vxpose.xlu0.b32.cont [15/16] %v3646, 128
      %3679 = vxpose.xlu0.b32.end [16/16] %v3647, 128
      %v3680 = vpop.trf.xlu0
      %v3681 = vpop.trf.xlu0
      %v3682 = vpop.trf.xlu0
      %v3683 = vpop.trf.xlu0
      %v3684 = vpop.trf.xlu0
      %v3685 = vpop.trf.xlu0
      %v3686 = vpop.trf.xlu0
      %v3687 = vpop.trf.xlu0
      %v3688 = vpop.trf.xlu0
      %v3689 = vpop.trf.xlu0
      %v3690 = vpop.trf.xlu0
      %v3691 = vpop.trf.xlu0
      %v3692 = vpop.trf.xlu0
      %v3693 = vpop.trf.xlu0
      %v3694 = vpop.trf.xlu0
      %v3695 = vpop.trf.xlu0
      %3696 = vxpose.xlu0.b32.start [1/16] %v3648, 128
      %3697 = vxpose.xlu0.b32.cont [2/16] %v3649, 128
      %3698 = vxpose.xlu0.b32.cont [3/16] %v3650, 128
      %3699 = vxpose.xlu0.b32.cont [4/16] %v3651, 128
      %3700 = vxpose.xlu0.b32.cont [5/16] %v3652, 128
      %3701 = vxpose.xlu0.b32.cont [6/16] %v3653, 128
      %3702 = vxpose.xlu0.b32.cont [7/16] %v3654, 128
      %3703 = vxpose.xlu0.b32.cont [8/16] %v3655, 128
      %3704 = vxpose.xlu0.b32.cont [9/16] %v3656, 128
      %3705 = vxpose.xlu0.b32.cont [10/16] %v3657, 128
      %3706 = vxpose.xlu0.b32.cont [11/16] %v3658, 128
      %3707 = vxpose.xlu0.b32.cont [12/16] %v3659, 128
      %3708 = vxpose.xlu0.b32.cont [13/16] %v3660, 128
      %3709 = vxpose.xlu0.b32.cont [14/16] %v3661, 128
      %3710 = vxpose.xlu0.b32.cont [15/16] %v3662, 128
      %3711 = vxpose.xlu0.b32.end [16/16] %v3663, 128
      %v3712 = vpop.trf.xlu0
      %v3713 = vpop.trf.xlu0
      %v3714 = vpop.trf.xlu0
      %v3715 = vpop.trf.xlu0
      %v3716 = vpop.trf.xlu0
      %v3717 = vpop.trf.xlu0
      %v3718 = vpop.trf.xlu0
      %v3719 = vpop.trf.xlu0
      %v3720 = vpop.trf.xlu0
      %v3721 = vpop.trf.xlu0
      %v3722 = vpop.trf.xlu0
      %v3723 = vpop.trf.xlu0
      %v3724 = vpop.trf.xlu0
      %v3725 = vpop.trf.xlu0
      %v3726 = vpop.trf.xlu0
      %v3727 = vpop.trf.xlu0
      %3728 = vst [vmem:[%s197] sm:$0xff] %v3680
      %3729 = vst [vmem:[%s197 + $0x8] sm:$0xff] %v3712
      %p3730 = scmp.lt.s32.totalorder %s15, 1
      %s3731 = scalar_select %p3730, %s15, 1
      %s3732 = smul.addr %s3731, 2
      %s3733 = smul.addr %s3732, 8
      %s3734 = scalar_lea.vmem %s4, %s3733
      // Predicated region
      $region37: #{conv_bn_prelu.1} parent=35 // pred_check
        %p3735 = pneg %p122
      $region38: #{conv_bn_prelu.1} parent=35 // pred_check_branch
        %3737 = sbr.rel (%p3735) target = $region40
      $region39: #{conv_bn_prelu.1} parent=35 // pred_region
        _
      $region40: #{conv_bn_prelu.1} parent=35 // pred_fallthru
        _
    $region36: #{conv_bn_prelu.1} parent=5 // pred_fallthru
      _
    %p3738 = scmp.le.s32.totalorder 2, %s10
    // Predicated region
    $region41: #{conv_bn_prelu.1} parent=5 // pred_check
      %p3739 = pneg %p3738
    $region42: #{conv_bn_prelu.1} parent=5 // pred_check_branch
      %3741 = sbr.rel (%p3739) target = $region44
    $region43: #{conv_bn_prelu.1} parent=5 // pred_region
      %s3742 = ssub.s32 %s10, 2
      // Predicated region
      $region45: #{conv_bn_prelu.1} parent=43 // pred_check
        %p3743 = pneg %p128
      $region46: #{conv_bn_prelu.1} parent=43 // pred_check_branch
        %3745 = sbr.rel (%p3743) target = $region48
      $region47: #{conv_bn_prelu.1} parent=43 // pred_region
        %p3746 = scmp.lt.s32.totalorder %s16, 1
        %s3747 = scalar_select %p3746, %s16, 1
        %s3748 = smul.addr %s3747, 2
        %s3749 = smul.addr %s3748, 8
        %s3750 = scalar_lea.vmem %s4, %s3749
      $region48: #{conv_bn_prelu.1} parent=43 // pred_fallthru
        _
    $region44: #{conv_bn_prelu.1} parent=5 // pred_fallthru
      _
  $region6: #{conv_bn_prelu.1} parent=0 // loop_footer
    %s14 = sadd.s32 1, %s10
  $region7: #{conv_bn_prelu.1} parent=0 // loop_footer_branch
    %9 = sbr.rel target = $region3
  $region8: #{conv_bn_prelu.1} parent=0 // loop_exit
    _

</llo_original>
